<compile_context>
chip_gen: v6e
topology: v6e:2x2x1
jax: 0.10.0
libtpu: 0.0.40
codegen_flags: <defaults>
</compile_context>

<pallas_src>
import functools

import numpy as np
import jax
import jax.numpy as jnp
from jax.experimental import pallas as pl
from jax.experimental.pallas import tpu as pltpu


# ----------------------------------------------------------------------------
# Kernel 1: softmax / -errors / one-hot fg / CE + per-class-count accumulation
# ----------------------------------------------------------------------------
def _prep_kernel(x_ref, y_ref, nerr_ref, fg_ref, ce_ref, cnt_ref, gts_ref, *,
                 ignore_index):
    t = pl.program_id(1)

    # Per-batch accumulators live in the (resident) output blocks; re-init when
    # a new batch element starts.
    @pl.when(t == 0)
    def _():
        ce_ref[...] = jnp.zeros_like(ce_ref)
        cnt_ref[...] = jnp.zeros_like(cnt_ref)
        gts_ref[...] = jnp.zeros_like(gts_ref)

    x = x_ref[0].astype(jnp.float32)          # (C, T) logits (classes on sublanes)
    y = y_ref[0]                              # (1, T) int32 labels
    C, T = x.shape

    m = jnp.max(x, axis=0, keepdims=True)     # (1, T)
    ex = jnp.exp(x - m)
    se = jnp.sum(ex, axis=0, keepdims=True)   # (1, T)
    probs = ex / se                           # softmax over classes
    logp = (x - m) - jnp.log(se)              # log_softmax over classes

    valid = (y != ignore_index).astype(jnp.float32)             # (1, T)
    cls = jax.lax.broadcasted_iota(jnp.int32, (C, T), 0)
    fg = (y == cls).astype(jnp.float32) * valid                 # one-hot, 0 at ignored
    err = jnp.abs(fg - probs) * valid                           # 0 at ignored

    # Fold the descending-sort negation in here (ascending sort of -err).
    nerr_ref[...] = -err
    fg_ref[...] = fg.astype(jnp.bfloat16)                       # exact 0/1

    # cross-entropy partial sums (mean over valid is finished in the wrapper)
    ce_pix = -jnp.sum(fg * logp, axis=0, keepdims=True)         # (1, T)
    ce_ref[...] += jnp.sum(ce_pix)
    cnt_ref[...] += jnp.sum(valid)
    gts_ref[...] += jnp.sum(fg, axis=1, keepdims=True)[None]    # (1, C, 1)


# ----------------------------------------------------------------------------
# Kernel 2: tiled Lovasz-Softmax carry-scan over sorted errors
# ----------------------------------------------------------------------------
def _lovasz_kernel(nerr_ref, fs_ref, gts_ref, out_ref, tri_ref, carry_ref,
                   loss_ref):
    t = pl.program_id(0)
    C, T = nerr_ref.shape

    @pl.when(t == 0)
    def _():
        # Build the (T, T) triangular cumsum matrix once: tri[j, i] = (j <= i).
        r = jax.lax.broadcasted_iota(jnp.int32, (T, T), 0)
        c = jax.lax.broadcasted_iota(jnp.int32, (T, T), 1)
        tri_ref[...] = (r <= c).astype(jnp.bfloat16)
        carry_ref[...] = jnp.zeros_like(carry_ref)
        loss_ref[...] = jnp.zeros_like(loss_ref)

    es = -nerr_ref[...]                       # (C, T) f32, errors sorted descending
    fs_bf = fs_ref[...]                       # (C, T) bf16, exact 0/1
    fs = fs_bf.astype(jnp.float32)
    gts = gts_ref[...]                        # (C, 1) f32 total fg per class

    # Within-tile inclusive cumsum via bf16 MXU matmul (exact: 0/1 operands,
    # f32 accumulation), plus the running cross-tile carry.
    local_cum = jnp.dot(fs_bf, tri_ref[...], preferred_element_type=jnp.float32)
    cum_fg = carry_ref[...] + local_cum       # (C, T)

    lane = jax.lax.broadcasted_iota(jnp.int32, (C, T), 1)
    pos = (lane + 1 + t * T).astype(jnp.float32)          # global 1-based position

    # cumsum(1 - fg) = pos - cumsum(fg)   (analytic; no second matmul)
    inter = gts - cum_fg
    union = gts + (pos - cum_fg)                          # >= max(gts, pos) >= 1
    jac = 1.0 - inter / union

    # Previous-position jaccard recomputed from the exclusive cumsum, so no
    # cross-tile jac carry and no roll is needed.
    cum_fg_ex = cum_fg - fs
    union_ex = gts + ((pos - 1.0) - cum_fg_ex)
    jac_prev = 1.0 - (gts - cum_fg_ex) / jnp.maximum(union_ex, 1e-12)
    grad = jac - jac_prev

    loss_ref[...] += jnp.sum(es * grad, axis=1, keepdims=True)   # (C, 1)
    carry_ref[...] += jnp.sum(fs, axis=1, keepdims=True)

    @pl.when(t == pl.num_programs(0) - 1)
    def _():
        present = (gts > 0.0).astype(jnp.float32)                # (C, 1)
        num = jnp.sum(loss_ref[...] * present)
        den = jnp.sum(present)
        val = jnp.where(den > 0.0, num / jnp.maximum(den, 1.0), 0.0)
        out_ref[...] = jnp.reshape(val, (1, 1))


# ----------------------------------------------------------------------------
# Wrapper
# ----------------------------------------------------------------------------
def _pick_tile(n, max_tile):
    """Largest multiple-of-128 divisor of n that is <= max_tile."""
    assert n % 128 == 0, "pixel count must be a multiple of 128"
    t = (min(n, max_tile) // 128) * 128
    while n % t != 0:
        t -= 128
    return t


def mix_lovasz_cross_entropy(x, y, ignore_index=255, max_pix_tile=2048,
                             max_lov_tile=1024):
    """x: [B, C, H, W] float logits (NCHW), y: [B, H, W] int labels."""
    B, C, H, W = x.shape
    HW = H * W
    P = B * HW

    tile = _pick_tile(HW, max_pix_tile)
    n_t = HW // tile

    xr = x.reshape(B, C, HW).astype(jnp.float32)   # free reshape, no relayout
    yr = y.reshape(B, 1, HW).astype(jnp.int32)

    kern = functools.partial(_prep_kernel, ignore_index=ignore_index)
    nerr, fg, ce_parts, cnt_parts, gts_parts = pl.pallas_call(
        kern,
        out_shape=(
            jax.ShapeDtypeStruct((C, P), jnp.float32),   # -err, lane-dense
            jax.ShapeDtypeStruct((C, P), jnp.bfloat16),  # fg, lane-dense
            jax.ShapeDtypeStruct((B, 1, 1), jnp.float32),  # CE partial sums
            jax.ShapeDtypeStruct((B, 1, 1), jnp.float32),  # valid counts
            jax.ShapeDtypeStruct((B, C, 1), jnp.float32),  # per-class fg totals
        ),
        grid=(B, n_t),
        in_specs=[
            pl.BlockSpec((1, C, tile), lambda b, t: (b, 0, t)),
            pl.BlockSpec((1, 1, tile), lambda b, t: (b, 0, t)),
        ],
        out_specs=(
            pl.BlockSpec((C, tile), lambda b, t: (0, b * n_t + t)),
            pl.BlockSpec((C, tile), lambda b, t: (0, b * n_t + t)),
            pl.BlockSpec((1, 1, 1), lambda b, t: (b, 0, 0)),
            pl.BlockSpec((1, 1, 1), lambda b, t: (b, 0, 0)),
            pl.BlockSpec((1, C, 1), lambda b, t: (b, 0, 0)),
        ),
        compiler_params=pltpu.CompilerParams(
            dimension_semantics=("parallel", "arbitrary"),   # batch axis -> megacore
            vmem_limit_bytes=32 * 1024 * 1024,
        ),
    )(xr, yr)

    # TODO(synk): per-class descending sort has no Pallas TPU primitive; done in XLA
    # along the lane axis (dimension=1), carrying fg with the permutation.
    nerr_sorted, fg_sorted = jax.lax.sort((nerr, fg), dimension=1, num_keys=1)
    gts = jnp.sum(gts_parts, axis=0)                         # (C, 1)

    lov_tile = _pick_tile(P, max_lov_tile)
    n_lt = P // lov_tile
    lov = pl.pallas_call(
        _lovasz_kernel,
        out_shape=jax.ShapeDtypeStruct((1, 1), jnp.float32),
        grid=(n_lt,),
        in_specs=[
            pl.BlockSpec((C, lov_tile), lambda t: (0, t)),
            pl.BlockSpec((C, lov_tile), lambda t: (0, t)),
            pl.BlockSpec((C, 1), lambda t: (0, 0)),
        ],
        out_specs=pl.BlockSpec((1, 1), lambda t: (0, 0)),
        scratch_shapes=[
            pltpu.VMEM((lov_tile, lov_tile), jnp.bfloat16),  # triangular matrix
            pltpu.VMEM((C, 1), jnp.float32),                 # cumsum carry
            pltpu.VMEM((C, 1), jnp.float32),                 # per-class loss acc
        ],
        compiler_params=pltpu.CompilerParams(
            dimension_semantics=("arbitrary",),
            vmem_limit_bytes=32 * 1024 * 1024,
        ),
    )(nerr_sorted, fg_sorted, gts)[0, 0]

    ce = jnp.sum(ce_parts) / jnp.maximum(jnp.sum(cnt_parts), 1.0)
    return lov + ce


# ----------------------------------------------------------------------------
# Pure-numpy reference implementing the exact PyTorch semantics
# ----------------------------------------------------------------------------
def _reference_numpy(x, y, ignore=255):
    x = np.asarray(x, np.float64)
    y = np.asarray(y)
    B, C, H, W = x.shape
    xf = x.transpose(0, 2, 3, 1).reshape(-1, C)
    yf = y.reshape(-1)
    m = xf.max(-1, keepdims=True)
    e = np.exp(xf - m)
    p = e / e.sum(-1, keepdims=True)
    logp = (xf - m) - np.log(e.sum(-1, keepdims=True))
    valid = yf != ignore
    ce_all = -logp[np.arange(len(yf)), np.clip(yf, 0, C - 1)]
    ce = ce_all[valid].mean() if valid.any() else 0.0
    vp = p[valid]
    vl = yf[valid]
    losses = []
    for c in range(C):
        fg = (vl == c).astype(np.float64)
        if fg.sum() == 0:
            continue
        err = np.abs(fg - vp[:, c])
        order = np.argsort(-err, kind="stable")
        es = err[order]
        fs = fg[order]
        gts = fs.sum()
        inter = gts - np.cumsum(fs)
        union = gts + np.cumsum(1.0 - fs)
        jac = 1.0 - inter / union
        grad = jac.copy()
        grad[1:] = jac[1:] - jac[:-1]
        losses.append(float((es * grad).sum()))
    lov = float(np.mean(losses)) if losses else 0.0
    return lov + float(ce)


if __name__ == "__main__":
    key = jax.random.PRNGKey(0)
    kx, ky, km = jax.random.split(key, 3)
    B, C, H, W = 2, 4, 16, 16
    x = jax.random.normal(kx, (B, C, H, W), dtype=jnp.float32)
    y = jax.random.randint(ky, (B, H, W), 0, C, dtype=jnp.int32)
    ignore_mask = jax.random.uniform(km, (B, H, W)) < 0.1
    y = jnp.where(ignore_mask, 255, y)

    loss = jax.jit(mix_lovasz_cross_entropy)(x, y)
    loss = jax.block_until_ready(loss)

    ref = _reference_numpy(np.asarray(x), np.asarray(y))
    assert np.isfinite(float(loss)), "kernel produced non-finite loss"
    np.testing.assert_allclose(float(loss), ref, rtol=1e-4, atol=1e-4)
    print("KERNEL_OK")
</pallas_src>

<mosaic_0001>
module attributes {stable_mosaic.version = 11 : i64} {
  func.func @_prep_kernel(%arg0: i32, %arg1: i32, %arg2: memref<1x4x256xf32, #tpu.memory_space<vmem>>, %arg3: memref<1x1x256xi32, #tpu.memory_space<vmem>>, %arg4: memref<4x256xf32, #tpu.memory_space<vmem>>, %arg5: memref<4x256xbf16, #tpu.memory_space<vmem>>, %arg6: memref<1x1x1xf32, #tpu.memory_space<vmem>>, %arg7: memref<1x1x1xf32, #tpu.memory_space<vmem>>, %arg8: memref<1x4x1xf32, #tpu.memory_space<vmem>>) attributes {dimension_semantics = [#tpu.dimension_semantics<parallel>, #tpu.dimension_semantics<arbitrary>], iteration_bounds = array<i64: 2, 1>, scalar_prefetch = 0 : i64, scratch_operands = 0 : i64, tpu.core_type = #tpu.core_type<tc>, window_params = [{transform_indices = @transform_0, window_bounds = array<i64: 1, 4, 256>}, {transform_indices = @transform_1, window_bounds = array<i64: 1, 1, 256>}, {transform_indices = @transform_2, window_bounds = array<i64: 4, 256>}, {transform_indices = @transform_3, window_bounds = array<i64: 4, 256>}, {transform_indices = @transform_4, window_bounds = array<i64: 1, 1, 1>}, {transform_indices = @transform_5, window_bounds = array<i64: 1, 1, 1>}, {transform_indices = @transform_6, window_bounds = array<i64: 1, 4, 1>}]} {
    %c0_i32 = arith.constant 0 : i32
    %0 = arith.cmpi eq, %arg1, %c0_i32 : i32
    %1 = arith.extui %0 : i1 to i32
    %c0_i32_0 = arith.constant 0 : i32
    %2 = arith.cmpi ne, %1, %c0_i32_0 : i32
    scf.if %2 {
      %cst_35 = arith.constant 0.000000e+00 : f32
      %68 = vector.broadcast %cst_35 : f32 to vector<1x1x1xf32>
      %c0_36 = arith.constant 0 : index
      %c0_37 = arith.constant 0 : index
      %c0_38 = arith.constant 0 : index
      %69 = vector.load %arg6[%c0_36, %c0_37, %c0_38] : memref<1x1x1xf32, #tpu.memory_space<vmem>>, vector<1x1x1xf32>
      tpu.vector_store %arg6[%c0_36, %c0_37, %c0_38], %68 {strides = array<i32>} : memref<1x1x1xf32, #tpu.memory_space<vmem>>, vector<1x1x1xf32>,
      %cst_39 = arith.constant 0.000000e+00 : f32
      %70 = vector.broadcast %cst_39 : f32 to vector<1x1x1xf32>
      %c0_40 = arith.constant 0 : index
      %c0_41 = arith.constant 0 : index
      %c0_42 = arith.constant 0 : index
      %71 = vector.load %arg7[%c0_40, %c0_41, %c0_42] : memref<1x1x1xf32, #tpu.memory_space<vmem>>, vector<1x1x1xf32>
      tpu.vector_store %arg7[%c0_40, %c0_41, %c0_42], %70 {strides = array<i32>} : memref<1x1x1xf32, #tpu.memory_space<vmem>>, vector<1x1x1xf32>,
      %cst_43 = arith.constant 0.000000e+00 : f32
      %72 = vector.broadcast %cst_43 : f32 to vector<1x4x1xf32>
      %c0_44 = arith.constant 0 : index
      %c0_45 = arith.constant 0 : index
      %c0_46 = arith.constant 0 : index
      %73 = vector.load %arg8[%c0_44, %c0_45, %c0_46] : memref<1x4x1xf32, #tpu.memory_space<vmem>>, vector<1x4x1xf32>
      tpu.vector_store %arg8[%c0_44, %c0_45, %c0_46], %72 {strides = array<i32>} : memref<1x4x1xf32, #tpu.memory_space<vmem>>, vector<1x4x1xf32>,
    } else {
    }
    %c0 = arith.constant 0 : index
    %c0_1 = arith.constant 0 : index
    %c0_2 = arith.constant 0 : index
    %3 = vector.load %arg2[%c0, %c0_1, %c0_2] : memref<1x4x256xf32, #tpu.memory_space<vmem>>, vector<1x4x256xf32>
    %4 = vector.shape_cast %3 : vector<1x4x256xf32> to vector<4x256xf32>
    %c0_3 = arith.constant 0 : index
    %c0_4 = arith.constant 0 : index
    %c0_5 = arith.constant 0 : index
    %5 = vector.load %arg3[%c0_3, %c0_4, %c0_5] : memref<1x1x256xi32, #tpu.memory_space<vmem>>, vector<1x1x256xi32>
    %6 = vector.shape_cast %5 : vector<1x1x256xi32> to vector<1x256xi32>
    %cst = arith.constant dense<0xFF800000> : vector<256xf32>
    %7 = vector.multi_reduction <maximumf>, %4, %cst [0] : vector<4x256xf32> to vector<256xf32>
    %8 = vector.shape_cast %7 : vector<256xf32> to vector<1x256xf32>
    %9 = vector.broadcast %8 : vector<1x256xf32> to vector<4x256xf32>
    %10 = arith.subf %4, %9 : vector<4x256xf32>
    %11 = math.exp %10 : vector<4x256xf32>
    %cst_6 = arith.constant dense<0.000000e+00> : vector<256xf32>
    %12 = vector.multi_reduction <add>, %11, %cst_6 [0] : vector<4x256xf32> to vector<256xf32>
    %13 = vector.shape_cast %12 : vector<256xf32> to vector<1x256xf32>
    %14 = vector.broadcast %13 : vector<1x256xf32> to vector<4x256xf32>
    %15 = arith.divf %11, %14 : vector<4x256xf32>
    %16 = vector.broadcast %8 : vector<1x256xf32> to vector<4x256xf32>
    %17 = arith.subf %4, %16 : vector<4x256xf32>
    %18 = math.log %13 : vector<1x256xf32>
    %19 = vector.broadcast %18 : vector<1x256xf32> to vector<4x256xf32>
    %20 = arith.subf %17, %19 : vector<4x256xf32>
    %c255_i32 = arith.constant 255 : i32
    %21 = vector.broadcast %c255_i32 : i32 to vector<1x256xi32>
    %22 = arith.cmpi ne, %6, %21 : vector<1x256xi32>
    %23 = arith.extui %22 : vector<1x256xi1> to vector<1x256xi32>
    %24 = arith.sitofp %23 : vector<1x256xi32> to vector<1x256xf32>
    %25 = tpu.iota {dimensions = array<i32: 0>} : vector<4x256xi32>
    %26 = vector.broadcast %6 : vector<1x256xi32> to vector<4x256xi32>
    %27 = arith.cmpi eq, %26, %25 : vector<4x256xi32>
    %28 = arith.extui %27 : vector<4x256xi1> to vector<4x256xi32>
    %29 = arith.sitofp %28 : vector<4x256xi32> to vector<4x256xf32>
    %30 = vector.broadcast %24 : vector<1x256xf32> to vector<4x256xf32>
    %31 = arith.mulf %29, %30 : vector<4x256xf32>
    %32 = arith.subf %31, %15 : vector<4x256xf32>
    %33 = math.absf %32 : vector<4x256xf32>
    %34 = vector.broadcast %24 : vector<1x256xf32> to vector<4x256xf32>
    %35 = arith.mulf %33, %34 : vector<4x256xf32>
    %cst_7 = arith.constant 0.000000e+00 : f32
    %36 = vector.broadcast %cst_7 : f32 to vector<4x256xf32>
    %37 = arith.subf %36, %35 : vector<4x256xf32>
    %c0_8 = arith.constant 0 : index
    %c0_9 = arith.constant 0 : index
    %38 = vector.load %arg4[%c0_8, %c0_9] : memref<4x256xf32, #tpu.memory_space<vmem>>, vector<4x256xf32>
    tpu.vector_store %arg4[%c0_8, %c0_9], %37 {strides = array<i32>} : memref<4x256xf32, #tpu.memory_space<vmem>>, vector<4x256xf32>,
    %39 = arith.truncf %31 : vector<4x256xf32> to vector<4x256xbf16>
    %c0_10 = arith.constant 0 : index
    %c0_11 = arith.constant 0 : index
    %40 = vector.load %arg5[%c0_10, %c0_11] : memref<4x256xbf16, #tpu.memory_space<vmem>>, vector<4x256xbf16>
    tpu.vector_store %arg5[%c0_10, %c0_11], %39 {strides = array<i32>} : memref<4x256xbf16, #tpu.memory_space<vmem>>, vector<4x256xbf16>,
    %41 = arith.mulf %31, %20 : vector<4x256xf32>
    %cst_12 = arith.constant dense<0.000000e+00> : vector<256xf32>
    %42 = vector.multi_reduction <add>, %41, %cst_12 [0] : vector<4x256xf32> to vector<256xf32>
    %43 = vector.shape_cast %42 : vector<256xf32> to vector<1x256xf32>
    %cst_13 = arith.constant 0.000000e+00 : f32
    %44 = vector.broadcast %cst_13 : f32 to vector<1x256xf32>
    %45 = arith.subf %44, %43 : vector<1x256xf32>
    %c0_14 = arith.constant 0 : index
    %c0_15 = arith.constant 0 : index
    %c0_16 = arith.constant 0 : index
    %46 = vector.load %arg6[%c0_14, %c0_15, %c0_16] : memref<1x1x1xf32, #tpu.memory_space<vmem>>, vector<1x1x1xf32>
    %47 = vector.shape_cast %45 : vector<1x256xf32> to vector<1x1x256xf32>
    %cst_17 = arith.constant dense<0.000000e+00> : vector<1xf32>
    %48 = vector.multi_reduction <add>, %47, %cst_17 [1, 2] : vector<1x1x256xf32> to vector<1xf32>
    %49 = vector.shape_cast %48 : vector<1xf32> to vector<1x1x1xf32>
    %50 = vector.extract %49[0, 0, 0] : f32 from vector<1x1x1xf32>
    %51 = vector.broadcast %50 : f32 to vector<1x1x1xf32>
    %52 = arith.addf %46, %51 : vector<1x1x1xf32>
    %c0_18 = arith.constant 0 : index
    %c0_19 = arith.constant 0 : index
    %c0_20 = arith.constant 0 : index
    %53 = vector.load %arg6[%c0_18, %c0_19, %c0_20] : memref<1x1x1xf32, #tpu.memory_space<vmem>>, vector<1x1x1xf32>
    tpu.vector_store %arg6[%c0_18, %c0_19, %c0_20], %52 {strides = array<i32>} : memref<1x1x1xf32, #tpu.memory_space<vmem>>, vector<1x1x1xf32>,
    %c0_21 = arith.constant 0 : index
    %c0_22 = arith.constant 0 : index
    %c0_23 = arith.constant 0 : index
    %54 = vector.load %arg7[%c0_21, %c0_22, %c0_23] : memref<1x1x1xf32, #tpu.memory_space<vmem>>, vector<1x1x1xf32>
    %55 = vector.shape_cast %24 : vector<1x256xf32> to vector<1x1x256xf32>
    %cst_24 = arith.constant dense<0.000000e+00> : vector<1xf32>
    %56 = vector.multi_reduction <add>, %55, %cst_24 [1, 2] : vector<1x1x256xf32> to vector<1xf32>
    %57 = vector.shape_cast %56 : vector<1xf32> to vector<1x1x1xf32>
    %58 = vector.extract %57[0, 0, 0] : f32 from vector<1x1x1xf32>
    %59 = vector.broadcast %58 : f32 to vector<1x1x1xf32>
    %60 = arith.addf %54, %59 : vector<1x1x1xf32>
    %c0_25 = arith.constant 0 : index
    %c0_26 = arith.constant 0 : index
    %c0_27 = arith.constant 0 : index
    %61 = vector.load %arg7[%c0_25, %c0_26, %c0_27] : memref<1x1x1xf32, #tpu.memory_space<vmem>>, vector<1x1x1xf32>
    tpu.vector_store %arg7[%c0_25, %c0_26, %c0_27], %60 {strides = array<i32>} : memref<1x1x1xf32, #tpu.memory_space<vmem>>, vector<1x1x1xf32>,
    %c0_28 = arith.constant 0 : index
    %c0_29 = arith.constant 0 : index
    %c0_30 = arith.constant 0 : index
    %62 = vector.load %arg8[%c0_28, %c0_29, %c0_30] : memref<1x4x1xf32, #tpu.memory_space<vmem>>, vector<1x4x1xf32>
    %cst_31 = arith.constant dense<0.000000e+00> : vector<4xf32>
    %63 = vector.multi_reduction <add>, %31, %cst_31 [1] : vector<4x256xf32> to vector<4xf32>
    %64 = vector.shape_cast %63 : vector<4xf32> to vector<4x1xf32>
    %65 = vector.shape_cast %64 : vector<4x1xf32> to vector<1x4x1xf32>
    %66 = arith.addf %62, %65 : vector<1x4x1xf32>
    %c0_32 = arith.constant 0 : index
    %c0_33 = arith.constant 0 : index
    %c0_34 = arith.constant 0 : index
    %67 = vector.load %arg8[%c0_32, %c0_33, %c0_34] : memref<1x4x1xf32, #tpu.memory_space<vmem>>, vector<1x4x1xf32>
    tpu.vector_store %arg8[%c0_32, %c0_33, %c0_34], %66 {strides = array<i32>} : memref<1x4x1xf32, #tpu.memory_space<vmem>>, vector<1x4x1xf32>,
    return
  }
  func.func @transform_0(%arg0: i32, %arg1: i32) -> (i32, i32, i32) {
    %c0_i32 = arith.constant 0 : i32
    %c0_i32_0 = arith.constant 0 : i32
    return %arg0, %c0_i32, %arg1 : i32, i32, i32
  }
  func.func @transform_1(%arg0: i32, %arg1: i32) -> (i32, i32, i32) {
    %c0_i32 = arith.constant 0 : i32
    %c0_i32_0 = arith.constant 0 : i32
    return %arg0, %c0_i32, %arg1 : i32, i32, i32
  }
  func.func @transform_2(%arg0: i32, %arg1: i32) -> (i32, i32) {
    %c1_i32 = arith.constant 1 : i32
    %0 = arith.muli %arg0, %c1_i32 : i32
    %1 = arith.addi %0, %arg1 : i32
    %c0_i32 = arith.constant 0 : i32
    %c0_i32_0 = arith.constant 0 : i32
    return %c0_i32, %1 : i32, i32
  }
  func.func @transform_3(%arg0: i32, %arg1: i32) -> (i32, i32) {
    %c1_i32 = arith.constant 1 : i32
    %0 = arith.muli %arg0, %c1_i32 : i32
    %1 = arith.addi %0, %arg1 : i32
    %c0_i32 = arith.constant 0 : i32
    %c0_i32_0 = arith.constant 0 : i32
    return %c0_i32, %1 : i32, i32
  }
  func.func @transform_4(%arg0: i32, %arg1: i32) -> (i32, i32, i32) {
    %c0_i32 = arith.constant 0 : i32
    %c0_i32_0 = arith.constant 0 : i32
    %c0_i32_1 = arith.constant 0 : i32
    return %arg0, %c0_i32, %c0_i32_0 : i32, i32, i32
  }
  func.func @transform_5(%arg0: i32, %arg1: i32) -> (i32, i32, i32) {
    %c0_i32 = arith.constant 0 : i32
    %c0_i32_0 = arith.constant 0 : i32
    %c0_i32_1 = arith.constant 0 : i32
    return %arg0, %c0_i32, %c0_i32_0 : i32, i32, i32
  }
  func.func @transform_6(%arg0: i32, %arg1: i32) -> (i32, i32, i32) {
    %c0_i32 = arith.constant 0 : i32
    %c0_i32_0 = arith.constant 0 : i32
    %c0_i32_1 = arith.constant 0 : i32
    return %arg0, %c0_i32, %c0_i32_0 : i32, i32, i32
  }
}

module attributes {stable_mosaic.version = 11 : i64} {
  func.func @_lovasz_kernel(%arg0: i32, %arg1: memref<4x512xf32, #tpu.memory_space<vmem>>, %arg2: memref<4x512xbf16, #tpu.memory_space<vmem>>, %arg3: memref<4x1xf32, #tpu.memory_space<vmem>>, %arg4: memref<1x1xf32, #tpu.memory_space<vmem>>, %arg5: memref<512x512xbf16, #tpu.memory_space<vmem>>, %arg6: memref<4x1xf32, #tpu.memory_space<vmem>>, %arg7: memref<4x1xf32, #tpu.memory_space<vmem>>) attributes {dimension_semantics = [#tpu.dimension_semantics<arbitrary>], iteration_bounds = array<i64: 1>, scalar_prefetch = 0 : i64, scratch_operands = 3 : i64, tpu.core_type = #tpu.core_type<tc>, window_params = [{transform_indices = @transform_0, window_bounds = array<i64: 4, 512>}, {transform_indices = @transform_1, window_bounds = array<i64: 4, 512>}, {pipeline_mode = #tpu.pipeline_mode<synchronous>, transform_indices = @transform_2, window_bounds = array<i64: 4, 1>}, {pipeline_mode = #tpu.pipeline_mode<synchronous>, transform_indices = @transform_3, window_bounds = array<i64: 1, 1>}]} {
    %c0_i32 = arith.constant 0 : i32
    %0 = arith.cmpi eq, %arg0, %c0_i32 : i32
    %1 = arith.extui %0 : i1 to i32
    %c0_i32_0 = arith.constant 0 : i32
    %2 = arith.cmpi ne, %1, %c0_i32_0 : i32
    scf.if %2 {
      %57 = tpu.iota {dimensions = array<i32: 0>} : vector<512x512xi32>
      %58 = tpu.iota {dimensions = array<i32: 1>} : vector<512x512xi32>
      %59 = arith.cmpi sle, %57, %58 : vector<512x512xi32>
      %60 = arith.extui %59 : vector<512x512xi1> to vector<512x512xi32>
      %61 = arith.sitofp %60 : vector<512x512xi32> to vector<512x512xf32>
      %62 = arith.truncf %61 : vector<512x512xf32> to vector<512x512xbf16>
      %c0_27 = arith.constant 0 : index
      %c0_28 = arith.constant 0 : index
      %63 = vector.load %arg5[%c0_27, %c0_28] : memref<512x512xbf16, #tpu.memory_space<vmem>>, vector<512x512xbf16>
      tpu.vector_store %arg5[%c0_27, %c0_28], %62 {strides = array<i32>} : memref<512x512xbf16, #tpu.memory_space<vmem>>, vector<512x512xbf16>,
      %cst_29 = arith.constant 0.000000e+00 : f32
      %64 = vector.broadcast %cst_29 : f32 to vector<4x1xf32>
      %c0_30 = arith.constant 0 : index
      %c0_31 = arith.constant 0 : index
      %65 = vector.load %arg6[%c0_30, %c0_31] : memref<4x1xf32, #tpu.memory_space<vmem>>, vector<4x1xf32>
      tpu.vector_store %arg6[%c0_30, %c0_31], %64 {strides = array<i32>} : memref<4x1xf32, #tpu.memory_space<vmem>>, vector<4x1xf32>,
      %cst_32 = arith.constant 0.000000e+00 : f32
      %66 = vector.broadcast %cst_32 : f32 to vector<4x1xf32>
      %c0_33 = arith.constant 0 : index
      %c0_34 = arith.constant 0 : index
      %67 = vector.load %arg7[%c0_33, %c0_34] : memref<4x1xf32, #tpu.memory_space<vmem>>, vector<4x1xf32>
      tpu.vector_store %arg7[%c0_33, %c0_34], %66 {strides = array<i32>} : memref<4x1xf32, #tpu.memory_space<vmem>>, vector<4x1xf32>,
    } else {
    }
    %c0 = arith.constant 0 : index
    %c0_1 = arith.constant 0 : index
    %3 = vector.load %arg1[%c0, %c0_1] : memref<4x512xf32, #tpu.memory_space<vmem>>, vector<4x512xf32>
    %cst = arith.constant 0.000000e+00 : f32
    %4 = vector.broadcast %cst : f32 to vector<4x512xf32>
    %5 = arith.subf %4, %3 : vector<4x512xf32>
    %c0_2 = arith.constant 0 : index
    %c0_3 = arith.constant 0 : index
    %6 = vector.load %arg2[%c0_2, %c0_3] : memref<4x512xbf16, #tpu.memory_space<vmem>>, vector<4x512xbf16>
    %7 = arith.extf %6 : vector<4x512xbf16> to vector<4x512xf32>
    %c0_4 = arith.constant 0 : index
    %c0_5 = arith.constant 0 : index
    %8 = vector.load %arg3[%c0_4, %c0_5] : memref<4x1xf32, #tpu.memory_space<vmem>>, vector<4x1xf32>
    %c0_6 = arith.constant 0 : index
    %c0_7 = arith.constant 0 : index
    %9 = vector.load %arg5[%c0_6, %c0_7] : memref<512x512xbf16, #tpu.memory_space<vmem>>, vector<512x512xbf16>
    %cst_8 = arith.constant dense<0.000000e+00> : vector<4x512xf32>
    %10 = tpu.matmul %6, %9, %cst_8 {dimension_numbers = #tpu.dot_dimension_numbers<[1], [0], [0], [1], [0, 0, 1, 1], [], []>} : vector<4x512xbf16>, vector<512x512xbf16>, vector<4x512xf32> -> vector<4x512xf32>
    %c0_9 = arith.constant 0 : index
    %c0_10 = arith.constant 0 : index
    %11 = vector.load %arg6[%c0_9, %c0_10] : memref<4x1xf32, #tpu.memory_space<vmem>>, vector<4x1xf32>
    %12 = vector.broadcast %11 : vector<4x1xf32> to vector<4x512xf32>
    %13 = arith.addf %12, %10 : vector<4x512xf32>
    %14 = tpu.iota {dimensions = array<i32: 1>} : vector<4x512xi32>
    %c1_i32 = arith.constant 1 : i32
    %15 = vector.broadcast %c1_i32 : i32 to vector<4x512xi32>
    %16 = arith.addi %14, %15 : vector<4x512xi32>
    %c512_i32 = arith.constant 512 : i32
    %17 = arith.muli %arg0, %c512_i32 : i32
    %18 = vector.broadcast %17 : i32 to vector<4x512xi32>
    %19 = arith.addi %16, %18 : vector<4x512xi32>
    %20 = arith.sitofp %19 : vector<4x512xi32> to vector<4x512xf32>
    %21 = vector.broadcast %8 : vector<4x1xf32> to vector<4x512xf32>
    %22 = arith.subf %21, %13 : vector<4x512xf32>
    %23 = arith.subf %20, %13 : vector<4x512xf32>
    %24 = vector.broadcast %8 : vector<4x1xf32> to vector<4x512xf32>
    %25 = arith.addf %24, %23 : vector<4x512xf32>
    %26 = arith.divf %22, %25 : vector<4x512xf32>
    %cst_11 = arith.constant 1.000000e+00 : f32
    %27 = vector.broadcast %cst_11 : f32 to vector<4x512xf32>
    %28 = arith.subf %27, %26 : vector<4x512xf32>
    %29 = arith.subf %13, %7 : vector<4x512xf32>
    %cst_12 = arith.constant 1.000000e+00 : f32
    %30 = vector.broadcast %cst_12 : f32 to vector<4x512xf32>
    %31 = arith.subf %20, %30 : vector<4x512xf32>
    %32 = arith.subf %31, %29 : vector<4x512xf32>
    %33 = vector.broadcast %8 : vector<4x1xf32> to vector<4x512xf32>
    %34 = arith.addf %33, %32 : vector<4x512xf32>
    %35 = vector.broadcast %8 : vector<4x1xf32> to vector<4x512xf32>
    %36 = arith.subf %35, %29 : vector<4x512xf32>
    %cst_13 = arith.constant 9.99999996E-13 : f32
    %37 = vector.broadcast %cst_13 : f32 to vector<4x512xf32>
    %38 = arith.maximumf %34, %37 : vector<4x512xf32>
    %39 = arith.divf %36, %38 : vector<4x512xf32>
    %cst_14 = arith.constant 1.000000e+00 : f32
    %40 = vector.broadcast %cst_14 : f32 to vector<4x512xf32>
    %41 = arith.subf %40, %39 : vector<4x512xf32>
    %42 = arith.subf %28, %41 : vector<4x512xf32>
    %c0_15 = arith.constant 0 : index
    %c0_16 = arith.constant 0 : index
    %43 = vector.load %arg7[%c0_15, %c0_16] : memref<4x1xf32, #tpu.memory_space<vmem>>, vector<4x1xf32>
    %44 = arith.mulf %5, %42 : vector<4x512xf32>
    %cst_17 = arith.constant dense<0.000000e+00> : vector<4xf32>
    %45 = vector.multi_reduction <add>, %44, %cst_17 [1] : vector<4x512xf32> to vector<4xf32>
    %46 = vector.shape_cast %45 : vector<4xf32> to vector<4x1xf32>
    %47 = arith.addf %43, %46 : vector<4x1xf32>
    %c0_18 = arith.constant 0 : index
    %c0_19 = arith.constant 0 : index
    %48 = vector.load %arg7[%c0_18, %c0_19] : memref<4x1xf32, #tpu.memory_space<vmem>>, vector<4x1xf32>
    tpu.vector_store %arg7[%c0_18, %c0_19], %47 {strides = array<i32>} : memref<4x1xf32, #tpu.memory_space<vmem>>, vector<4x1xf32>,
    %c0_20 = arith.constant 0 : index
    %c0_21 = arith.constant 0 : index
    %49 = vector.load %arg6[%c0_20, %c0_21] : memref<4x1xf32, #tpu.memory_space<vmem>>, vector<4x1xf32>
    %cst_22 = arith.constant dense<0.000000e+00> : vector<4xf32>
    %50 = vector.multi_reduction <add>, %7, %cst_22 [1] : vector<4x512xf32> to vector<4xf32>
    %51 = vector.shape_cast %50 : vector<4xf32> to vector<4x1xf32>
    %52 = arith.addf %49, %51 : vector<4x1xf32>
    %c0_23 = arith.constant 0 : index
    %c0_24 = arith.constant 0 : index
    %53 = vector.load %arg6[%c0_23, %c0_24] : memref<4x1xf32, #tpu.memory_space<vmem>>, vector<4x1xf32>
    tpu.vector_store %arg6[%c0_23, %c0_24], %52 {strides = array<i32>} : memref<4x1xf32, #tpu.memory_space<vmem>>, vector<4x1xf32>,
    %c0_i32_25 = arith.constant 0 : i32
    %54 = arith.cmpi eq, %arg0, %c0_i32_25 : i32
    %55 = arith.extui %54 : i1 to i32
    %c0_i32_26 = arith.constant 0 : i32
    %56 = arith.cmpi ne, %55, %c0_i32_26 : i32
    scf.if %56 {
      %cst_27 = arith.constant 0.000000e+00 : f32
      %57 = vector.broadcast %cst_27 : f32 to vector<4x1xf32>
      %58 = arith.cmpf ogt, %8, %57 : vector<4x1xf32>
      %59 = arith.extui %58 : vector<4x1xi1> to vector<4x1xi32>
      %60 = arith.sitofp %59 : vector<4x1xi32> to vector<4x1xf32>
      %c0_28 = arith.constant 0 : index
      %c0_29 = arith.constant 0 : index
      %61 = vector.load %arg7[%c0_28, %c0_29] : memref<4x1xf32, #tpu.memory_space<vmem>>, vector<4x1xf32>
      %62 = arith.mulf %61, %60 : vector<4x1xf32>
      %63 = vector.shape_cast %62 : vector<4x1xf32> to vector<1x4x1xf32>
      %cst_30 = arith.constant dense<0.000000e+00> : vector<1xf32>
      %64 = vector.multi_reduction <add>, %63, %cst_30 [1, 2] : vector<1x4x1xf32> to vector<1xf32>
      %65 = vector.shape_cast %64 : vector<1xf32> to vector<1x1x1xf32>
      %66 = vector.extract %65[0, 0, 0] : f32 from vector<1x1x1xf32>
      %67 = vector.shape_cast %60 : vector<4x1xf32> to vector<1x4x1xf32>
      %cst_31 = arith.constant dense<0.000000e+00> : vector<1xf32>
      %68 = vector.multi_reduction <add>, %67, %cst_31 [1, 2] : vector<1x4x1xf32> to vector<1xf32>
      %69 = vector.shape_cast %68 : vector<1xf32> to vector<1x1x1xf32>
      %70 = vector.extract %69[0, 0, 0] : f32 from vector<1x1x1xf32>
      %cst_32 = arith.constant 0.000000e+00 : f32
      %71 = arith.cmpf ogt, %70, %cst_32 : f32
      %cst_33 = arith.constant 1.000000e+00 : f32
      %72 = arith.maximumf %70, %cst_33 : f32
      %73 = arith.divf %66, %72 : f32
      %cst_34 = arith.constant 0.000000e+00 : f32
      %74 = arith.select %71, %73, %cst_34 : f32
      %75 = vector.broadcast %74 : f32 to vector<1x1xf32>
      %c0_35 = arith.constant 0 : index
      %c0_36 = arith.constant 0 : index
      %76 = vector.load %arg4[%c0_35, %c0_36] : memref<1x1xf32, #tpu.memory_space<vmem>>, vector<1x1xf32>
      tpu.vector_store %arg4[%c0_35, %c0_36], %75 {strides = array<i32>} : memref<1x1xf32, #tpu.memory_space<vmem>>, vector<1x1xf32>,
    } else {
    }
    return
  }
  func.func @transform_0(%arg0: i32) -> (i32, i32) {
    %c0_i32 = arith.constant 0 : i32
    %c0_i32_0 = arith.constant 0 : i32
    return %c0_i32, %arg0 : i32, i32
  }
  func.func @transform_1(%arg0: i32) -> (i32, i32) {
    %c0_i32 = arith.constant 0 : i32
    %c0_i32_0 = arith.constant 0 : i32
    return %c0_i32, %arg0 : i32, i32
  }
  func.func @transform_2(%arg0: i32) -> (i32, i32) {
    %c0_i32 = arith.constant 0 : i32
    %c0_i32_0 = arith.constant 0 : i32
    %c0_i32_1 = arith.constant 0 : i32
    return %c0_i32, %c0_i32_0 : i32, i32
  }
  func.func @transform_3(%arg0: i32) -> (i32, i32) {
    %c0_i32 = arith.constant 0 : i32
    %c0_i32_0 = arith.constant 0 : i32
    %c0_i32_1 = arith.constant 0 : i32
    return %c0_i32, %c0_i32_0 : i32, i32
  }
}

</mosaic_0001>

<llo_original>
// kernel: mix_lovasz_cross_entropy.2
$region0: #{mix_lovasz_cross_entropy.2}
  #allocation0 [shape = 'u32[]', space=smem, size = 0x4, offset = 0x4, fixed_abs, tag = 'smem constant byte address 0x4 - core index']
  #allocation1 [shape = 'u32[144,128]{1,0:T(1,128)}', space=vmem, size = 0x12000, scoped, tag = 'internal scratch']
  %s0 = inlined_call_operand.vmem [shape: f32[2,4,256], index: 0, kind: input, shape index: {}]
  %s1 = inlined_call_operand.vmem [shape: s32[2,1,256], index: 1, kind: input, shape index: {}]
  %s2 = inlined_call_operand.vmem [shape: f32[4,512], index: 2, kind: output, shape index: {0}]
  %s3 = inlined_call_operand.vmem [shape: bf16[4,512], index: 3, kind: output, shape index: {1}]
  %s4 = inlined_call_operand.vmem [shape: f32[2,1,1], index: 4, kind: output, shape index: {2}]
  %s5 = inlined_call_operand.vmem [shape: f32[2,1,1], index: 5, kind: output, shape index: {3}]
  %s6 = inlined_call_operand.vmem [shape: f32[2,4,1], index: 6, kind: output, shape index: {4}]
  %7 = xla_tuple %s2, %s3, %s4, %s5, %s6
  %s8 = sld [smem:[#allocation0]]
  $region77: #{mix_lovasz_cross_entropy.2} parent=0
    _
  %s10 = ssub.s32 1, %s8
  %s11 = scalar_select 0, %s10, %s8
  loop: start=0, step=1, limit=4
  $region2: #{mix_lovasz_cross_entropy.2} parent=0 // loop_pre_header
    _
  $region3: #{mix_lovasz_cross_entropy.2} parent=0 // loop_header
    %s13 = sphi 0, %s17
    %p14 = scmp.ge.s32.totalorder %s13, 4
    %s20 = sphi 0, %s32
    %s21 = sphi 0, %s28
    %s22 = sphi 0, %s20
    %s23 = sphi 0, %s21
    %s24 = sphi 0, %s22
    %s25 = sphi 0, %s23
    %s37 = sphi 0, %s39
    %s40 = sphi 0, %s37
    %s41 = sphi 0, %s40
    %s57 = sphi 0, %s41
    %s65 = sphi 0, %s67
    %s68 = sphi 0, %s65
    %s69 = sphi 0, %s68
    %s85 = sphi 0, %s69
    %s93 = sphi 0, %s95
    %s96 = sphi 0, %s93
    %s97 = sphi 0, %s96
    %s113 = sphi 0, %s97
    %s121 = sphi 0, %s123
    %s124 = sphi 0, %s121
    %s125 = sphi 0, %s124
    %s141 = sphi 0, %s125
    %s147 = sphi 0, %s149
    %s150 = sphi 0, %s147
    %s151 = sphi 0, %s150
    %s167 = sphi 0, %s151
    %s173 = sphi 0, %s175
    %s176 = sphi 0, %s173
    %s177 = sphi 0, %s176
    %s193 = sphi 0, %s177
    %s199 = sphi 0, %s201
    %s202 = sphi 0, %s199
    %s203 = sphi 0, %s202
    %s219 = sphi 0, %s203
  $region4: #{mix_lovasz_cross_entropy.2} parent=0 // loop_header_branch
    %16 = sbr.rel (%p14) target = $region8
  $region5: #{mix_lovasz_cross_entropy.2} parent=0 // loop_body
    %s18 = ssub.s32 %s13, 1
    %s19 = ssub.s32 %s13, 2
    %s26 = sadd.s32 1, %s21
    %p27 = scmp.ge.s32.totalorder %s26, 1
    %s28 = scalar_select %p27, 0, %s26
    %s29 = sadd.s32 1, %s20
    %s30 = scalar_select %p27, %s29, %s20
    %p31 = scmp.ge.s32.totalorder %s30, 2
    %s32 = scalar_select %p31, 0, %s30
    %s33 = ssub.s32 %s20, %s32
    %s34 = ssub.s32 %s21, %s28
    %s35 = sor.u32 %s33, %s34
    %p36 = scmp.eq.s32.totalorder %s35, 0
    %s38 = sadd.s32 %s37, 1
    %s39 = scalar_select %p36, %s37, %s38
    %p42 = pneg %p36
    %p43 = scmp.eq.s32.totalorder %s13, 1
    %p44 = por %p42, %p43
    %p45 = scmp.ne.s32.totalorder %s37, %s40
    %p46 = scmp.eq.s32.totalorder %s13, 0
    %p47 = por %p45, %p46
    %p48 = scmp.ne.s32.totalorder %s37, %s40
    %p49 = scmp.eq.s32.totalorder %s18, 1
    %p50 = por %p48, %p49
    %p51 = scmp.ne.s32.totalorder %s40, %s41
    %p52 = scmp.eq.s32.totalorder %s18, 0
    %p53 = por %p51, %p52
    %p54 = scmp.ne.s32.totalorder %s40, %s41
    %p55 = scmp.eq.s32.totalorder %s19, 1
    %p56 = por %p54, %p55
    %p58 = scmp.ne.s32.totalorder %s41, %s57
    %p59 = scmp.eq.s32.totalorder %s19, 0
    %p60 = por %p58, %p59
    %s61 = ssub.s32 %s20, %s32
    %s62 = ssub.s32 %s21, %s28
    %s63 = sor.u32 %s61, %s62
    %p64 = scmp.eq.s32.totalorder %s63, 0
    %s66 = sadd.s32 %s65, 1
    %s67 = scalar_select %p64, %s65, %s66
    %p70 = pneg %p64
    %p71 = scmp.eq.s32.totalorder %s13, 1
    %p72 = por %p70, %p71
    %p73 = scmp.ne.s32.totalorder %s65, %s68
    %p74 = scmp.eq.s32.totalorder %s13, 0
    %p75 = por %p73, %p74
    %p76 = scmp.ne.s32.totalorder %s65, %s68
    %p77 = scmp.eq.s32.totalorder %s18, 1
    %p78 = por %p76, %p77
    %p79 = scmp.ne.s32.totalorder %s68, %s69
    %p80 = scmp.eq.s32.totalorder %s18, 0
    %p81 = por %p79, %p80
    %p82 = scmp.ne.s32.totalorder %s68, %s69
    %p83 = scmp.eq.s32.totalorder %s19, 1
    %p84 = por %p82, %p83
    %p86 = scmp.ne.s32.totalorder %s69, %s85
    %p87 = scmp.eq.s32.totalorder %s19, 0
    %p88 = por %p86, %p87
    %s89 = sadd.s32 %s20, %s21
    %s90 = sadd.s32 %s32, %s28
    %s91 = ssub.s32 %s89, %s90
    %p92 = scmp.eq.s32.totalorder %s91, 0
    %s94 = sadd.s32 %s93, 1
    %s95 = scalar_select %p92, %s93, %s94
    %p98 = pneg %p92
    %p99 = scmp.eq.s32.totalorder %s13, 1
    %p100 = por %p98, %p99
    %p101 = scmp.ne.s32.totalorder %s93, %s96
    %p102 = scmp.eq.s32.totalorder %s13, 0
    %p103 = por %p101, %p102
    %p104 = scmp.ne.s32.totalorder %s93, %s96
    %p105 = scmp.eq.s32.totalorder %s18, 1
    %p106 = por %p104, %p105
    %p107 = scmp.ne.s32.totalorder %s96, %s97
    %p108 = scmp.eq.s32.totalorder %s18, 0
    %p109 = por %p107, %p108
    %p110 = scmp.ne.s32.totalorder %s96, %s97
    %p111 = scmp.eq.s32.totalorder %s19, 1
    %p112 = por %p110, %p111
    %p114 = scmp.ne.s32.totalorder %s97, %s113
    %p115 = scmp.eq.s32.totalorder %s19, 0
    %p116 = por %p114, %p115
    %s117 = sadd.s32 %s20, %s21
    %s118 = sadd.s32 %s32, %s28
    %s119 = ssub.s32 %s117, %s118
    %p120 = scmp.eq.s32.totalorder %s119, 0
    %s122 = sadd.s32 %s121, 1
    %s123 = scalar_select %p120, %s121, %s122
    %p126 = pneg %p120
    %p127 = scmp.eq.s32.totalorder %s13, 1
    %p128 = por %p126, %p127
    %p129 = scmp.ne.s32.totalorder %s121, %s124
    %p130 = scmp.eq.s32.totalorder %s13, 0
    %p131 = por %p129, %p130
    %p132 = scmp.ne.s32.totalorder %s121, %s124
    %p133 = scmp.eq.s32.totalorder %s18, 1
    %p134 = por %p132, %p133
    %p135 = scmp.ne.s32.totalorder %s124, %s125
    %p136 = scmp.eq.s32.totalorder %s18, 0
    %p137 = por %p135, %p136
    %p138 = scmp.ne.s32.totalorder %s124, %s125
    %p139 = scmp.eq.s32.totalorder %s19, 1
    %p140 = por %p138, %p139
    %p142 = scmp.ne.s32.totalorder %s125, %s141
    %p143 = scmp.eq.s32.totalorder %s19, 0
    %p144 = por %p142, %p143
    %s145 = ssub.s32 %s20, %s32
    %p146 = scmp.eq.s32.totalorder %s145, 0
    %s148 = sadd.s32 %s147, 1
    %s149 = scalar_select %p146, %s147, %s148
    %p152 = pneg %p146
    %p153 = scmp.eq.s32.totalorder %s13, 1
    %p154 = por %p152, %p153
    %p155 = scmp.ne.s32.totalorder %s147, %s150
    %p156 = scmp.eq.s32.totalorder %s13, 0
    %p157 = por %p155, %p156
    %p158 = scmp.ne.s32.totalorder %s147, %s150
    %p159 = scmp.eq.s32.totalorder %s18, 1
    %p160 = por %p158, %p159
    %p161 = scmp.ne.s32.totalorder %s150, %s151
    %p162 = scmp.eq.s32.totalorder %s18, 0
    %p163 = por %p161, %p162
    %p164 = scmp.ne.s32.totalorder %s150, %s151
    %p165 = scmp.eq.s32.totalorder %s19, 1
    %p166 = por %p164, %p165
    %p168 = scmp.ne.s32.totalorder %s151, %s167
    %p169 = scmp.eq.s32.totalorder %s19, 0
    %p170 = por %p168, %p169
    %s171 = ssub.s32 %s20, %s32
    %p172 = scmp.eq.s32.totalorder %s171, 0
    %s174 = sadd.s32 %s173, 1
    %s175 = scalar_select %p172, %s173, %s174
    %p178 = pneg %p172
    %p179 = scmp.eq.s32.totalorder %s13, 1
    %p180 = por %p178, %p179
    %p181 = scmp.ne.s32.totalorder %s173, %s176
    %p182 = scmp.eq.s32.totalorder %s13, 0
    %p183 = por %p181, %p182
    %p184 = scmp.ne.s32.totalorder %s173, %s176
    %p185 = scmp.eq.s32.totalorder %s18, 1
    %p186 = por %p184, %p185
    %p187 = scmp.ne.s32.totalorder %s176, %s177
    %p188 = scmp.eq.s32.totalorder %s18, 0
    %p189 = por %p187, %p188
    %p190 = scmp.ne.s32.totalorder %s176, %s177
    %p191 = scmp.eq.s32.totalorder %s19, 1
    %p192 = por %p190, %p191
    %p194 = scmp.ne.s32.totalorder %s177, %s193
    %p195 = scmp.eq.s32.totalorder %s19, 0
    %p196 = por %p194, %p195
    %s197 = ssub.s32 %s20, %s32
    %p198 = scmp.eq.s32.totalorder %s197, 0
    %s200 = sadd.s32 %s199, 1
    %s201 = scalar_select %p198, %s199, %s200
    %p204 = pneg %p198
    %p205 = scmp.eq.s32.totalorder %s13, 1
    %p206 = por %p204, %p205
    %p207 = scmp.ne.s32.totalorder %s199, %s202
    %p208 = scmp.eq.s32.totalorder %s13, 0
    %p209 = por %p207, %p208
    %p210 = scmp.ne.s32.totalorder %s199, %s202
    %p211 = scmp.eq.s32.totalorder %s18, 1
    %p212 = por %p210, %p211
    %p213 = scmp.ne.s32.totalorder %s202, %s203
    %p214 = scmp.eq.s32.totalorder %s18, 0
    %p215 = por %p213, %p214
    %p216 = scmp.ne.s32.totalorder %s202, %s203
    %p217 = scmp.eq.s32.totalorder %s19, 1
    %p218 = por %p216, %p217
    %p220 = scmp.ne.s32.totalorder %s203, %s219
    %p221 = scmp.eq.s32.totalorder %s19, 0
    %p222 = por %p220, %p221
    %p223 = scmp.le.s32.totalorder 1, %s13
    %p224 = scmp.lt.s32.totalorder %s13, 3
    %p225 = pnand %p223, %p224
    %p226 = pneg %p225
    // Predicated region
    $region9: #{mix_lovasz_cross_entropy.2} parent=5 // pred_check
      _
    $region10: #{mix_lovasz_cross_entropy.2} parent=5 // pred_check_branch
      %228 = sbr.rel (%p225) target = $region12
    $region11: #{mix_lovasz_cross_entropy.2} parent=5 // pred_region
      %s229 = ssub.s32 %s13, 1
    $region12: #{mix_lovasz_cross_entropy.2} parent=5 // pred_fallthru
      _
    %p230 = scmp.lt.s32.totalorder %s13, 2
    // Predicated region
    $region13: #{mix_lovasz_cross_entropy.2} parent=5 // pred_check
      %p231 = pneg %p230
    $region14: #{mix_lovasz_cross_entropy.2} parent=5 // pred_check_branch
      %233 = sbr.rel (%p231) target = $region16
    $region15: #{mix_lovasz_cross_entropy.2} parent=5 // pred_region
      // Predicated region
      $region17: #{mix_lovasz_cross_entropy.2} parent=15 // pred_check
        %p234 = pneg %p47
      $region18: #{mix_lovasz_cross_entropy.2} parent=15 // pred_check_branch
        %236 = sbr.rel (%p234) target = $region20
      $region19: #{mix_lovasz_cross_entropy.2} parent=15 // pred_region
        %s237 = smul.u32 2, %s21
        %p238 = scmp.lt.s32.totalorder %s20, 1
        %s239 = scalar_select %p238, %s20, 1
        %p240 = scmp.lt.s32.totalorder %s237, 1
        %s241 = scalar_select %p240, %s237, 1
        %s242 = smul.addr %s239, 2
        %s243 = sadd.s32 %s241, %s242
        %s244 = smul.addr %s243, 4
        %s245 = scalar_lea.vmem %s0, %s244
        %s246 = smul.u32 2, %s21
      $region20: #{mix_lovasz_cross_entropy.2} parent=15 // pred_fallthru
        _
      // Predicated region
      $region21: #{mix_lovasz_cross_entropy.2} parent=15 // pred_check
        %p247 = pneg %p75
      $region22: #{mix_lovasz_cross_entropy.2} parent=15 // pred_check_branch
        %249 = sbr.rel (%p247) target = $region24
      $region23: #{mix_lovasz_cross_entropy.2} parent=15 // pred_region
        %s250 = smul.u32 2, %s21
        %p251 = scmp.lt.s32.totalorder %s20, 1
        %s252 = scalar_select %p251, %s20, 1
        %p253 = scmp.lt.s32.totalorder %s250, 1
        %s254 = scalar_select %p253, %s250, 1
        %s255 = smul.addr %s252, 2
        %s256 = sadd.s32 %s254, %s255
        %s257 = scalar_lea.vmem %s1, %s256
        %s258 = smul.u32 2, %s21
      $region24: #{mix_lovasz_cross_entropy.2} parent=15 // pred_fallthru
        _
    $region16: #{mix_lovasz_cross_entropy.2} parent=5 // pred_fallthru
      _
    %p259 = scmp.le.s32.totalorder 1, %s13
    %p260 = scmp.lt.s32.totalorder %s13, 3
    %p261 = pnand %p259, %p260
    %p262 = pneg %p261
    // Predicated region
    $region25: #{mix_lovasz_cross_entropy.2} parent=5 // pred_check
      _
    $region26: #{mix_lovasz_cross_entropy.2} parent=5 // pred_check_branch
      %264 = sbr.rel (%p261) target = $region28
    $region27: #{mix_lovasz_cross_entropy.2} parent=5 // pred_region
      %s265 = ssub.s32 %s13, 1
      %s266 = smul.u32 2, %s23
      %p267 = scmp.lt.s32.totalorder %s22, 1
      %s268 = scalar_select %p267, %s22, 1
      %p269 = scmp.lt.s32.totalorder %s266, 1
      %s270 = scalar_select %p269, %s266, 1
      %s271 = smul.addr %s268, 2
      %s272 = sadd.s32 %s270, %s271
      %s273 = smul.addr %s272, 4
      %s274 = scalar_lea.vmem %s0, %s273
      %p275 = pneg %p53
      %p276 = pneg %p50
      %s277 = smul.u32 2, %s23
      %p278 = scmp.lt.s32.totalorder %s22, 1
      %s279 = scalar_select %p278, %s22, 1
      %p280 = scmp.lt.s32.totalorder %s277, 1
      %s281 = scalar_select %p280, %s277, 1
      %s282 = smul.addr %s279, 2
      %s283 = sadd.s32 %s281, %s282
      %s284 = scalar_lea.vmem %s1, %s283
      %p285 = pneg %p81
      %p286 = pneg %p78
      %p287 = pneg %p109
      %p288 = pneg %p106
      %s289 = sadd.s32 %s22, %s23
      %s290 = smul.u32 2, %s289
      %p291 = scmp.lt.s32.totalorder %s290, 3
      %s292 = scalar_select %p291, %s290, 3
      %s293 = smul.addr %s292, 4
      %s294 = scalar_lea.vmem %s2, %s293
      %p295 = pneg %p137
      %p296 = pneg %p134
      %s297 = sadd.s32 %s22, %s23
      %s298 = smul.u32 2, %s297
      %p299 = scmp.lt.s32.totalorder %s298, 3
      %s300 = scalar_select %p299, %s298, 3
      %s301 = smul.addr %s300, 2
      %s302 = scalar_lea.vmem %s3, %s301
      %p303 = pneg %p163
      %p304 = pneg %p160
      %p305 = scmp.lt.s32.totalorder %s22, 1
      %s306 = scalar_select %p305, %s22, 1
      %s307 = scalar_lea.vmem %s4, %s306
      %p308 = pneg %p189
      %p309 = pneg %p186
      %p310 = scmp.lt.s32.totalorder %s22, 1
      %s311 = scalar_select %p310, %s22, 1
      %s312 = scalar_lea.vmem %s5, %s311
      %p313 = pneg %p215
      %p314 = pneg %p212
      %p315 = scmp.lt.s32.totalorder %s22, 1
      %s316 = scalar_select %p315, %s22, 1
      %s317 = smul.addr %s316, 4
      %s318 = scalar_lea.vmem %s6, %s317
      %s319 = smul.u32 2, %s23
      %p320 = scmp.lt.s32.totalorder %s22, 1
      %s321 = scalar_select %p320, %s22, 1
      %p322 = scmp.lt.s32.totalorder %s319, 1
      %s323 = scalar_select %p322, %s319, 1
      %s324 = smul.addr %s321, 2
      %s325 = sadd.s32 %s323, %s324
      %s326 = smul.addr %s325, 4
      %s327 = scalar_lea.vmem %s0, %s326
      %s328 = smul.u32 2, %s23
      %s329 = smul.u32 2, %s23
      %p330 = scmp.lt.s32.totalorder %s22, 1
      %s331 = scalar_select %p330, %s22, 1
      %p332 = scmp.lt.s32.totalorder %s329, 1
      %s333 = scalar_select %p332, %s329, 1
      %s334 = smul.addr %s331, 2
      %s335 = sadd.s32 %s333, %s334
      %s336 = scalar_lea.vmem %s1, %s335
      %s337 = smul.u32 2, %s23
      %s338 = sadd.s32 %s22, %s23
      %s339 = smul.u32 2, %s338
      %p340 = scmp.lt.s32.totalorder %s339, 3
      %s341 = scalar_select %p340, %s339, 3
      %s342 = smul.addr %s341, 4
      %s343 = scalar_lea.vmem %s2, %s342
      %s344 = sadd.s32 %s22, %s23
      %s345 = smul.u32 2, %s344
      %s346 = sadd.s32 %s22, %s23
      %s347 = smul.u32 2, %s346
      %p348 = scmp.lt.s32.totalorder %s347, 3
      %s349 = scalar_select %p348, %s347, 3
      %s350 = smul.addr %s349, 2
      %s351 = scalar_lea.vmem %s3, %s350
      %s352 = sadd.s32 %s22, %s23
      %s353 = smul.u32 2, %s352
      %p354 = scmp.lt.s32.totalorder %s22, 1
      %s355 = scalar_select %p354, %s22, 1
      %s356 = scalar_lea.vmem %s4, %s355
      %p357 = scmp.lt.s32.totalorder %s22, 1
      %s358 = scalar_select %p357, %s22, 1
      %s359 = scalar_lea.vmem %s5, %s358
      %p360 = scmp.lt.s32.totalorder %s22, 1
      %s361 = scalar_select %p360, %s22, 1
      %s362 = smul.addr %s361, 4
      %s363 = scalar_lea.vmem %s6, %s362
      %p364 = scmp.eq.s32.totalorder %s23, 0
      // Predicated region
      $region29: #{mix_lovasz_cross_entropy.2} parent=27 // pred_check
        %p365 = pneg %p364
      $region30: #{mix_lovasz_cross_entropy.2} parent=27 // pred_check_branch
        %367 = sbr.rel (%p365) target = $region32
      $region31: #{mix_lovasz_cross_entropy.2} parent=27 // pred_region
        %vm368 = vcmask 0
        %369 = vst.msk [vmem:[%s356] sm:$0x1] %vm368, 0.0
        %370 = vst.msk [vmem:[%s359] sm:$0x1] %vm368, 0.0
        %vm371 = vcmask 3072
        %372 = vst.msk [vmem:[%s363] sm:$0xf] %vm371, 0.0
      $region32: #{mix_lovasz_cross_entropy.2} parent=27 // pred_fallthru
        _
      %v373 = vld [vmem:[%s327] sm:$0xff]
      %v374 = vld [vmem:[%s336] sm:$0x3]
      %v376 = vcombine.high %v373, %v373
      %vm378 = vcmask 1043456
      %v379 = vsel %vm378, %v373, -inf
      %v380 = vrot.slane %v379, 4
      %v381 = vmax.f32 %v379, %v380
      %v382 = vrot.slane %v381, 2
      %v383 = vmax.f32 %v381, %v382
      %v384 = vrot.slane %v383, 1
      %v385 = vmax.f32 %v383, %v384
      %v386 = vsel %vm378, %v376, -inf
      %v387 = vrot.slane %v386, 4
      %v388 = vmax.f32 %v386, %v387
      %v389 = vrot.slane %v388, 2
      %v390 = vmax.f32 %v388, %v389
      %v391 = vrot.slane %v390, 1
      %v392 = vmax.f32 %v390, %v391
      %v395 = vcombine.low %v385, %v392
      %v397 = vsub.f32 %v373, %v395
      %v398 = vmul.f32 %v397, 1.442695
      %v399 = vpow.pop %v398
      %v401 = vcombine.high %v399, %v399
      %v403 = vsel %vm378, %v399, 0.0
      %v404 = vrot.slane %v403, 4
      %v405 = vadd.f32 %v403, %v404
      %v406 = vrot.slane %v405, 2
      %v407 = vadd.f32 %v405, %v406
      %v408 = vrot.slane %v407, 1
      %v409 = vadd.f32 %v407, %v408
      %v410 = vsel %vm378, %v401, 0.0
      %v411 = vrot.slane %v410, 4
      %v412 = vadd.f32 %v410, %v411
      %v413 = vrot.slane %v412, 2
      %v414 = vadd.f32 %v412, %v413
      %v415 = vrot.slane %v414, 1
      %v416 = vadd.f32 %v414, %v415
      %v419 = vcombine.low %v409, %v416
      %v421 = vrcp.pop %v419
      %v422 = vmul.f32 %v399, %v421
      %v423 = vlog2.pop %v409
      %v424 = vmul.f32 %v423, 0.6931472
      %v425 = vlog2.pop %v416
      %v426 = vmul.f32 %v425, 0.6931472
      %v429 = vcombine.low %v424, %v426
      %v431 = vsub.f32 %v397, %v429
      %vm432 = vcmp.ne.s32.totalorder %v374, 255
      %v433 = vsel %vm432, 1, 0
      %v434 = vcvt.s32.f32 %v433
      %v435 = vlaneseq
      %v436 = vshrl.u32 %v435, 7
      %v437 = vlaneseq
      %v438 = vshrl.u32 %v437, 7
      %v439 = vsub.s32 0, %v438
      %v440 = vrot.slane %v374, %v439
      %v441 = vlaneseq
      %v442 = vshrl.u32 %v441, 7
      %v443 = vsub.s32 1, %v442
      %v444 = vrot.slane %v374, %v443
      %vm445 = vcmp.eq.s32.totalorder %v440, %v436
      %vm446 = vcmp.eq.s32.totalorder %v444, %v436
      %v447 = vsel %vm445, 1, 0
      %v448 = vsel %vm446, 1, 0
      %v449 = vcvt.s32.f32 %v447
      %v450 = vcvt.s32.f32 %v448
      %v452 = vlaneseq
      %v453 = vshrl.u32 %v452, 7
      %v454 = vsub.s32 0, %v453
      %v455 = vrot.slane %v434, %v454
      %v456 = vlaneseq
      %v457 = vshrl.u32 %v456, 7
      %v458 = vsub.s32 1, %v457
      %v459 = vrot.slane %v434, %v458
      %v462 = vmul.f32 %v449, %v455
      %v463 = vmul.f32 %v450, %v459
      %v465 = vcombine.high %v422, %v422
      %v467 = vsub.f32 %v462, %v422
      %v468 = vsub.f32 %v463, %v465
      %v469 = vand.u32 2147483647, %v467
      %v470 = vand.u32 2147483647, %v468
      %v471 = vmul.f32 %v469, %v455
      %v472 = vmul.f32 %v470, %v459
      %v473 = vsub.f32 0.0, %v471
      %v474 = vsub.f32 0.0, %v472
      %v477 = vcombine.low %v473, %v474
      %479 = vst [vmem:[%s343] sm:$0xff] %v477
      %v480 = vpack.c.bf16 %v462, %v462
      %v481 = vpack.c.bf16 %v463, %v463
      %v484 = vcombine.low %v480, %v481
      %v486 = vunpack.c.l.s4 1983009808
      %v487 = vunpack.c.0.s8 %v486
      %v488 = vlaneseq
      %v489 = vshrl.u32 %v488, 7
      %v490 = vsub.s32 %v487, %v489
      %v491 = vrot.slane %v484, %v490
      %493 = vst [vmem:[%s351] sm:$0xf] %v491
      %v495 = vcombine.high %v431, %v431
      %v497 = vmul.f32 %v462, %v431
      %v498 = vmul.f32 %v463, %v495
      %v499 = vsel %vm378, %v497, 0.0
      %v500 = vrot.slane %v499, 4
      %v501 = vadd.f32 %v499, %v500
      %v502 = vrot.slane %v501, 2
      %v503 = vadd.f32 %v501, %v502
      %v504 = vrot.slane %v503, 1
      %v505 = vadd.f32 %v503, %v504
      %v506 = vsel %vm378, %v498, 0.0
      %v507 = vrot.slane %v506, 4
      %v508 = vadd.f32 %v506, %v507
      %v509 = vrot.slane %v508, 2
      %v510 = vadd.f32 %v508, %v509
      %v511 = vrot.slane %v510, 1
      %v512 = vadd.f32 %v510, %v511
      %v513 = vsub.f32 0.0, %v505
      %v514 = vsub.f32 0.0, %v512
      %v515 = vld [vmem:[%s356] sm:$0x1]
      %vm516 = vcmask 1040384
      %v517 = vsel %vm516, %v513, 0.0
      %v518 = vsel %vm516, %v514, 0.0
      %v519 = vadd.f32 %v517, %v518
      %520 = vadd.xlane.f32.xlu0 %v519
      %v521 = vpop.xlane.xlu0 %520
      %v522 = vrot.slane %v521, 4
      %v523 = vadd.f32 %v521, %v522
      %v524 = vrot.slane %v523, 2
      %v525 = vadd.f32 %v523, %v524
      %v526 = vrot.slane %v525, 1
      %v527 = vadd.f32 %v525, %v526
      %s528 = vtos %v527
      %v529 = vstv %s528
      %v530 = vadd.f32 %v515, %v529
      %vm531 = vcmask 0
      %532 = vst.msk [vmem:[%s356] sm:$0x1] %vm531, %v530
      %v533 = vld [vmem:[%s359] sm:$0x1]
      %v534 = vsel %vm516, %v455, 0.0
      %v535 = vsel %vm516, %v459, 0.0
      %v536 = vadd.f32 %v534, %v535
      %537 = vadd.xlane.f32.xlu0 %v536
      %v538 = vpop.xlane.xlu0 %537
      %v539 = vrot.slane %v538, 4
      %v540 = vadd.f32 %v538, %v539
      %v541 = vrot.slane %v540, 2
      %v542 = vadd.f32 %v540, %v541
      %v543 = vrot.slane %v542, 1
      %v544 = vadd.f32 %v542, %v543
      %s545 = vtos %v544
      %v546 = vstv %s545
      %v547 = vadd.f32 %v533, %v546
      %548 = vst.msk [vmem:[%s359] sm:$0x1] %vm531, %v547
      %v549 = vld [vmem:[%s363] sm:$0xf]
      %v550 = vsel %vm378, %v462, 0.0
      %v551 = vsel %vm378, %v463, 0.0
      %v552 = vadd.f32 %v550, %v551
      %553 = vadd.xlane.f32.xlu0 %v552
      %v554 = vpop.xlane.xlu0 %553
      %v555 = vadd.f32 %v549, %v554
      %vm556 = vcmask 3072
      %557 = vst.msk [vmem:[%s363] sm:$0xf] %vm556, %v555
      %s558 = sadd.s32 %s22, %s23
      %s559 = smul.u32 2, %s558
      %p560 = scmp.lt.s32.totalorder %s559, 3
      %s561 = scalar_select %p560, %s559, 3
      %s562 = smul.addr %s561, 4
      %s563 = scalar_lea.vmem %s2, %s562
      %s564 = sadd.s32 %s22, %s23
      %s565 = smul.u32 2, %s564
      %p566 = scmp.lt.s32.totalorder %s565, 3
      %s567 = scalar_select %p566, %s565, 3
      %s568 = smul.addr %s567, 2
      %s569 = scalar_lea.vmem %s3, %s568
      %p570 = scmp.lt.s32.totalorder %s22, 1
      %s571 = scalar_select %p570, %s22, 1
      %s572 = scalar_lea.vmem %s4, %s571
      %p573 = scmp.lt.s32.totalorder %s22, 1
      %s574 = scalar_select %p573, %s22, 1
      %s575 = scalar_lea.vmem %s5, %s574
      %p576 = scmp.lt.s32.totalorder %s22, 1
      %s577 = scalar_select %p576, %s22, 1
      %s578 = smul.addr %s577, 4
      %s579 = scalar_lea.vmem %s6, %s578
      // Predicated region
      $region33: #{mix_lovasz_cross_entropy.2} parent=27 // pred_check
        %p580 = pneg %p106
      $region34: #{mix_lovasz_cross_entropy.2} parent=27 // pred_check_branch
        %582 = sbr.rel (%p580) target = $region36
      $region35: #{mix_lovasz_cross_entropy.2} parent=27 // pred_region
        %s583 = sadd.s32 %s22, %s23
        %s584 = smul.u32 2, %s583
      $region36: #{mix_lovasz_cross_entropy.2} parent=27 // pred_fallthru
        _
      // Predicated region
      $region37: #{mix_lovasz_cross_entropy.2} parent=27 // pred_check
        %p585 = pneg %p134
      $region38: #{mix_lovasz_cross_entropy.2} parent=27 // pred_check_branch
        %587 = sbr.rel (%p585) target = $region40
      $region39: #{mix_lovasz_cross_entropy.2} parent=27 // pred_region
        %s588 = sadd.s32 %s22, %s23
        %s589 = smul.u32 2, %s588
      $region40: #{mix_lovasz_cross_entropy.2} parent=27 // pred_fallthru
        _
      // Predicated region
      $region41: #{mix_lovasz_cross_entropy.2} parent=27 // pred_check
        %p590 = pneg %p160
      $region42: #{mix_lovasz_cross_entropy.2} parent=27 // pred_check_branch
        %592 = sbr.rel (%p590) target = $region44
      $region43: #{mix_lovasz_cross_entropy.2} parent=27 // pred_region
        _
      $region44: #{mix_lovasz_cross_entropy.2} parent=27 // pred_fallthru
        _
      // Predicated region
      $region45: #{mix_lovasz_cross_entropy.2} parent=27 // pred_check
        %p593 = pneg %p186
      $region46: #{mix_lovasz_cross_entropy.2} parent=27 // pred_check_branch
        %595 = sbr.rel (%p593) target = $region48
      $region47: #{mix_lovasz_cross_entropy.2} parent=27 // pred_region
        _
      $region48: #{mix_lovasz_cross_entropy.2} parent=27 // pred_fallthru
        _
      // Predicated region
      $region49: #{mix_lovasz_cross_entropy.2} parent=27 // pred_check
        %p596 = pneg %p212
      $region50: #{mix_lovasz_cross_entropy.2} parent=27 // pred_check_branch
        %598 = sbr.rel (%p596) target = $region52
      $region51: #{mix_lovasz_cross_entropy.2} parent=27 // pred_region
        _
      $region52: #{mix_lovasz_cross_entropy.2} parent=27 // pred_fallthru
        _
    $region28: #{mix_lovasz_cross_entropy.2} parent=5 // pred_fallthru
      _
    %p599 = scmp.le.s32.totalorder 2, %s13
    // Predicated region
    $region53: #{mix_lovasz_cross_entropy.2} parent=5 // pred_check
      %p600 = pneg %p599
    $region54: #{mix_lovasz_cross_entropy.2} parent=5 // pred_check_branch
      %602 = sbr.rel (%p600) target = $region56
    $region55: #{mix_lovasz_cross_entropy.2} parent=5 // pred_region
      %s603 = ssub.s32 %s13, 2
      // Predicated region
      $region57: #{mix_lovasz_cross_entropy.2} parent=55 // pred_check
        %p604 = pneg %p112
      $region58: #{mix_lovasz_cross_entropy.2} parent=55 // pred_check_branch
        %606 = sbr.rel (%p604) target = $region60
      $region59: #{mix_lovasz_cross_entropy.2} parent=55 // pred_region
        %s607 = sadd.s32 %s24, %s25
        %s608 = smul.u32 2, %s607
        %p609 = scmp.lt.s32.totalorder %s608, 3
        %s610 = scalar_select %p609, %s608, 3
        %s611 = smul.addr %s610, 4
        %s612 = scalar_lea.vmem %s2, %s611
      $region60: #{mix_lovasz_cross_entropy.2} parent=55 // pred_fallthru
        _
      // Predicated region
      $region61: #{mix_lovasz_cross_entropy.2} parent=55 // pred_check
        %p613 = pneg %p140
      $region62: #{mix_lovasz_cross_entropy.2} parent=55 // pred_check_branch
        %615 = sbr.rel (%p613) target = $region64
      $region63: #{mix_lovasz_cross_entropy.2} parent=55 // pred_region
        %s616 = sadd.s32 %s24, %s25
        %s617 = smul.u32 2, %s616
        %p618 = scmp.lt.s32.totalorder %s617, 3
        %s619 = scalar_select %p618, %s617, 3
        %s620 = smul.addr %s619, 2
        %s621 = scalar_lea.vmem %s3, %s620
      $region64: #{mix_lovasz_cross_entropy.2} parent=55 // pred_fallthru
        _
      // Predicated region
      $region65: #{mix_lovasz_cross_entropy.2} parent=55 // pred_check
        %p622 = pneg %p166
      $region66: #{mix_lovasz_cross_entropy.2} parent=55 // pred_check_branch
        %624 = sbr.rel (%p622) target = $region68
      $region67: #{mix_lovasz_cross_entropy.2} parent=55 // pred_region
        %p625 = scmp.lt.s32.totalorder %s24, 1
        %s626 = scalar_select %p625, %s24, 1
        %s627 = scalar_lea.vmem %s4, %s626
      $region68: #{mix_lovasz_cross_entropy.2} parent=55 // pred_fallthru
        _
      // Predicated region
      $region69: #{mix_lovasz_cross_entropy.2} parent=55 // pred_check
        %p628 = pneg %p192
      $region70: #{mix_lovasz_cross_entropy.2} parent=55 // pred_check_branch
        %630 = sbr.rel (%p628) target = $region72
      $region71: #{mix_lovasz_cross_entropy.2} parent=55 // pred_region
        %p631 = scmp.lt.s32.totalorder %s24, 1
        %s632 = scalar_select %p631, %s24, 1
        %s633 = scalar_lea.vmem %s5, %s632
      $region72: #{mix_lovasz_cross_entropy.2} parent=55 // pred_fallthru
        _
      // Predicated region
      $region73: #{mix_lovasz_cross_entropy.2} parent=55 // pred_check
        %p634 = pneg %p218
      $region74: #{mix_lovasz_cross_entropy.2} parent=55 // pred_check_branch
        %636 = sbr.rel (%p634) target = $region76
      $region75: #{mix_lovasz_cross_entropy.2} parent=55 // pred_region
        %p637 = scmp.lt.s32.totalorder %s24, 1
        %s638 = scalar_select %p637, %s24, 1
        %s639 = smul.addr %s638, 4
        %s640 = scalar_lea.vmem %s6, %s639
      $region76: #{mix_lovasz_cross_entropy.2} parent=55 // pred_fallthru
        _
    $region56: #{mix_lovasz_cross_entropy.2} parent=5 // pred_fallthru
      _
  $region6: #{mix_lovasz_cross_entropy.2} parent=0 // loop_footer
    %s17 = sadd.s32 1, %s13
  $region7: #{mix_lovasz_cross_entropy.2} parent=0 // loop_footer_branch
    %12 = sbr.rel target = $region3
  $region8: #{mix_lovasz_cross_entropy.2} parent=0 // loop_exit
    _

// kernel: mix_lovasz_cross_entropy.3
$region0: #{mix_lovasz_cross_entropy.3}
  #allocation0 [shape = 'u32[]', space=smem, size = 0x4, offset = 0x4, fixed_abs, tag = 'smem constant byte address 0x4 - core index']
  #allocation1 [shape = 'u32[144,128]{1,0:T(1,128)}', space=vmem, size = 0x12000, scoped, tag = 'internal scratch']
  #allocation2 [shape = 'bf16[512,512]{1,0:T(8,128)(2,1)}', space=vmem, size = 0x80000, scoped, tag = 'scratch operand']
  #allocation3 [shape = 'f32[4,1]{1,0:T(4,128)}', space=vmem, size = 0x800, scoped, tag = 'scratch operand']
  #allocation4 [shape = 'f32[4,1]{1,0:T(4,128)}', space=vmem, size = 0x800, scoped, tag = 'scratch operand']
  %s0 = inlined_call_operand.vmem [shape: f32[4,512], index: 0, kind: input, shape index: {}]
  %s1 = inlined_call_operand.vmem [shape: bf16[4,512], index: 1, kind: input, shape index: {}]
  %s2 = inlined_call_operand.vmem [shape: f32[4,1], index: 2, kind: input, shape index: {}]
  %s3 = inlined_call_operand.hbm [shape: f32[1,1], index: 3, kind: output, shape index: {}]
  %s4 = sld [smem:[#allocation0]]
  $region30: #{mix_lovasz_cross_entropy.3} parent=0
    _
  %s6 = ssub.s32 1, %s4
  %s7 = scalar_select 0, %s6, %s4
  $region1: #{mix_lovasz_cross_entropy.3} parent=0
    #allocation5 [shape = 'u8[512]{0}', space=vmem, size = 0x400, scoped, tag = 'output window, operand 0, single buffered']
    #allocation6 [shape = 's32[1]{0}', space=sflag, size = 0x4, scoped, tag = 'scoped memory for mix_lovasz_cross_entropy.3']
    %8 = vsyncpa [#allocation6], 0
    // Predicated region
    $region2: #{mix_lovasz_cross_entropy.3} parent=1 // pred_check
      _
    $region3: #{mix_lovasz_cross_entropy.3} parent=1 // pred_check_branch
      %10 = sbr.rel (0) target = $region5
    $region4: #{mix_lovasz_cross_entropy.3} parent=1 // pred_region
      _
    $region5: #{mix_lovasz_cross_entropy.3} parent=1 // pred_fallthru
      _
    // Predicated region
    $region6: #{mix_lovasz_cross_entropy.3} parent=1 // pred_check
      _
    $region7: #{mix_lovasz_cross_entropy.3} parent=1 // pred_check_branch
      %12 = sbr.rel (0) target = $region9
    $region8: #{mix_lovasz_cross_entropy.3} parent=1 // pred_region
      _
    $region9: #{mix_lovasz_cross_entropy.3} parent=1 // pred_fallthru
      _
    // Predicated region
    $region10: #{mix_lovasz_cross_entropy.3} parent=1 // pred_check
      _
    $region11: #{mix_lovasz_cross_entropy.3} parent=1 // pred_check_branch
      %14 = sbr.rel (0) target = $region13
    $region12: #{mix_lovasz_cross_entropy.3} parent=1 // pred_region
      _
    $region13: #{mix_lovasz_cross_entropy.3} parent=1 // pred_fallthru
      _
    %p15 = scmp.eq.s32.totalorder 0, 0
    // Predicated region
    $region14: #{mix_lovasz_cross_entropy.3} parent=1 // pred_check
      %p16 = pneg %p15
    $region15: #{mix_lovasz_cross_entropy.3} parent=1 // pred_check_branch
      %18 = sbr.rel (%p16) target = $region17
    $region16: #{mix_lovasz_cross_entropy.3} parent=1 // pred_region
      %v19 = vlaneseq
      %v20 = vshrl.u32 %v19, 7
      %v21 = vadd.s32 %v20, 8
      %v22 = vadd.s32 %v20, 16
      %v23 = vadd.s32 %v20, 24
      %v24 = vadd.s32 %v20, 32
      %v25 = vadd.s32 %v20, 40
      %v26 = vadd.s32 %v20, 48
      %v27 = vadd.s32 %v20, 56
      %v28 = vadd.s32 %v20, 64
      %v29 = vadd.s32 %v20, 72
      %v30 = vadd.s32 %v20, 80
      %v31 = vadd.s32 %v20, 88
      %v32 = vadd.s32 %v20, 96
      %v33 = vadd.s32 %v20, 104
      %v34 = vadd.s32 %v20, 112
      %v35 = vadd.s32 %v20, 120
      %v36 = vadd.s32 %v20, 128
      %v37 = vadd.s32 %v20, 136
      %v38 = vadd.s32 %v20, 144
      %v39 = vadd.s32 %v20, 152
      %v40 = vadd.s32 %v20, 160
      %v41 = vadd.s32 %v20, 168
      %v42 = vadd.s32 %v20, 176
      %v43 = vadd.s32 %v20, 184
      %v44 = vadd.s32 %v20, 192
      %v45 = vadd.s32 %v20, 200
      %v46 = vadd.s32 %v20, 208
      %v47 = vadd.s32 %v20, 216
      %v48 = vadd.s32 %v20, 224
      %v49 = vadd.s32 %v20, 232
      %v50 = vadd.s32 %v20, 240
      %v51 = vadd.s32 %v20, 248
      %v52 = vadd.s32 %v20, 256
      %v53 = vadd.s32 %v20, 264
      %v54 = vadd.s32 %v20, 272
      %v55 = vadd.s32 %v20, 280
      %v56 = vadd.s32 %v20, 288
      %v57 = vadd.s32 %v20, 296
      %v58 = vadd.s32 %v20, 304
      %v59 = vadd.s32 %v20, 312
      %v60 = vadd.s32 %v20, 320
      %v61 = vadd.s32 %v20, 328
      %v62 = vadd.s32 %v20, 336
      %v63 = vadd.s32 %v20, 344
      %v64 = vadd.s32 %v20, 352
      %v65 = vadd.s32 %v20, 360
      %v66 = vadd.s32 %v20, 368
      %v67 = vadd.s32 %v20, 376
      %v68 = vadd.s32 %v20, 384
      %v69 = vadd.s32 %v20, 392
      %v70 = vadd.s32 %v20, 400
      %v71 = vadd.s32 %v20, 408
      %v72 = vadd.s32 %v20, 416
      %v73 = vadd.s32 %v20, 424
      %v74 = vadd.s32 %v20, 432
      %v75 = vadd.s32 %v20, 440
      %v76 = vadd.s32 %v20, 448
      %v77 = vadd.s32 %v20, 456
      %v78 = vadd.s32 %v20, 464
      %v79 = vadd.s32 %v20, 472
      %v80 = vadd.s32 %v20, 480
      %v81 = vadd.s32 %v20, 488
      %v82 = vadd.s32 %v20, 496
      %v83 = vadd.s32 %v20, 504
      %v84 = vlaneseq
      %v85 = vand.u32 %v84, 127
      %v86 = vadd.s32 %v85, 128
      %v87 = vadd.s32 %v85, 256
      %v88 = vadd.s32 %v85, 384
      %vm89 = vcmp.le.s32.totalorder %v20, %v85
      %vm90 = vcmp.le.s32.totalorder %v20, %v86
      %vm91 = vcmp.le.s32.totalorder %v20, %v87
      %vm92 = vcmp.le.s32.totalorder %v20, %v88
      %vm93 = vcmp.le.s32.totalorder %v21, %v85
      %vm94 = vcmp.le.s32.totalorder %v21, %v86
      %vm95 = vcmp.le.s32.totalorder %v21, %v87
      %vm96 = vcmp.le.s32.totalorder %v21, %v88
      %vm97 = vcmp.le.s32.totalorder %v22, %v85
      %vm98 = vcmp.le.s32.totalorder %v22, %v86
      %vm99 = vcmp.le.s32.totalorder %v22, %v87
      %vm100 = vcmp.le.s32.totalorder %v22, %v88
      %vm101 = vcmp.le.s32.totalorder %v23, %v85
      %vm102 = vcmp.le.s32.totalorder %v23, %v86
      %vm103 = vcmp.le.s32.totalorder %v23, %v87
      %vm104 = vcmp.le.s32.totalorder %v23, %v88
      %vm105 = vcmp.le.s32.totalorder %v24, %v85
      %vm106 = vcmp.le.s32.totalorder %v24, %v86
      %vm107 = vcmp.le.s32.totalorder %v24, %v87
      %vm108 = vcmp.le.s32.totalorder %v24, %v88
      %vm109 = vcmp.le.s32.totalorder %v25, %v85
      %vm110 = vcmp.le.s32.totalorder %v25, %v86
      %vm111 = vcmp.le.s32.totalorder %v25, %v87
      %vm112 = vcmp.le.s32.totalorder %v25, %v88
      %vm113 = vcmp.le.s32.totalorder %v26, %v85
      %vm114 = vcmp.le.s32.totalorder %v26, %v86
      %vm115 = vcmp.le.s32.totalorder %v26, %v87
      %vm116 = vcmp.le.s32.totalorder %v26, %v88
      %vm117 = vcmp.le.s32.totalorder %v27, %v85
      %vm118 = vcmp.le.s32.totalorder %v27, %v86
      %vm119 = vcmp.le.s32.totalorder %v27, %v87
      %vm120 = vcmp.le.s32.totalorder %v27, %v88
      %vm121 = vcmp.le.s32.totalorder %v28, %v85
      %vm122 = vcmp.le.s32.totalorder %v28, %v86
      %vm123 = vcmp.le.s32.totalorder %v28, %v87
      %vm124 = vcmp.le.s32.totalorder %v28, %v88
      %vm125 = vcmp.le.s32.totalorder %v29, %v85
      %vm126 = vcmp.le.s32.totalorder %v29, %v86
      %vm127 = vcmp.le.s32.totalorder %v29, %v87
      %vm128 = vcmp.le.s32.totalorder %v29, %v88
      %vm129 = vcmp.le.s32.totalorder %v30, %v85
      %vm130 = vcmp.le.s32.totalorder %v30, %v86
      %vm131 = vcmp.le.s32.totalorder %v30, %v87
      %vm132 = vcmp.le.s32.totalorder %v30, %v88
      %vm133 = vcmp.le.s32.totalorder %v31, %v85
      %vm134 = vcmp.le.s32.totalorder %v31, %v86
      %vm135 = vcmp.le.s32.totalorder %v31, %v87
      %vm136 = vcmp.le.s32.totalorder %v31, %v88
      %vm137 = vcmp.le.s32.totalorder %v32, %v85
      %vm138 = vcmp.le.s32.totalorder %v32, %v86
      %vm139 = vcmp.le.s32.totalorder %v32, %v87
      %vm140 = vcmp.le.s32.totalorder %v32, %v88
      %vm141 = vcmp.le.s32.totalorder %v33, %v85
      %vm142 = vcmp.le.s32.totalorder %v33, %v86
      %vm143 = vcmp.le.s32.totalorder %v33, %v87
      %vm144 = vcmp.le.s32.totalorder %v33, %v88
      %vm145 = vcmp.le.s32.totalorder %v34, %v85
      %vm146 = vcmp.le.s32.totalorder %v34, %v86
      %vm147 = vcmp.le.s32.totalorder %v34, %v87
      %vm148 = vcmp.le.s32.totalorder %v34, %v88
      %vm149 = vcmp.le.s32.totalorder %v35, %v85
      %vm150 = vcmp.le.s32.totalorder %v35, %v86
      %vm151 = vcmp.le.s32.totalorder %v35, %v87
      %vm152 = vcmp.le.s32.totalorder %v35, %v88
      %vm153 = vcmp.le.s32.totalorder %v36, %v85
      %vm154 = vcmp.le.s32.totalorder %v36, %v86
      %vm155 = vcmp.le.s32.totalorder %v36, %v87
      %vm156 = vcmp.le.s32.totalorder %v36, %v88
      %vm157 = vcmp.le.s32.totalorder %v37, %v85
      %vm158 = vcmp.le.s32.totalorder %v37, %v86
      %vm159 = vcmp.le.s32.totalorder %v37, %v87
      %vm160 = vcmp.le.s32.totalorder %v37, %v88
      %vm161 = vcmp.le.s32.totalorder %v38, %v85
      %vm162 = vcmp.le.s32.totalorder %v38, %v86
      %vm163 = vcmp.le.s32.totalorder %v38, %v87
      %vm164 = vcmp.le.s32.totalorder %v38, %v88
      %vm165 = vcmp.le.s32.totalorder %v39, %v85
      %vm166 = vcmp.le.s32.totalorder %v39, %v86
      %vm167 = vcmp.le.s32.totalorder %v39, %v87
      %vm168 = vcmp.le.s32.totalorder %v39, %v88
      %vm169 = vcmp.le.s32.totalorder %v40, %v85
      %vm170 = vcmp.le.s32.totalorder %v40, %v86
      %vm171 = vcmp.le.s32.totalorder %v40, %v87
      %vm172 = vcmp.le.s32.totalorder %v40, %v88
      %vm173 = vcmp.le.s32.totalorder %v41, %v85
      %vm174 = vcmp.le.s32.totalorder %v41, %v86
      %vm175 = vcmp.le.s32.totalorder %v41, %v87
      %vm176 = vcmp.le.s32.totalorder %v41, %v88
      %vm177 = vcmp.le.s32.totalorder %v42, %v85
      %vm178 = vcmp.le.s32.totalorder %v42, %v86
      %vm179 = vcmp.le.s32.totalorder %v42, %v87
      %vm180 = vcmp.le.s32.totalorder %v42, %v88
      %vm181 = vcmp.le.s32.totalorder %v43, %v85
      %vm182 = vcmp.le.s32.totalorder %v43, %v86
      %vm183 = vcmp.le.s32.totalorder %v43, %v87
      %vm184 = vcmp.le.s32.totalorder %v43, %v88
      %vm185 = vcmp.le.s32.totalorder %v44, %v85
      %vm186 = vcmp.le.s32.totalorder %v44, %v86
      %vm187 = vcmp.le.s32.totalorder %v44, %v87
      %vm188 = vcmp.le.s32.totalorder %v44, %v88
      %vm189 = vcmp.le.s32.totalorder %v45, %v85
      %vm190 = vcmp.le.s32.totalorder %v45, %v86
      %vm191 = vcmp.le.s32.totalorder %v45, %v87
      %vm192 = vcmp.le.s32.totalorder %v45, %v88
      %vm193 = vcmp.le.s32.totalorder %v46, %v85
      %vm194 = vcmp.le.s32.totalorder %v46, %v86
      %vm195 = vcmp.le.s32.totalorder %v46, %v87
      %vm196 = vcmp.le.s32.totalorder %v46, %v88
      %vm197 = vcmp.le.s32.totalorder %v47, %v85
      %vm198 = vcmp.le.s32.totalorder %v47, %v86
      %vm199 = vcmp.le.s32.totalorder %v47, %v87
      %vm200 = vcmp.le.s32.totalorder %v47, %v88
      %vm201 = vcmp.le.s32.totalorder %v48, %v85
      %vm202 = vcmp.le.s32.totalorder %v48, %v86
      %vm203 = vcmp.le.s32.totalorder %v48, %v87
      %vm204 = vcmp.le.s32.totalorder %v48, %v88
      %vm205 = vcmp.le.s32.totalorder %v49, %v85
      %vm206 = vcmp.le.s32.totalorder %v49, %v86
      %vm207 = vcmp.le.s32.totalorder %v49, %v87
      %vm208 = vcmp.le.s32.totalorder %v49, %v88
      %vm209 = vcmp.le.s32.totalorder %v50, %v85
      %vm210 = vcmp.le.s32.totalorder %v50, %v86
      %vm211 = vcmp.le.s32.totalorder %v50, %v87
      %vm212 = vcmp.le.s32.totalorder %v50, %v88
      %vm213 = vcmp.le.s32.totalorder %v51, %v85
      %vm214 = vcmp.le.s32.totalorder %v51, %v86
      %vm215 = vcmp.le.s32.totalorder %v51, %v87
      %vm216 = vcmp.le.s32.totalorder %v51, %v88
      %vm217 = vcmp.le.s32.totalorder %v52, %v85
      %vm218 = vcmp.le.s32.totalorder %v52, %v86
      %vm219 = vcmp.le.s32.totalorder %v52, %v87
      %vm220 = vcmp.le.s32.totalorder %v52, %v88
      %vm221 = vcmp.le.s32.totalorder %v53, %v85
      %vm222 = vcmp.le.s32.totalorder %v53, %v86
      %vm223 = vcmp.le.s32.totalorder %v53, %v87
      %vm224 = vcmp.le.s32.totalorder %v53, %v88
      %vm225 = vcmp.le.s32.totalorder %v54, %v85
      %vm226 = vcmp.le.s32.totalorder %v54, %v86
      %vm227 = vcmp.le.s32.totalorder %v54, %v87
      %vm228 = vcmp.le.s32.totalorder %v54, %v88
      %vm229 = vcmp.le.s32.totalorder %v55, %v85
      %vm230 = vcmp.le.s32.totalorder %v55, %v86
      %vm231 = vcmp.le.s32.totalorder %v55, %v87
      %vm232 = vcmp.le.s32.totalorder %v55, %v88
      %vm233 = vcmp.le.s32.totalorder %v56, %v85
      %vm234 = vcmp.le.s32.totalorder %v56, %v86
      %vm235 = vcmp.le.s32.totalorder %v56, %v87
      %vm236 = vcmp.le.s32.totalorder %v56, %v88
      %vm237 = vcmp.le.s32.totalorder %v57, %v85
      %vm238 = vcmp.le.s32.totalorder %v57, %v86
      %vm239 = vcmp.le.s32.totalorder %v57, %v87
      %vm240 = vcmp.le.s32.totalorder %v57, %v88
      %vm241 = vcmp.le.s32.totalorder %v58, %v85
      %vm242 = vcmp.le.s32.totalorder %v58, %v86
      %vm243 = vcmp.le.s32.totalorder %v58, %v87
      %vm244 = vcmp.le.s32.totalorder %v58, %v88
      %vm245 = vcmp.le.s32.totalorder %v59, %v85
      %vm246 = vcmp.le.s32.totalorder %v59, %v86
      %vm247 = vcmp.le.s32.totalorder %v59, %v87
      %vm248 = vcmp.le.s32.totalorder %v59, %v88
      %vm249 = vcmp.le.s32.totalorder %v60, %v85
      %vm250 = vcmp.le.s32.totalorder %v60, %v86
      %vm251 = vcmp.le.s32.totalorder %v60, %v87
      %vm252 = vcmp.le.s32.totalorder %v60, %v88
      %vm253 = vcmp.le.s32.totalorder %v61, %v85
      %vm254 = vcmp.le.s32.totalorder %v61, %v86
      %vm255 = vcmp.le.s32.totalorder %v61, %v87
      %vm256 = vcmp.le.s32.totalorder %v61, %v88
      %vm257 = vcmp.le.s32.totalorder %v62, %v85
      %vm258 = vcmp.le.s32.totalorder %v62, %v86
      %vm259 = vcmp.le.s32.totalorder %v62, %v87
      %vm260 = vcmp.le.s32.totalorder %v62, %v88
      %vm261 = vcmp.le.s32.totalorder %v63, %v85
      %vm262 = vcmp.le.s32.totalorder %v63, %v86
      %vm263 = vcmp.le.s32.totalorder %v63, %v87
      %vm264 = vcmp.le.s32.totalorder %v63, %v88
      %vm265 = vcmp.le.s32.totalorder %v64, %v85
      %vm266 = vcmp.le.s32.totalorder %v64, %v86
      %vm267 = vcmp.le.s32.totalorder %v64, %v87
      %vm268 = vcmp.le.s32.totalorder %v64, %v88
      %vm269 = vcmp.le.s32.totalorder %v65, %v85
      %vm270 = vcmp.le.s32.totalorder %v65, %v86
      %vm271 = vcmp.le.s32.totalorder %v65, %v87
      %vm272 = vcmp.le.s32.totalorder %v65, %v88
      %vm273 = vcmp.le.s32.totalorder %v66, %v85
      %vm274 = vcmp.le.s32.totalorder %v66, %v86
      %vm275 = vcmp.le.s32.totalorder %v66, %v87
      %vm276 = vcmp.le.s32.totalorder %v66, %v88
      %vm277 = vcmp.le.s32.totalorder %v67, %v85
      %vm278 = vcmp.le.s32.totalorder %v67, %v86
      %vm279 = vcmp.le.s32.totalorder %v67, %v87
      %vm280 = vcmp.le.s32.totalorder %v67, %v88
      %vm281 = vcmp.le.s32.totalorder %v68, %v85
      %vm282 = vcmp.le.s32.totalorder %v68, %v86
      %vm283 = vcmp.le.s32.totalorder %v68, %v87
      %vm284 = vcmp.le.s32.totalorder %v68, %v88
      %vm285 = vcmp.le.s32.totalorder %v69, %v85
      %vm286 = vcmp.le.s32.totalorder %v69, %v86
      %vm287 = vcmp.le.s32.totalorder %v69, %v87
      %vm288 = vcmp.le.s32.totalorder %v69, %v88
      %vm289 = vcmp.le.s32.totalorder %v70, %v85
      %vm290 = vcmp.le.s32.totalorder %v70, %v86
      %vm291 = vcmp.le.s32.totalorder %v70, %v87
      %vm292 = vcmp.le.s32.totalorder %v70, %v88
      %vm293 = vcmp.le.s32.totalorder %v71, %v85
      %vm294 = vcmp.le.s32.totalorder %v71, %v86
      %vm295 = vcmp.le.s32.totalorder %v71, %v87
      %vm296 = vcmp.le.s32.totalorder %v71, %v88
      %vm297 = vcmp.le.s32.totalorder %v72, %v85
      %vm298 = vcmp.le.s32.totalorder %v72, %v86
      %vm299 = vcmp.le.s32.totalorder %v72, %v87
      %vm300 = vcmp.le.s32.totalorder %v72, %v88
      %vm301 = vcmp.le.s32.totalorder %v73, %v85
      %vm302 = vcmp.le.s32.totalorder %v73, %v86
      %vm303 = vcmp.le.s32.totalorder %v73, %v87
      %vm304 = vcmp.le.s32.totalorder %v73, %v88
      %vm305 = vcmp.le.s32.totalorder %v74, %v85
      %vm306 = vcmp.le.s32.totalorder %v74, %v86
      %vm307 = vcmp.le.s32.totalorder %v74, %v87
      %vm308 = vcmp.le.s32.totalorder %v74, %v88
      %vm309 = vcmp.le.s32.totalorder %v75, %v85
      %vm310 = vcmp.le.s32.totalorder %v75, %v86
      %vm311 = vcmp.le.s32.totalorder %v75, %v87
      %vm312 = vcmp.le.s32.totalorder %v75, %v88
      %vm313 = vcmp.le.s32.totalorder %v76, %v85
      %vm314 = vcmp.le.s32.totalorder %v76, %v86
      %vm315 = vcmp.le.s32.totalorder %v76, %v87
      %vm316 = vcmp.le.s32.totalorder %v76, %v88
      %vm317 = vcmp.le.s32.totalorder %v77, %v85
      %vm318 = vcmp.le.s32.totalorder %v77, %v86
      %vm319 = vcmp.le.s32.totalorder %v77, %v87
      %vm320 = vcmp.le.s32.totalorder %v77, %v88
      %vm321 = vcmp.le.s32.totalorder %v78, %v85
      %vm322 = vcmp.le.s32.totalorder %v78, %v86
      %vm323 = vcmp.le.s32.totalorder %v78, %v87
      %vm324 = vcmp.le.s32.totalorder %v78, %v88
      %vm325 = vcmp.le.s32.totalorder %v79, %v85
      %vm326 = vcmp.le.s32.totalorder %v79, %v86
      %vm327 = vcmp.le.s32.totalorder %v79, %v87
      %vm328 = vcmp.le.s32.totalorder %v79, %v88
      %vm329 = vcmp.le.s32.totalorder %v80, %v85
      %vm330 = vcmp.le.s32.totalorder %v80, %v86
      %vm331 = vcmp.le.s32.totalorder %v80, %v87
      %vm332 = vcmp.le.s32.totalorder %v80, %v88
      %vm333 = vcmp.le.s32.totalorder %v81, %v85
      %vm334 = vcmp.le.s32.totalorder %v81, %v86
      %vm335 = vcmp.le.s32.totalorder %v81, %v87
      %vm336 = vcmp.le.s32.totalorder %v81, %v88
      %vm337 = vcmp.le.s32.totalorder %v82, %v85
      %vm338 = vcmp.le.s32.totalorder %v82, %v86
      %vm339 = vcmp.le.s32.totalorder %v82, %v87
      %vm340 = vcmp.le.s32.totalorder %v82, %v88
      %vm341 = vcmp.le.s32.totalorder %v83, %v85
      %vm342 = vcmp.le.s32.totalorder %v83, %v86
      %vm343 = vcmp.le.s32.totalorder %v83, %v87
      %vm344 = vcmp.le.s32.totalorder %v83, %v88
      %v345 = vsel %vm89, 1, 0
      %v346 = vsel %vm90, 1, 0
      %v347 = vsel %vm91, 1, 0
      %v348 = vsel %vm92, 1, 0
      %v349 = vsel %vm93, 1, 0
      %v350 = vsel %vm94, 1, 0
      %v351 = vsel %vm95, 1, 0
      %v352 = vsel %vm96, 1, 0
      %v353 = vsel %vm97, 1, 0
      %v354 = vsel %vm98, 1, 0
      %v355 = vsel %vm99, 1, 0
      %v356 = vsel %vm100, 1, 0
      %v357 = vsel %vm101, 1, 0
      %v358 = vsel %vm102, 1, 0
      %v359 = vsel %vm103, 1, 0
      %v360 = vsel %vm104, 1, 0
      %v361 = vsel %vm105, 1, 0
      %v362 = vsel %vm106, 1, 0
      %v363 = vsel %vm107, 1, 0
      %v364 = vsel %vm108, 1, 0
      %v365 = vsel %vm109, 1, 0
      %v366 = vsel %vm110, 1, 0
      %v367 = vsel %vm111, 1, 0
      %v368 = vsel %vm112, 1, 0
      %v369 = vsel %vm113, 1, 0
      %v370 = vsel %vm114, 1, 0
      %v371 = vsel %vm115, 1, 0
      %v372 = vsel %vm116, 1, 0
      %v373 = vsel %vm117, 1, 0
      %v374 = vsel %vm118, 1, 0
      %v375 = vsel %vm119, 1, 0
      %v376 = vsel %vm120, 1, 0
      %v377 = vsel %vm121, 1, 0
      %v378 = vsel %vm122, 1, 0
      %v379 = vsel %vm123, 1, 0
      %v380 = vsel %vm124, 1, 0
      %v381 = vsel %vm125, 1, 0
      %v382 = vsel %vm126, 1, 0
      %v383 = vsel %vm127, 1, 0
      %v384 = vsel %vm128, 1, 0
      %v385 = vsel %vm129, 1, 0
      %v386 = vsel %vm130, 1, 0
      %v387 = vsel %vm131, 1, 0
      %v388 = vsel %vm132, 1, 0
      %v389 = vsel %vm133, 1, 0
      %v390 = vsel %vm134, 1, 0
      %v391 = vsel %vm135, 1, 0
      %v392 = vsel %vm136, 1, 0
      %v393 = vsel %vm137, 1, 0
      %v394 = vsel %vm138, 1, 0
      %v395 = vsel %vm139, 1, 0
      %v396 = vsel %vm140, 1, 0
      %v397 = vsel %vm141, 1, 0
      %v398 = vsel %vm142, 1, 0
      %v399 = vsel %vm143, 1, 0
      %v400 = vsel %vm144, 1, 0
      %v401 = vsel %vm145, 1, 0
      %v402 = vsel %vm146, 1, 0
      %v403 = vsel %vm147, 1, 0
      %v404 = vsel %vm148, 1, 0
      %v405 = vsel %vm149, 1, 0
      %v406 = vsel %vm150, 1, 0
      %v407 = vsel %vm151, 1, 0
      %v408 = vsel %vm152, 1, 0
      %v409 = vsel %vm153, 1, 0
      %v410 = vsel %vm154, 1, 0
      %v411 = vsel %vm155, 1, 0
      %v412 = vsel %vm156, 1, 0
      %v413 = vsel %vm157, 1, 0
      %v414 = vsel %vm158, 1, 0
      %v415 = vsel %vm159, 1, 0
      %v416 = vsel %vm160, 1, 0
      %v417 = vsel %vm161, 1, 0
      %v418 = vsel %vm162, 1, 0
      %v419 = vsel %vm163, 1, 0
      %v420 = vsel %vm164, 1, 0
      %v421 = vsel %vm165, 1, 0
      %v422 = vsel %vm166, 1, 0
      %v423 = vsel %vm167, 1, 0
      %v424 = vsel %vm168, 1, 0
      %v425 = vsel %vm169, 1, 0
      %v426 = vsel %vm170, 1, 0
      %v427 = vsel %vm171, 1, 0
      %v428 = vsel %vm172, 1, 0
      %v429 = vsel %vm173, 1, 0
      %v430 = vsel %vm174, 1, 0
      %v431 = vsel %vm175, 1, 0
      %v432 = vsel %vm176, 1, 0
      %v433 = vsel %vm177, 1, 0
      %v434 = vsel %vm178, 1, 0
      %v435 = vsel %vm179, 1, 0
      %v436 = vsel %vm180, 1, 0
      %v437 = vsel %vm181, 1, 0
      %v438 = vsel %vm182, 1, 0
      %v439 = vsel %vm183, 1, 0
      %v440 = vsel %vm184, 1, 0
      %v441 = vsel %vm185, 1, 0
      %v442 = vsel %vm186, 1, 0
      %v443 = vsel %vm187, 1, 0
      %v444 = vsel %vm188, 1, 0
      %v445 = vsel %vm189, 1, 0
      %v446 = vsel %vm190, 1, 0
      %v447 = vsel %vm191, 1, 0
      %v448 = vsel %vm192, 1, 0
      %v449 = vsel %vm193, 1, 0
      %v450 = vsel %vm194, 1, 0
      %v451 = vsel %vm195, 1, 0
      %v452 = vsel %vm196, 1, 0
      %v453 = vsel %vm197, 1, 0
      %v454 = vsel %vm198, 1, 0
      %v455 = vsel %vm199, 1, 0
      %v456 = vsel %vm200, 1, 0
      %v457 = vsel %vm201, 1, 0
      %v458 = vsel %vm202, 1, 0
      %v459 = vsel %vm203, 1, 0
      %v460 = vsel %vm204, 1, 0
      %v461 = vsel %vm205, 1, 0
      %v462 = vsel %vm206, 1, 0
      %v463 = vsel %vm207, 1, 0
      %v464 = vsel %vm208, 1, 0
      %v465 = vsel %vm209, 1, 0
      %v466 = vsel %vm210, 1, 0
      %v467 = vsel %vm211, 1, 0
      %v468 = vsel %vm212, 1, 0
      %v469 = vsel %vm213, 1, 0
      %v470 = vsel %vm214, 1, 0
      %v471 = vsel %vm215, 1, 0
      %v472 = vsel %vm216, 1, 0
      %v473 = vsel %vm217, 1, 0
      %v474 = vsel %vm218, 1, 0
      %v475 = vsel %vm219, 1, 0
      %v476 = vsel %vm220, 1, 0
      %v477 = vsel %vm221, 1, 0
      %v478 = vsel %vm222, 1, 0
      %v479 = vsel %vm223, 1, 0
      %v480 = vsel %vm224, 1, 0
      %v481 = vsel %vm225, 1, 0
      %v482 = vsel %vm226, 1, 0
      %v483 = vsel %vm227, 1, 0
      %v484 = vsel %vm228, 1, 0
      %v485 = vsel %vm229, 1, 0
      %v486 = vsel %vm230, 1, 0
      %v487 = vsel %vm231, 1, 0
      %v488 = vsel %vm232, 1, 0
      %v489 = vsel %vm233, 1, 0
      %v490 = vsel %vm234, 1, 0
      %v491 = vsel %vm235, 1, 0
      %v492 = vsel %vm236, 1, 0
      %v493 = vsel %vm237, 1, 0
      %v494 = vsel %vm238, 1, 0
      %v495 = vsel %vm239, 1, 0
      %v496 = vsel %vm240, 1, 0
      %v497 = vsel %vm241, 1, 0
      %v498 = vsel %vm242, 1, 0
      %v499 = vsel %vm243, 1, 0
      %v500 = vsel %vm244, 1, 0
      %v501 = vsel %vm245, 1, 0
      %v502 = vsel %vm246, 1, 0
      %v503 = vsel %vm247, 1, 0
      %v504 = vsel %vm248, 1, 0
      %v505 = vsel %vm249, 1, 0
      %v506 = vsel %vm250, 1, 0
      %v507 = vsel %vm251, 1, 0
      %v508 = vsel %vm252, 1, 0
      %v509 = vsel %vm253, 1, 0
      %v510 = vsel %vm254, 1, 0
      %v511 = vsel %vm255, 1, 0
      %v512 = vsel %vm256, 1, 0
      %v513 = vsel %vm257, 1, 0
      %v514 = vsel %vm258, 1, 0
      %v515 = vsel %vm259, 1, 0
      %v516 = vsel %vm260, 1, 0
      %v517 = vsel %vm261, 1, 0
      %v518 = vsel %vm262, 1, 0
      %v519 = vsel %vm263, 1, 0
      %v520 = vsel %vm264, 1, 0
      %v521 = vsel %vm265, 1, 0
      %v522 = vsel %vm266, 1, 0
      %v523 = vsel %vm267, 1, 0
      %v524 = vsel %vm268, 1, 0
      %v525 = vsel %vm269, 1, 0
      %v526 = vsel %vm270, 1, 0
      %v527 = vsel %vm271, 1, 0
      %v528 = vsel %vm272, 1, 0
      %v529 = vsel %vm273, 1, 0
      %v530 = vsel %vm274, 1, 0
      %v531 = vsel %vm275, 1, 0
      %v532 = vsel %vm276, 1, 0
      %v533 = vsel %vm277, 1, 0
      %v534 = vsel %vm278, 1, 0
      %v535 = vsel %vm279, 1, 0
      %v536 = vsel %vm280, 1, 0
      %v537 = vsel %vm281, 1, 0
      %v538 = vsel %vm282, 1, 0
      %v539 = vsel %vm283, 1, 0
      %v540 = vsel %vm284, 1, 0
      %v541 = vsel %vm285, 1, 0
      %v542 = vsel %vm286, 1, 0
      %v543 = vsel %vm287, 1, 0
      %v544 = vsel %vm288, 1, 0
      %v545 = vsel %vm289, 1, 0
      %v546 = vsel %vm290, 1, 0
      %v547 = vsel %vm291, 1, 0
      %v548 = vsel %vm292, 1, 0
      %v549 = vsel %vm293, 1, 0
      %v550 = vsel %vm294, 1, 0
      %v551 = vsel %vm295, 1, 0
      %v552 = vsel %vm296, 1, 0
      %v553 = vsel %vm297, 1, 0
      %v554 = vsel %vm298, 1, 0
      %v555 = vsel %vm299, 1, 0
      %v556 = vsel %vm300, 1, 0
      %v557 = vsel %vm301, 1, 0
      %v558 = vsel %vm302, 1, 0
      %v559 = vsel %vm303, 1, 0
      %v560 = vsel %vm304, 1, 0
      %v561 = vsel %vm305, 1, 0
      %v562 = vsel %vm306, 1, 0
      %v563 = vsel %vm307, 1, 0
      %v564 = vsel %vm308, 1, 0
      %v565 = vsel %vm309, 1, 0
      %v566 = vsel %vm310, 1, 0
      %v567 = vsel %vm311, 1, 0
      %v568 = vsel %vm312, 1, 0
      %v569 = vsel %vm313, 1, 0
      %v570 = vsel %vm314, 1, 0
      %v571 = vsel %vm315, 1, 0
      %v572 = vsel %vm316, 1, 0
      %v573 = vsel %vm317, 1, 0
      %v574 = vsel %vm318, 1, 0
      %v575 = vsel %vm319, 1, 0
      %v576 = vsel %vm320, 1, 0
      %v577 = vsel %vm321, 1, 0
      %v578 = vsel %vm322, 1, 0
      %v579 = vsel %vm323, 1, 0
      %v580 = vsel %vm324, 1, 0
      %v581 = vsel %vm325, 1, 0
      %v582 = vsel %vm326, 1, 0
      %v583 = vsel %vm327, 1, 0
      %v584 = vsel %vm328, 1, 0
      %v585 = vsel %vm329, 1, 0
      %v586 = vsel %vm330, 1, 0
      %v587 = vsel %vm331, 1, 0
      %v588 = vsel %vm332, 1, 0
      %v589 = vsel %vm333, 1, 0
      %v590 = vsel %vm334, 1, 0
      %v591 = vsel %vm335, 1, 0
      %v592 = vsel %vm336, 1, 0
      %v593 = vsel %vm337, 1, 0
      %v594 = vsel %vm338, 1, 0
      %v595 = vsel %vm339, 1, 0
      %v596 = vsel %vm340, 1, 0
      %v597 = vsel %vm341, 1, 0
      %v598 = vsel %vm342, 1, 0
      %v599 = vsel %vm343, 1, 0
      %v600 = vsel %vm344, 1, 0
      %v601 = vcvt.s32.f32 %v345
      %v602 = vcvt.s32.f32 %v346
      %v603 = vcvt.s32.f32 %v347
      %v604 = vcvt.s32.f32 %v348
      %v605 = vcvt.s32.f32 %v349
      %v606 = vcvt.s32.f32 %v350
      %v607 = vcvt.s32.f32 %v351
      %v608 = vcvt.s32.f32 %v352
      %v609 = vcvt.s32.f32 %v353
      %v610 = vcvt.s32.f32 %v354
      %v611 = vcvt.s32.f32 %v355
      %v612 = vcvt.s32.f32 %v356
      %v613 = vcvt.s32.f32 %v357
      %v614 = vcvt.s32.f32 %v358
      %v615 = vcvt.s32.f32 %v359
      %v616 = vcvt.s32.f32 %v360
      %v617 = vcvt.s32.f32 %v361
      %v618 = vcvt.s32.f32 %v362
      %v619 = vcvt.s32.f32 %v363
      %v620 = vcvt.s32.f32 %v364
      %v621 = vcvt.s32.f32 %v365
      %v622 = vcvt.s32.f32 %v366
      %v623 = vcvt.s32.f32 %v367
      %v624 = vcvt.s32.f32 %v368
      %v625 = vcvt.s32.f32 %v369
      %v626 = vcvt.s32.f32 %v370
      %v627 = vcvt.s32.f32 %v371
      %v628 = vcvt.s32.f32 %v372
      %v629 = vcvt.s32.f32 %v373
      %v630 = vcvt.s32.f32 %v374
      %v631 = vcvt.s32.f32 %v375
      %v632 = vcvt.s32.f32 %v376
      %v633 = vcvt.s32.f32 %v377
      %v634 = vcvt.s32.f32 %v378
      %v635 = vcvt.s32.f32 %v379
      %v636 = vcvt.s32.f32 %v380
      %v637 = vcvt.s32.f32 %v381
      %v638 = vcvt.s32.f32 %v382
      %v639 = vcvt.s32.f32 %v383
      %v640 = vcvt.s32.f32 %v384
      %v641 = vcvt.s32.f32 %v385
      %v642 = vcvt.s32.f32 %v386
      %v643 = vcvt.s32.f32 %v387
      %v644 = vcvt.s32.f32 %v388
      %v645 = vcvt.s32.f32 %v389
      %v646 = vcvt.s32.f32 %v390
      %v647 = vcvt.s32.f32 %v391
      %v648 = vcvt.s32.f32 %v392
      %v649 = vcvt.s32.f32 %v393
      %v650 = vcvt.s32.f32 %v394
      %v651 = vcvt.s32.f32 %v395
      %v652 = vcvt.s32.f32 %v396
      %v653 = vcvt.s32.f32 %v397
      %v654 = vcvt.s32.f32 %v398
      %v655 = vcvt.s32.f32 %v399
      %v656 = vcvt.s32.f32 %v400
      %v657 = vcvt.s32.f32 %v401
      %v658 = vcvt.s32.f32 %v402
      %v659 = vcvt.s32.f32 %v403
      %v660 = vcvt.s32.f32 %v404
      %v661 = vcvt.s32.f32 %v405
      %v662 = vcvt.s32.f32 %v406
      %v663 = vcvt.s32.f32 %v407
      %v664 = vcvt.s32.f32 %v408
      %v665 = vcvt.s32.f32 %v409
      %v666 = vcvt.s32.f32 %v410
      %v667 = vcvt.s32.f32 %v411
      %v668 = vcvt.s32.f32 %v412
      %v669 = vcvt.s32.f32 %v413
      %v670 = vcvt.s32.f32 %v414
      %v671 = vcvt.s32.f32 %v415
      %v672 = vcvt.s32.f32 %v416
      %v673 = vcvt.s32.f32 %v417
      %v674 = vcvt.s32.f32 %v418
      %v675 = vcvt.s32.f32 %v419
      %v676 = vcvt.s32.f32 %v420
      %v677 = vcvt.s32.f32 %v421
      %v678 = vcvt.s32.f32 %v422
      %v679 = vcvt.s32.f32 %v423
      %v680 = vcvt.s32.f32 %v424
      %v681 = vcvt.s32.f32 %v425
      %v682 = vcvt.s32.f32 %v426
      %v683 = vcvt.s32.f32 %v427
      %v684 = vcvt.s32.f32 %v428
      %v685 = vcvt.s32.f32 %v429
      %v686 = vcvt.s32.f32 %v430
      %v687 = vcvt.s32.f32 %v431
      %v688 = vcvt.s32.f32 %v432
      %v689 = vcvt.s32.f32 %v433
      %v690 = vcvt.s32.f32 %v434
      %v691 = vcvt.s32.f32 %v435
      %v692 = vcvt.s32.f32 %v436
      %v693 = vcvt.s32.f32 %v437
      %v694 = vcvt.s32.f32 %v438
      %v695 = vcvt.s32.f32 %v439
      %v696 = vcvt.s32.f32 %v440
      %v697 = vcvt.s32.f32 %v441
      %v698 = vcvt.s32.f32 %v442
      %v699 = vcvt.s32.f32 %v443
      %v700 = vcvt.s32.f32 %v444
      %v701 = vcvt.s32.f32 %v445
      %v702 = vcvt.s32.f32 %v446
      %v703 = vcvt.s32.f32 %v447
      %v704 = vcvt.s32.f32 %v448
      %v705 = vcvt.s32.f32 %v449
      %v706 = vcvt.s32.f32 %v450
      %v707 = vcvt.s32.f32 %v451
      %v708 = vcvt.s32.f32 %v452
      %v709 = vcvt.s32.f32 %v453
      %v710 = vcvt.s32.f32 %v454
      %v711 = vcvt.s32.f32 %v455
      %v712 = vcvt.s32.f32 %v456
      %v713 = vcvt.s32.f32 %v457
      %v714 = vcvt.s32.f32 %v458
      %v715 = vcvt.s32.f32 %v459
      %v716 = vcvt.s32.f32 %v460
      %v717 = vcvt.s32.f32 %v461
      %v718 = vcvt.s32.f32 %v462
      %v719 = vcvt.s32.f32 %v463
      %v720 = vcvt.s32.f32 %v464
      %v721 = vcvt.s32.f32 %v465
      %v722 = vcvt.s32.f32 %v466
      %v723 = vcvt.s32.f32 %v467
      %v724 = vcvt.s32.f32 %v468
      %v725 = vcvt.s32.f32 %v469
      %v726 = vcvt.s32.f32 %v470
      %v727 = vcvt.s32.f32 %v471
      %v728 = vcvt.s32.f32 %v472
      %v729 = vcvt.s32.f32 %v473
      %v730 = vcvt.s32.f32 %v474
      %v731 = vcvt.s32.f32 %v475
      %v732 = vcvt.s32.f32 %v476
      %v733 = vcvt.s32.f32 %v477
      %v734 = vcvt.s32.f32 %v478
      %v735 = vcvt.s32.f32 %v479
      %v736 = vcvt.s32.f32 %v480
      %v737 = vcvt.s32.f32 %v481
      %v738 = vcvt.s32.f32 %v482
      %v739 = vcvt.s32.f32 %v483
      %v740 = vcvt.s32.f32 %v484
      %v741 = vcvt.s32.f32 %v485
      %v742 = vcvt.s32.f32 %v486
      %v743 = vcvt.s32.f32 %v487
      %v744 = vcvt.s32.f32 %v488
      %v745 = vcvt.s32.f32 %v489
      %v746 = vcvt.s32.f32 %v490
      %v747 = vcvt.s32.f32 %v491
      %v748 = vcvt.s32.f32 %v492
      %v749 = vcvt.s32.f32 %v493
      %v750 = vcvt.s32.f32 %v494
      %v751 = vcvt.s32.f32 %v495
      %v752 = vcvt.s32.f32 %v496
      %v753 = vcvt.s32.f32 %v497
      %v754 = vcvt.s32.f32 %v498
      %v755 = vcvt.s32.f32 %v499
      %v756 = vcvt.s32.f32 %v500
      %v757 = vcvt.s32.f32 %v501
      %v758 = vcvt.s32.f32 %v502
      %v759 = vcvt.s32.f32 %v503
      %v760 = vcvt.s32.f32 %v504
      %v761 = vcvt.s32.f32 %v505
      %v762 = vcvt.s32.f32 %v506
      %v763 = vcvt.s32.f32 %v507
      %v764 = vcvt.s32.f32 %v508
      %v765 = vcvt.s32.f32 %v509
      %v766 = vcvt.s32.f32 %v510
      %v767 = vcvt.s32.f32 %v511
      %v768 = vcvt.s32.f32 %v512
      %v769 = vcvt.s32.f32 %v513
      %v770 = vcvt.s32.f32 %v514
      %v771 = vcvt.s32.f32 %v515
      %v772 = vcvt.s32.f32 %v516
      %v773 = vcvt.s32.f32 %v517
      %v774 = vcvt.s32.f32 %v518
      %v775 = vcvt.s32.f32 %v519
      %v776 = vcvt.s32.f32 %v520
      %v777 = vcvt.s32.f32 %v521
      %v778 = vcvt.s32.f32 %v522
      %v779 = vcvt.s32.f32 %v523
      %v780 = vcvt.s32.f32 %v524
      %v781 = vcvt.s32.f32 %v525
      %v782 = vcvt.s32.f32 %v526
      %v783 = vcvt.s32.f32 %v527
      %v784 = vcvt.s32.f32 %v528
      %v785 = vcvt.s32.f32 %v529
      %v786 = vcvt.s32.f32 %v530
      %v787 = vcvt.s32.f32 %v531
      %v788 = vcvt.s32.f32 %v532
      %v789 = vcvt.s32.f32 %v533
      %v790 = vcvt.s32.f32 %v534
      %v791 = vcvt.s32.f32 %v535
      %v792 = vcvt.s32.f32 %v536
      %v793 = vcvt.s32.f32 %v537
      %v794 = vcvt.s32.f32 %v538
      %v795 = vcvt.s32.f32 %v539
      %v796 = vcvt.s32.f32 %v540
      %v797 = vcvt.s32.f32 %v541
      %v798 = vcvt.s32.f32 %v542
      %v799 = vcvt.s32.f32 %v543
      %v800 = vcvt.s32.f32 %v544
      %v801 = vcvt.s32.f32 %v545
      %v802 = vcvt.s32.f32 %v546
      %v803 = vcvt.s32.f32 %v547
      %v804 = vcvt.s32.f32 %v548
      %v805 = vcvt.s32.f32 %v549
      %v806 = vcvt.s32.f32 %v550
      %v807 = vcvt.s32.f32 %v551
      %v808 = vcvt.s32.f32 %v552
      %v809 = vcvt.s32.f32 %v553
      %v810 = vcvt.s32.f32 %v554
      %v811 = vcvt.s32.f32 %v555
      %v812 = vcvt.s32.f32 %v556
      %v813 = vcvt.s32.f32 %v557
      %v814 = vcvt.s32.f32 %v558
      %v815 = vcvt.s32.f32 %v559
      %v816 = vcvt.s32.f32 %v560
      %v817 = vcvt.s32.f32 %v561
      %v818 = vcvt.s32.f32 %v562
      %v819 = vcvt.s32.f32 %v563
      %v820 = vcvt.s32.f32 %v564
      %v821 = vcvt.s32.f32 %v565
      %v822 = vcvt.s32.f32 %v566
      %v823 = vcvt.s32.f32 %v567
      %v824 = vcvt.s32.f32 %v568
      %v825 = vcvt.s32.f32 %v569
      %v826 = vcvt.s32.f32 %v570
      %v827 = vcvt.s32.f32 %v571
      %v828 = vcvt.s32.f32 %v572
      %v829 = vcvt.s32.f32 %v573
      %v830 = vcvt.s32.f32 %v574
      %v831 = vcvt.s32.f32 %v575
      %v832 = vcvt.s32.f32 %v576
      %v833 = vcvt.s32.f32 %v577
      %v834 = vcvt.s32.f32 %v578
      %v835 = vcvt.s32.f32 %v579
      %v836 = vcvt.s32.f32 %v580
      %v837 = vcvt.s32.f32 %v581
      %v838 = vcvt.s32.f32 %v582
      %v839 = vcvt.s32.f32 %v583
      %v840 = vcvt.s32.f32 %v584
      %v841 = vcvt.s32.f32 %v585
      %v842 = vcvt.s32.f32 %v586
      %v843 = vcvt.s32.f32 %v587
      %v844 = vcvt.s32.f32 %v588
      %v845 = vcvt.s32.f32 %v589
      %v846 = vcvt.s32.f32 %v590
      %v847 = vcvt.s32.f32 %v591
      %v848 = vcvt.s32.f32 %v592
      %v849 = vcvt.s32.f32 %v593
      %v850 = vcvt.s32.f32 %v594
      %v851 = vcvt.s32.f32 %v595
      %v852 = vcvt.s32.f32 %v596
      %v853 = vcvt.s32.f32 %v597
      %v854 = vcvt.s32.f32 %v598
      %v855 = vcvt.s32.f32 %v599
      %v856 = vcvt.s32.f32 %v600
      %v857 = vpack.c.bf16 %v605, %v601
      %v858 = vpack.c.bf16 %v606, %v602
      %v859 = vpack.c.bf16 %v607, %v603
      %v860 = vpack.c.bf16 %v608, %v604
      %v861 = vpack.c.bf16 %v613, %v609
      %v862 = vpack.c.bf16 %v614, %v610
      %v863 = vpack.c.bf16 %v615, %v611
      %v864 = vpack.c.bf16 %v616, %v612
      %v865 = vpack.c.bf16 %v621, %v617
      %v866 = vpack.c.bf16 %v622, %v618
      %v867 = vpack.c.bf16 %v623, %v619
      %v868 = vpack.c.bf16 %v624, %v620
      %v869 = vpack.c.bf16 %v629, %v625
      %v870 = vpack.c.bf16 %v630, %v626
      %v871 = vpack.c.bf16 %v631, %v627
      %v872 = vpack.c.bf16 %v632, %v628
      %v873 = vpack.c.bf16 %v637, %v633
      %v874 = vpack.c.bf16 %v638, %v634
      %v875 = vpack.c.bf16 %v639, %v635
      %v876 = vpack.c.bf16 %v640, %v636
      %v877 = vpack.c.bf16 %v645, %v641
      %v878 = vpack.c.bf16 %v646, %v642
      %v879 = vpack.c.bf16 %v647, %v643
      %v880 = vpack.c.bf16 %v648, %v644
      %v881 = vpack.c.bf16 %v653, %v649
      %v882 = vpack.c.bf16 %v654, %v650
      %v883 = vpack.c.bf16 %v655, %v651
      %v884 = vpack.c.bf16 %v656, %v652
      %v885 = vpack.c.bf16 %v661, %v657
      %v886 = vpack.c.bf16 %v662, %v658
      %v887 = vpack.c.bf16 %v663, %v659
      %v888 = vpack.c.bf16 %v664, %v660
      %v889 = vpack.c.bf16 %v669, %v665
      %v890 = vpack.c.bf16 %v670, %v666
      %v891 = vpack.c.bf16 %v671, %v667
      %v892 = vpack.c.bf16 %v672, %v668
      %v893 = vpack.c.bf16 %v677, %v673
      %v894 = vpack.c.bf16 %v678, %v674
      %v895 = vpack.c.bf16 %v679, %v675
      %v896 = vpack.c.bf16 %v680, %v676
      %v897 = vpack.c.bf16 %v685, %v681
      %v898 = vpack.c.bf16 %v686, %v682
      %v899 = vpack.c.bf16 %v687, %v683
      %v900 = vpack.c.bf16 %v688, %v684
      %v901 = vpack.c.bf16 %v693, %v689
      %v902 = vpack.c.bf16 %v694, %v690
      %v903 = vpack.c.bf16 %v695, %v691
      %v904 = vpack.c.bf16 %v696, %v692
      %v905 = vpack.c.bf16 %v701, %v697
      %v906 = vpack.c.bf16 %v702, %v698
      %v907 = vpack.c.bf16 %v703, %v699
      %v908 = vpack.c.bf16 %v704, %v700
      %v909 = vpack.c.bf16 %v709, %v705
      %v910 = vpack.c.bf16 %v710, %v706
      %v911 = vpack.c.bf16 %v711, %v707
      %v912 = vpack.c.bf16 %v712, %v708
      %v913 = vpack.c.bf16 %v717, %v713
      %v914 = vpack.c.bf16 %v718, %v714
      %v915 = vpack.c.bf16 %v719, %v715
      %v916 = vpack.c.bf16 %v720, %v716
      %v917 = vpack.c.bf16 %v725, %v721
      %v918 = vpack.c.bf16 %v726, %v722
      %v919 = vpack.c.bf16 %v727, %v723
      %v920 = vpack.c.bf16 %v728, %v724
      %v921 = vpack.c.bf16 %v733, %v729
      %v922 = vpack.c.bf16 %v734, %v730
      %v923 = vpack.c.bf16 %v735, %v731
      %v924 = vpack.c.bf16 %v736, %v732
      %v925 = vpack.c.bf16 %v741, %v737
      %v926 = vpack.c.bf16 %v742, %v738
      %v927 = vpack.c.bf16 %v743, %v739
      %v928 = vpack.c.bf16 %v744, %v740
      %v929 = vpack.c.bf16 %v749, %v745
      %v930 = vpack.c.bf16 %v750, %v746
      %v931 = vpack.c.bf16 %v751, %v747
      %v932 = vpack.c.bf16 %v752, %v748
      %v933 = vpack.c.bf16 %v757, %v753
      %v934 = vpack.c.bf16 %v758, %v754
      %v935 = vpack.c.bf16 %v759, %v755
      %v936 = vpack.c.bf16 %v760, %v756
      %v937 = vpack.c.bf16 %v765, %v761
      %v938 = vpack.c.bf16 %v766, %v762
      %v939 = vpack.c.bf16 %v767, %v763
      %v940 = vpack.c.bf16 %v768, %v764
      %v941 = vpack.c.bf16 %v773, %v769
      %v942 = vpack.c.bf16 %v774, %v770
      %v943 = vpack.c.bf16 %v775, %v771
      %v944 = vpack.c.bf16 %v776, %v772
      %v945 = vpack.c.bf16 %v781, %v777
      %v946 = vpack.c.bf16 %v782, %v778
      %v947 = vpack.c.bf16 %v783, %v779
      %v948 = vpack.c.bf16 %v784, %v780
      %v949 = vpack.c.bf16 %v789, %v785
      %v950 = vpack.c.bf16 %v790, %v786
      %v951 = vpack.c.bf16 %v791, %v787
      %v952 = vpack.c.bf16 %v792, %v788
      %v953 = vpack.c.bf16 %v797, %v793
      %v954 = vpack.c.bf16 %v798, %v794
      %v955 = vpack.c.bf16 %v799, %v795
      %v956 = vpack.c.bf16 %v800, %v796
      %v957 = vpack.c.bf16 %v805, %v801
      %v958 = vpack.c.bf16 %v806, %v802
      %v959 = vpack.c.bf16 %v807, %v803
      %v960 = vpack.c.bf16 %v808, %v804
      %v961 = vpack.c.bf16 %v813, %v809
      %v962 = vpack.c.bf16 %v814, %v810
      %v963 = vpack.c.bf16 %v815, %v811
      %v964 = vpack.c.bf16 %v816, %v812
      %v965 = vpack.c.bf16 %v821, %v817
      %v966 = vpack.c.bf16 %v822, %v818
      %v967 = vpack.c.bf16 %v823, %v819
      %v968 = vpack.c.bf16 %v824, %v820
      %v969 = vpack.c.bf16 %v829, %v825
      %v970 = vpack.c.bf16 %v830, %v826
      %v971 = vpack.c.bf16 %v831, %v827
      %v972 = vpack.c.bf16 %v832, %v828
      %v973 = vpack.c.bf16 %v837, %v833
      %v974 = vpack.c.bf16 %v838, %v834
      %v975 = vpack.c.bf16 %v839, %v835
      %v976 = vpack.c.bf16 %v840, %v836
      %v977 = vpack.c.bf16 %v845, %v841
      %v978 = vpack.c.bf16 %v846, %v842
      %v979 = vpack.c.bf16 %v847, %v843
      %v980 = vpack.c.bf16 %v848, %v844
      %v981 = vpack.c.bf16 %v853, %v849
      %v982 = vpack.c.bf16 %v854, %v850
      %v983 = vpack.c.bf16 %v855, %v851
      %v984 = vpack.c.bf16 %v856, %v852
      %v1113 = vunpack.c.l.b16 %v857
      %v1114 = vunpack.c.l.b16 %v858
      %v1115 = vunpack.c.l.b16 %v859
      %v1116 = vunpack.c.l.b16 %v860
      %v1117 = vunpack.c.h.b16 %v857
      %v1118 = vunpack.c.h.b16 %v858
      %v1119 = vunpack.c.h.b16 %v859
      %v1120 = vunpack.c.h.b16 %v860
      %v1121 = vunpack.c.l.b16 %v861
      %v1122 = vunpack.c.l.b16 %v862
      %v1123 = vunpack.c.l.b16 %v863
      %v1124 = vunpack.c.l.b16 %v864
      %v1125 = vunpack.c.h.b16 %v861
      %v1126 = vunpack.c.h.b16 %v862
      %v1127 = vunpack.c.h.b16 %v863
      %v1128 = vunpack.c.h.b16 %v864
      %v1129 = vunpack.c.l.b16 %v865
      %v1130 = vunpack.c.l.b16 %v866
      %v1131 = vunpack.c.l.b16 %v867
      %v1132 = vunpack.c.l.b16 %v868
      %v1133 = vunpack.c.h.b16 %v865
      %v1134 = vunpack.c.h.b16 %v866
      %v1135 = vunpack.c.h.b16 %v867
      %v1136 = vunpack.c.h.b16 %v868
      %v1137 = vunpack.c.l.b16 %v869
      %v1138 = vunpack.c.l.b16 %v870
      %v1139 = vunpack.c.l.b16 %v871
      %v1140 = vunpack.c.l.b16 %v872
      %v1141 = vunpack.c.h.b16 %v869
      %v1142 = vunpack.c.h.b16 %v870
      %v1143 = vunpack.c.h.b16 %v871
      %v1144 = vunpack.c.h.b16 %v872
      %v1145 = vunpack.c.l.b16 %v873
      %v1146 = vunpack.c.l.b16 %v874
      %v1147 = vunpack.c.l.b16 %v875
      %v1148 = vunpack.c.l.b16 %v876
      %v1149 = vunpack.c.h.b16 %v873
      %v1150 = vunpack.c.h.b16 %v874
      %v1151 = vunpack.c.h.b16 %v875
      %v1152 = vunpack.c.h.b16 %v876
      %v1153 = vunpack.c.l.b16 %v877
      %v1154 = vunpack.c.l.b16 %v878
      %v1155 = vunpack.c.l.b16 %v879
      %v1156 = vunpack.c.l.b16 %v880
      %v1157 = vunpack.c.h.b16 %v877
      %v1158 = vunpack.c.h.b16 %v878
      %v1159 = vunpack.c.h.b16 %v879
      %v1160 = vunpack.c.h.b16 %v880
      %v1161 = vunpack.c.l.b16 %v881
      %v1162 = vunpack.c.l.b16 %v882
      %v1163 = vunpack.c.l.b16 %v883
      %v1164 = vunpack.c.l.b16 %v884
      %v1165 = vunpack.c.h.b16 %v881
      %v1166 = vunpack.c.h.b16 %v882
      %v1167 = vunpack.c.h.b16 %v883
      %v1168 = vunpack.c.h.b16 %v884
      %v1169 = vunpack.c.l.b16 %v885
      %v1170 = vunpack.c.l.b16 %v886
      %v1171 = vunpack.c.l.b16 %v887
      %v1172 = vunpack.c.l.b16 %v888
      %v1173 = vunpack.c.h.b16 %v885
      %v1174 = vunpack.c.h.b16 %v886
      %v1175 = vunpack.c.h.b16 %v887
      %v1176 = vunpack.c.h.b16 %v888
      %v1177 = vunpack.c.l.b16 %v889
      %v1178 = vunpack.c.l.b16 %v890
      %v1179 = vunpack.c.l.b16 %v891
      %v1180 = vunpack.c.l.b16 %v892
      %v1181 = vunpack.c.h.b16 %v889
      %v1182 = vunpack.c.h.b16 %v890
      %v1183 = vunpack.c.h.b16 %v891
      %v1184 = vunpack.c.h.b16 %v892
      %v1185 = vunpack.c.l.b16 %v893
      %v1186 = vunpack.c.l.b16 %v894
      %v1187 = vunpack.c.l.b16 %v895
      %v1188 = vunpack.c.l.b16 %v896
      %v1189 = vunpack.c.h.b16 %v893
      %v1190 = vunpack.c.h.b16 %v894
      %v1191 = vunpack.c.h.b16 %v895
      %v1192 = vunpack.c.h.b16 %v896
      %v1193 = vunpack.c.l.b16 %v897
      %v1194 = vunpack.c.l.b16 %v898
      %v1195 = vunpack.c.l.b16 %v899
      %v1196 = vunpack.c.l.b16 %v900
      %v1197 = vunpack.c.h.b16 %v897
      %v1198 = vunpack.c.h.b16 %v898
      %v1199 = vunpack.c.h.b16 %v899
      %v1200 = vunpack.c.h.b16 %v900
      %v1201 = vunpack.c.l.b16 %v901
      %v1202 = vunpack.c.l.b16 %v902
      %v1203 = vunpack.c.l.b16 %v903
      %v1204 = vunpack.c.l.b16 %v904
      %v1205 = vunpack.c.h.b16 %v901
      %v1206 = vunpack.c.h.b16 %v902
      %v1207 = vunpack.c.h.b16 %v903
      %v1208 = vunpack.c.h.b16 %v904
      %v1209 = vunpack.c.l.b16 %v905
      %v1210 = vunpack.c.l.b16 %v906
      %v1211 = vunpack.c.l.b16 %v907
      %v1212 = vunpack.c.l.b16 %v908
      %v1213 = vunpack.c.h.b16 %v905
      %v1214 = vunpack.c.h.b16 %v906
      %v1215 = vunpack.c.h.b16 %v907
      %v1216 = vunpack.c.h.b16 %v908
      %v1217 = vunpack.c.l.b16 %v909
      %v1218 = vunpack.c.l.b16 %v910
      %v1219 = vunpack.c.l.b16 %v911
      %v1220 = vunpack.c.l.b16 %v912
      %v1221 = vunpack.c.h.b16 %v909
      %v1222 = vunpack.c.h.b16 %v910
      %v1223 = vunpack.c.h.b16 %v911
      %v1224 = vunpack.c.h.b16 %v912
      %v1225 = vunpack.c.l.b16 %v913
      %v1226 = vunpack.c.l.b16 %v914
      %v1227 = vunpack.c.l.b16 %v915
      %v1228 = vunpack.c.l.b16 %v916
      %v1229 = vunpack.c.h.b16 %v913
      %v1230 = vunpack.c.h.b16 %v914
      %v1231 = vunpack.c.h.b16 %v915
      %v1232 = vunpack.c.h.b16 %v916
      %v1233 = vunpack.c.l.b16 %v917
      %v1234 = vunpack.c.l.b16 %v918
      %v1235 = vunpack.c.l.b16 %v919
      %v1236 = vunpack.c.l.b16 %v920
      %v1237 = vunpack.c.h.b16 %v917
      %v1238 = vunpack.c.h.b16 %v918
      %v1239 = vunpack.c.h.b16 %v919
      %v1240 = vunpack.c.h.b16 %v920
      %v1241 = vunpack.c.l.b16 %v921
      %v1242 = vunpack.c.l.b16 %v922
      %v1243 = vunpack.c.l.b16 %v923
      %v1244 = vunpack.c.l.b16 %v924
      %v1245 = vunpack.c.h.b16 %v921
      %v1246 = vunpack.c.h.b16 %v922
      %v1247 = vunpack.c.h.b16 %v923
      %v1248 = vunpack.c.h.b16 %v924
      %v1249 = vunpack.c.l.b16 %v925
      %v1250 = vunpack.c.l.b16 %v926
      %v1251 = vunpack.c.l.b16 %v927
      %v1252 = vunpack.c.l.b16 %v928
      %v1253 = vunpack.c.h.b16 %v925
      %v1254 = vunpack.c.h.b16 %v926
      %v1255 = vunpack.c.h.b16 %v927
      %v1256 = vunpack.c.h.b16 %v928
      %v1257 = vunpack.c.l.b16 %v929
      %v1258 = vunpack.c.l.b16 %v930
      %v1259 = vunpack.c.l.b16 %v931
      %v1260 = vunpack.c.l.b16 %v932
      %v1261 = vunpack.c.h.b16 %v929
      %v1262 = vunpack.c.h.b16 %v930
      %v1263 = vunpack.c.h.b16 %v931
      %v1264 = vunpack.c.h.b16 %v932
      %v1265 = vunpack.c.l.b16 %v933
      %v1266 = vunpack.c.l.b16 %v934
      %v1267 = vunpack.c.l.b16 %v935
      %v1268 = vunpack.c.l.b16 %v936
      %v1269 = vunpack.c.h.b16 %v933
      %v1270 = vunpack.c.h.b16 %v934
      %v1271 = vunpack.c.h.b16 %v935
      %v1272 = vunpack.c.h.b16 %v936
      %v1273 = vunpack.c.l.b16 %v937
      %v1274 = vunpack.c.l.b16 %v938
      %v1275 = vunpack.c.l.b16 %v939
      %v1276 = vunpack.c.l.b16 %v940
      %v1277 = vunpack.c.h.b16 %v937
      %v1278 = vunpack.c.h.b16 %v938
      %v1279 = vunpack.c.h.b16 %v939
      %v1280 = vunpack.c.h.b16 %v940
      %v1281 = vunpack.c.l.b16 %v941
      %v1282 = vunpack.c.l.b16 %v942
      %v1283 = vunpack.c.l.b16 %v943
      %v1284 = vunpack.c.l.b16 %v944
      %v1285 = vunpack.c.h.b16 %v941
      %v1286 = vunpack.c.h.b16 %v942
      %v1287 = vunpack.c.h.b16 %v943
      %v1288 = vunpack.c.h.b16 %v944
      %v1289 = vunpack.c.l.b16 %v945
      %v1290 = vunpack.c.l.b16 %v946
      %v1291 = vunpack.c.l.b16 %v947
      %v1292 = vunpack.c.l.b16 %v948
      %v1293 = vunpack.c.h.b16 %v945
      %v1294 = vunpack.c.h.b16 %v946
      %v1295 = vunpack.c.h.b16 %v947
      %v1296 = vunpack.c.h.b16 %v948
      %v1297 = vunpack.c.l.b16 %v949
      %v1298 = vunpack.c.l.b16 %v950
      %v1299 = vunpack.c.l.b16 %v951
      %v1300 = vunpack.c.l.b16 %v952
      %v1301 = vunpack.c.h.b16 %v949
      %v1302 = vunpack.c.h.b16 %v950
      %v1303 = vunpack.c.h.b16 %v951
      %v1304 = vunpack.c.h.b16 %v952
      %v1305 = vunpack.c.l.b16 %v953
      %v1306 = vunpack.c.l.b16 %v954
      %v1307 = vunpack.c.l.b16 %v955
      %v1308 = vunpack.c.l.b16 %v956
      %v1309 = vunpack.c.h.b16 %v953
      %v1310 = vunpack.c.h.b16 %v954
      %v1311 = vunpack.c.h.b16 %v955
      %v1312 = vunpack.c.h.b16 %v956
      %v1313 = vunpack.c.l.b16 %v957
      %v1314 = vunpack.c.l.b16 %v958
      %v1315 = vunpack.c.l.b16 %v959
      %v1316 = vunpack.c.l.b16 %v960
      %v1317 = vunpack.c.h.b16 %v957
      %v1318 = vunpack.c.h.b16 %v958
      %v1319 = vunpack.c.h.b16 %v959
      %v1320 = vunpack.c.h.b16 %v960
      %v1321 = vunpack.c.l.b16 %v961
      %v1322 = vunpack.c.l.b16 %v962
      %v1323 = vunpack.c.l.b16 %v963
      %v1324 = vunpack.c.l.b16 %v964
      %v1325 = vunpack.c.h.b16 %v961
      %v1326 = vunpack.c.h.b16 %v962
      %v1327 = vunpack.c.h.b16 %v963
      %v1328 = vunpack.c.h.b16 %v964
      %v1329 = vunpack.c.l.b16 %v965
      %v1330 = vunpack.c.l.b16 %v966
      %v1331 = vunpack.c.l.b16 %v967
      %v1332 = vunpack.c.l.b16 %v968
      %v1333 = vunpack.c.h.b16 %v965
      %v1334 = vunpack.c.h.b16 %v966
      %v1335 = vunpack.c.h.b16 %v967
      %v1336 = vunpack.c.h.b16 %v968
      %v1337 = vunpack.c.l.b16 %v969
      %v1338 = vunpack.c.l.b16 %v970
      %v1339 = vunpack.c.l.b16 %v971
      %v1340 = vunpack.c.l.b16 %v972
      %v1341 = vunpack.c.h.b16 %v969
      %v1342 = vunpack.c.h.b16 %v970
      %v1343 = vunpack.c.h.b16 %v971
      %v1344 = vunpack.c.h.b16 %v972
      %v1345 = vunpack.c.l.b16 %v973
      %v1346 = vunpack.c.l.b16 %v974
      %v1347 = vunpack.c.l.b16 %v975
      %v1348 = vunpack.c.l.b16 %v976
      %v1349 = vunpack.c.h.b16 %v973
      %v1350 = vunpack.c.h.b16 %v974
      %v1351 = vunpack.c.h.b16 %v975
      %v1352 = vunpack.c.h.b16 %v976
      %v1353 = vunpack.c.l.b16 %v977
      %v1354 = vunpack.c.l.b16 %v978
      %v1355 = vunpack.c.l.b16 %v979
      %v1356 = vunpack.c.l.b16 %v980
      %v1357 = vunpack.c.h.b16 %v977
      %v1358 = vunpack.c.h.b16 %v978
      %v1359 = vunpack.c.h.b16 %v979
      %v1360 = vunpack.c.h.b16 %v980
      %v1361 = vunpack.c.l.b16 %v981
      %v1362 = vunpack.c.l.b16 %v982
      %v1363 = vunpack.c.l.b16 %v983
      %v1364 = vunpack.c.l.b16 %v984
      %v1365 = vunpack.c.h.b16 %v981
      %v1366 = vunpack.c.h.b16 %v982
      %v1367 = vunpack.c.h.b16 %v983
      %v1368 = vunpack.c.h.b16 %v984
      %v1369 = vpack.c.b16 %v1114, %v1113
      %v1370 = vpack.c.b16 %v1116, %v1115
      %v1371 = vpack.c.b16 %v1118, %v1117
      %v1372 = vpack.c.b16 %v1120, %v1119
      %v1373 = vpack.c.b16 %v1122, %v1121
      %v1374 = vpack.c.b16 %v1124, %v1123
      %v1375 = vpack.c.b16 %v1126, %v1125
      %v1376 = vpack.c.b16 %v1128, %v1127
      %v1377 = vpack.c.b16 %v1130, %v1129
      %v1378 = vpack.c.b16 %v1132, %v1131
      %v1379 = vpack.c.b16 %v1134, %v1133
      %v1380 = vpack.c.b16 %v1136, %v1135
      %v1381 = vpack.c.b16 %v1138, %v1137
      %v1382 = vpack.c.b16 %v1140, %v1139
      %v1383 = vpack.c.b16 %v1142, %v1141
      %v1384 = vpack.c.b16 %v1144, %v1143
      %v1385 = vpack.c.b16 %v1146, %v1145
      %v1386 = vpack.c.b16 %v1148, %v1147
      %v1387 = vpack.c.b16 %v1150, %v1149
      %v1388 = vpack.c.b16 %v1152, %v1151
      %v1389 = vpack.c.b16 %v1154, %v1153
      %v1390 = vpack.c.b16 %v1156, %v1155
      %v1391 = vpack.c.b16 %v1158, %v1157
      %v1392 = vpack.c.b16 %v1160, %v1159
      %v1393 = vpack.c.b16 %v1162, %v1161
      %v1394 = vpack.c.b16 %v1164, %v1163
      %v1395 = vpack.c.b16 %v1166, %v1165
      %v1396 = vpack.c.b16 %v1168, %v1167
      %v1397 = vpack.c.b16 %v1170, %v1169
      %v1398 = vpack.c.b16 %v1172, %v1171
      %v1399 = vpack.c.b16 %v1174, %v1173
      %v1400 = vpack.c.b16 %v1176, %v1175
      %v1401 = vpack.c.b16 %v1178, %v1177
      %v1402 = vpack.c.b16 %v1180, %v1179
      %v1403 = vpack.c.b16 %v1182, %v1181
      %v1404 = vpack.c.b16 %v1184, %v1183
      %v1405 = vpack.c.b16 %v1186, %v1185
      %v1406 = vpack.c.b16 %v1188, %v1187
      %v1407 = vpack.c.b16 %v1190, %v1189
      %v1408 = vpack.c.b16 %v1192, %v1191
      %v1409 = vpack.c.b16 %v1194, %v1193
      %v1410 = vpack.c.b16 %v1196, %v1195
      %v1411 = vpack.c.b16 %v1198, %v1197
      %v1412 = vpack.c.b16 %v1200, %v1199
      %v1413 = vpack.c.b16 %v1202, %v1201
      %v1414 = vpack.c.b16 %v1204, %v1203
      %v1415 = vpack.c.b16 %v1206, %v1205
      %v1416 = vpack.c.b16 %v1208, %v1207
      %v1417 = vpack.c.b16 %v1210, %v1209
      %v1418 = vpack.c.b16 %v1212, %v1211
      %v1419 = vpack.c.b16 %v1214, %v1213
      %v1420 = vpack.c.b16 %v1216, %v1215
      %v1421 = vpack.c.b16 %v1218, %v1217
      %v1422 = vpack.c.b16 %v1220, %v1219
      %v1423 = vpack.c.b16 %v1222, %v1221
      %v1424 = vpack.c.b16 %v1224, %v1223
      %v1425 = vpack.c.b16 %v1226, %v1225
      %v1426 = vpack.c.b16 %v1228, %v1227
      %v1427 = vpack.c.b16 %v1230, %v1229
      %v1428 = vpack.c.b16 %v1232, %v1231
      %v1429 = vpack.c.b16 %v1234, %v1233
      %v1430 = vpack.c.b16 %v1236, %v1235
      %v1431 = vpack.c.b16 %v1238, %v1237
      %v1432 = vpack.c.b16 %v1240, %v1239
      %v1433 = vpack.c.b16 %v1242, %v1241
      %v1434 = vpack.c.b16 %v1244, %v1243
      %v1435 = vpack.c.b16 %v1246, %v1245
      %v1436 = vpack.c.b16 %v1248, %v1247
      %v1437 = vpack.c.b16 %v1250, %v1249
      %v1438 = vpack.c.b16 %v1252, %v1251
      %v1439 = vpack.c.b16 %v1254, %v1253
      %v1440 = vpack.c.b16 %v1256, %v1255
      %v1441 = vpack.c.b16 %v1258, %v1257
      %v1442 = vpack.c.b16 %v1260, %v1259
      %v1443 = vpack.c.b16 %v1262, %v1261
      %v1444 = vpack.c.b16 %v1264, %v1263
      %v1445 = vpack.c.b16 %v1266, %v1265
      %v1446 = vpack.c.b16 %v1268, %v1267
      %v1447 = vpack.c.b16 %v1270, %v1269
      %v1448 = vpack.c.b16 %v1272, %v1271
      %v1449 = vpack.c.b16 %v1274, %v1273
      %v1450 = vpack.c.b16 %v1276, %v1275
      %v1451 = vpack.c.b16 %v1278, %v1277
      %v1452 = vpack.c.b16 %v1280, %v1279
      %v1453 = vpack.c.b16 %v1282, %v1281
      %v1454 = vpack.c.b16 %v1284, %v1283
      %v1455 = vpack.c.b16 %v1286, %v1285
      %v1456 = vpack.c.b16 %v1288, %v1287
      %v1457 = vpack.c.b16 %v1290, %v1289
      %v1458 = vpack.c.b16 %v1292, %v1291
      %v1459 = vpack.c.b16 %v1294, %v1293
      %v1460 = vpack.c.b16 %v1296, %v1295
      %v1461 = vpack.c.b16 %v1298, %v1297
      %v1462 = vpack.c.b16 %v1300, %v1299
      %v1463 = vpack.c.b16 %v1302, %v1301
      %v1464 = vpack.c.b16 %v1304, %v1303
      %v1465 = vpack.c.b16 %v1306, %v1305
      %v1466 = vpack.c.b16 %v1308, %v1307
      %v1467 = vpack.c.b16 %v1310, %v1309
      %v1468 = vpack.c.b16 %v1312, %v1311
      %v1469 = vpack.c.b16 %v1314, %v1313
      %v1470 = vpack.c.b16 %v1316, %v1315
      %v1471 = vpack.c.b16 %v1318, %v1317
      %v1472 = vpack.c.b16 %v1320, %v1319
      %v1473 = vpack.c.b16 %v1322, %v1321
      %v1474 = vpack.c.b16 %v1324, %v1323
      %v1475 = vpack.c.b16 %v1326, %v1325
      %v1476 = vpack.c.b16 %v1328, %v1327
      %v1477 = vpack.c.b16 %v1330, %v1329
      %v1478 = vpack.c.b16 %v1332, %v1331
      %v1479 = vpack.c.b16 %v1334, %v1333
      %v1480 = vpack.c.b16 %v1336, %v1335
      %v1481 = vpack.c.b16 %v1338, %v1337
      %v1482 = vpack.c.b16 %v1340, %v1339
      %v1483 = vpack.c.b16 %v1342, %v1341
      %v1484 = vpack.c.b16 %v1344, %v1343
      %v1485 = vpack.c.b16 %v1346, %v1345
      %v1486 = vpack.c.b16 %v1348, %v1347
      %v1487 = vpack.c.b16 %v1350, %v1349
      %v1488 = vpack.c.b16 %v1352, %v1351
      %v1489 = vpack.c.b16 %v1354, %v1353
      %v1490 = vpack.c.b16 %v1356, %v1355
      %v1491 = vpack.c.b16 %v1358, %v1357
      %v1492 = vpack.c.b16 %v1360, %v1359
      %v1493 = vpack.c.b16 %v1362, %v1361
      %v1494 = vpack.c.b16 %v1364, %v1363
      %v1495 = vpack.c.b16 %v1366, %v1365
      %v1496 = vpack.c.b16 %v1368, %v1367
      %1625 = vst [vmem:[#allocation2] sm:$0xff] %v1369
      %1626 = vst [vmem:[#allocation2 + $0x8] sm:$0xff] %v1370
      %1627 = vst [vmem:[#allocation2 + $0x10] sm:$0xff] %v1371
      %1628 = vst [vmem:[#allocation2 + $0x18] sm:$0xff] %v1372
      %1629 = vst [vmem:[#allocation2 + $0x20] sm:$0xff] %v1373
      %1630 = vst [vmem:[#allocation2 + $0x28] sm:$0xff] %v1374
      %1631 = vst [vmem:[#allocation2 + $0x30] sm:$0xff] %v1375
      %1632 = vst [vmem:[#allocation2 + $0x38] sm:$0xff] %v1376
      %1633 = vst [vmem:[#allocation2 + $0x40] sm:$0xff] %v1377
      %1634 = vst [vmem:[#allocation2 + $0x48] sm:$0xff] %v1378
      %1635 = vst [vmem:[#allocation2 + $0x50] sm:$0xff] %v1379
      %1636 = vst [vmem:[#allocation2 + $0x58] sm:$0xff] %v1380
      %1637 = vst [vmem:[#allocation2 + $0x60] sm:$0xff] %v1381
      %1638 = vst [vmem:[#allocation2 + $0x68] sm:$0xff] %v1382
      %1639 = vst [vmem:[#allocation2 + $0x70] sm:$0xff] %v1383
      %1640 = vst [vmem:[#allocation2 + $0x78] sm:$0xff] %v1384
      %1641 = vst [vmem:[#allocation2 + $0x80] sm:$0xff] %v1385
      %1642 = vst [vmem:[#allocation2 + $0x88] sm:$0xff] %v1386
      %1643 = vst [vmem:[#allocation2 + $0x90] sm:$0xff] %v1387
      %1644 = vst [vmem:[#allocation2 + $0x98] sm:$0xff] %v1388
      %1645 = vst [vmem:[#allocation2 + $0xa0] sm:$0xff] %v1389
      %1646 = vst [vmem:[#allocation2 + $0xa8] sm:$0xff] %v1390
      %1647 = vst [vmem:[#allocation2 + $0xb0] sm:$0xff] %v1391
      %1648 = vst [vmem:[#allocation2 + $0xb8] sm:$0xff] %v1392
      %1649 = vst [vmem:[#allocation2 + $0xc0] sm:$0xff] %v1393
      %1650 = vst [vmem:[#allocation2 + $0xc8] sm:$0xff] %v1394
      %1651 = vst [vmem:[#allocation2 + $0xd0] sm:$0xff] %v1395
      %1652 = vst [vmem:[#allocation2 + $0xd8] sm:$0xff] %v1396
      %1653 = vst [vmem:[#allocation2 + $0xe0] sm:$0xff] %v1397
      %1654 = vst [vmem:[#allocation2 + $0xe8] sm:$0xff] %v1398
      %1655 = vst [vmem:[#allocation2 + $0xf0] sm:$0xff] %v1399
      %1656 = vst [vmem:[#allocation2 + $0xf8] sm:$0xff] %v1400
      %1657 = vst [vmem:[#allocation2 + $0x100] sm:$0xff] %v1401
      %1658 = vst [vmem:[#allocation2 + $0x108] sm:$0xff] %v1402
      %1659 = vst [vmem:[#allocation2 + $0x110] sm:$0xff] %v1403
      %1660 = vst [vmem:[#allocation2 + $0x118] sm:$0xff] %v1404
      %1661 = vst [vmem:[#allocation2 + $0x120] sm:$0xff] %v1405
      %1662 = vst [vmem:[#allocation2 + $0x128] sm:$0xff] %v1406
      %1663 = vst [vmem:[#allocation2 + $0x130] sm:$0xff] %v1407
      %1664 = vst [vmem:[#allocation2 + $0x138] sm:$0xff] %v1408
      %1665 = vst [vmem:[#allocation2 + $0x140] sm:$0xff] %v1409
      %1666 = vst [vmem:[#allocation2 + $0x148] sm:$0xff] %v1410
      %1667 = vst [vmem:[#allocation2 + $0x150] sm:$0xff] %v1411
      %1668 = vst [vmem:[#allocation2 + $0x158] sm:$0xff] %v1412
      %1669 = vst [vmem:[#allocation2 + $0x160] sm:$0xff] %v1413
      %1670 = vst [vmem:[#allocation2 + $0x168] sm:$0xff] %v1414
      %1671 = vst [vmem:[#allocation2 + $0x170] sm:$0xff] %v1415
      %1672 = vst [vmem:[#allocation2 + $0x178] sm:$0xff] %v1416
      %1673 = vst [vmem:[#allocation2 + $0x180] sm:$0xff] %v1417
      %1674 = vst [vmem:[#allocation2 + $0x188] sm:$0xff] %v1418
      %1675 = vst [vmem:[#allocation2 + $0x190] sm:$0xff] %v1419
      %1676 = vst [vmem:[#allocation2 + $0x198] sm:$0xff] %v1420
      %1677 = vst [vmem:[#allocation2 + $0x1a0] sm:$0xff] %v1421
      %1678 = vst [vmem:[#allocation2 + $0x1a8] sm:$0xff] %v1422
      %1679 = vst [vmem:[#allocation2 + $0x1b0] sm:$0xff] %v1423
      %1680 = vst [vmem:[#allocation2 + $0x1b8] sm:$0xff] %v1424
      %1681 = vst [vmem:[#allocation2 + $0x1c0] sm:$0xff] %v1425
      %1682 = vst [vmem:[#allocation2 + $0x1c8] sm:$0xff] %v1426
      %1683 = vst [vmem:[#allocation2 + $0x1d0] sm:$0xff] %v1427
      %1684 = vst [vmem:[#allocation2 + $0x1d8] sm:$0xff] %v1428
      %1685 = vst [vmem:[#allocation2 + $0x1e0] sm:$0xff] %v1429
      %1686 = vst [vmem:[#allocation2 + $0x1e8] sm:$0xff] %v1430
      %1687 = vst [vmem:[#allocation2 + $0x1f0] sm:$0xff] %v1431
      %1688 = vst [vmem:[#allocation2 + $0x1f8] sm:$0xff] %v1432
      %1689 = vst [vmem:[#allocation2 + $0x200] sm:$0xff] %v1433
      %1690 = vst [vmem:[#allocation2 + $0x208] sm:$0xff] %v1434
      %1691 = vst [vmem:[#allocation2 + $0x210] sm:$0xff] %v1435
      %1692 = vst [vmem:[#allocation2 + $0x218] sm:$0xff] %v1436
      %1693 = vst [vmem:[#allocation2 + $0x220] sm:$0xff] %v1437
      %1694 = vst [vmem:[#allocation2 + $0x228] sm:$0xff] %v1438
      %1695 = vst [vmem:[#allocation2 + $0x230] sm:$0xff] %v1439
      %1696 = vst [vmem:[#allocation2 + $0x238] sm:$0xff] %v1440
      %1697 = vst [vmem:[#allocation2 + $0x240] sm:$0xff] %v1441
      %1698 = vst [vmem:[#allocation2 + $0x248] sm:$0xff] %v1442
      %1699 = vst [vmem:[#allocation2 + $0x250] sm:$0xff] %v1443
      %1700 = vst [vmem:[#allocation2 + $0x258] sm:$0xff] %v1444
      %1701 = vst [vmem:[#allocation2 + $0x260] sm:$0xff] %v1445
      %1702 = vst [vmem:[#allocation2 + $0x268] sm:$0xff] %v1446
      %1703 = vst [vmem:[#allocation2 + $0x270] sm:$0xff] %v1447
      %1704 = vst [vmem:[#allocation2 + $0x278] sm:$0xff] %v1448
      %1705 = vst [vmem:[#allocation2 + $0x280] sm:$0xff] %v1449
      %1706 = vst [vmem:[#allocation2 + $0x288] sm:$0xff] %v1450
      %1707 = vst [vmem:[#allocation2 + $0x290] sm:$0xff] %v1451
      %1708 = vst [vmem:[#allocation2 + $0x298] sm:$0xff] %v1452
      %1709 = vst [vmem:[#allocation2 + $0x2a0] sm:$0xff] %v1453
      %1710 = vst [vmem:[#allocation2 + $0x2a8] sm:$0xff] %v1454
      %1711 = vst [vmem:[#allocation2 + $0x2b0] sm:$0xff] %v1455
      %1712 = vst [vmem:[#allocation2 + $0x2b8] sm:$0xff] %v1456
      %1713 = vst [vmem:[#allocation2 + $0x2c0] sm:$0xff] %v1457
      %1714 = vst [vmem:[#allocation2 + $0x2c8] sm:$0xff] %v1458
      %1715 = vst [vmem:[#allocation2 + $0x2d0] sm:$0xff] %v1459
      %1716 = vst [vmem:[#allocation2 + $0x2d8] sm:$0xff] %v1460
      %1717 = vst [vmem:[#allocation2 + $0x2e0] sm:$0xff] %v1461
      %1718 = vst [vmem:[#allocation2 + $0x2e8] sm:$0xff] %v1462
      %1719 = vst [vmem:[#allocation2 + $0x2f0] sm:$0xff] %v1463
      %1720 = vst [vmem:[#allocation2 + $0x2f8] sm:$0xff] %v1464
      %1721 = vst [vmem:[#allocation2 + $0x300] sm:$0xff] %v1465
      %1722 = vst [vmem:[#allocation2 + $0x308] sm:$0xff] %v1466
      %1723 = vst [vmem:[#allocation2 + $0x310] sm:$0xff] %v1467
      %1724 = vst [vmem:[#allocation2 + $0x318] sm:$0xff] %v1468
      %1725 = vst [vmem:[#allocation2 + $0x320] sm:$0xff] %v1469
      %1726 = vst [vmem:[#allocation2 + $0x328] sm:$0xff] %v1470
      %1727 = vst [vmem:[#allocation2 + $0x330] sm:$0xff] %v1471
      %1728 = vst [vmem:[#allocation2 + $0x338] sm:$0xff] %v1472
      %1729 = vst [vmem:[#allocation2 + $0x340] sm:$0xff] %v1473
      %1730 = vst [vmem:[#allocation2 + $0x348] sm:$0xff] %v1474
      %1731 = vst [vmem:[#allocation2 + $0x350] sm:$0xff] %v1475
      %1732 = vst [vmem:[#allocation2 + $0x358] sm:$0xff] %v1476
      %1733 = vst [vmem:[#allocation2 + $0x360] sm:$0xff] %v1477
      %1734 = vst [vmem:[#allocation2 + $0x368] sm:$0xff] %v1478
      %1735 = vst [vmem:[#allocation2 + $0x370] sm:$0xff] %v1479
      %1736 = vst [vmem:[#allocation2 + $0x378] sm:$0xff] %v1480
      %1737 = vst [vmem:[#allocation2 + $0x380] sm:$0xff] %v1481
      %1738 = vst [vmem:[#allocation2 + $0x388] sm:$0xff] %v1482
      %1739 = vst [vmem:[#allocation2 + $0x390] sm:$0xff] %v1483
      %1740 = vst [vmem:[#allocation2 + $0x398] sm:$0xff] %v1484
      %1741 = vst [vmem:[#allocation2 + $0x3a0] sm:$0xff] %v1485
      %1742 = vst [vmem:[#allocation2 + $0x3a8] sm:$0xff] %v1486
      %1743 = vst [vmem:[#allocation2 + $0x3b0] sm:$0xff] %v1487
      %1744 = vst [vmem:[#allocation2 + $0x3b8] sm:$0xff] %v1488
      %1745 = vst [vmem:[#allocation2 + $0x3c0] sm:$0xff] %v1489
      %1746 = vst [vmem:[#allocation2 + $0x3c8] sm:$0xff] %v1490
      %1747 = vst [vmem:[#allocation2 + $0x3d0] sm:$0xff] %v1491
      %1748 = vst [vmem:[#allocation2 + $0x3d8] sm:$0xff] %v1492
      %1749 = vst [vmem:[#allocation2 + $0x3e0] sm:$0xff] %v1493
      %1750 = vst [vmem:[#allocation2 + $0x3e8] sm:$0xff] %v1494
      %1751 = vst [vmem:[#allocation2 + $0x3f0] sm:$0xff] %v1495
      %1752 = vst [vmem:[#allocation2 + $0x3f8] sm:$0xff] %v1496
      %vm1753 = vcmask 3072
      %1754 = vst.msk [vmem:[#allocation3] sm:$0xf] %vm1753, 0.0
      %1755 = vst.msk [vmem:[#allocation4] sm:$0xf] %vm1753, 0.0
    $region17: #{mix_lovasz_cross_entropy.3} parent=1 // pred_fallthru
      _
    %v1756 = vld [vmem:[%s0] sm:$0xff]
    %v1757 = vld [vmem:[%s0 + $0x8] sm:$0xff]
    %v1758 = vsub.f32 0.0, %v1756
    %v1759 = vsub.f32 0.0, %v1757
    %v1760 = vld [vmem:[%s1] sm:$0xff]
    %v1761 = vunpack.c.l.bf16 %v1760
    %v1762 = vunpack.c.h.bf16 %v1760
    %v1763 = vld [vmem:[%s2] sm:$0xf]
    %v1764 = vld [vmem:[#allocation2] sm:$0xff]
    %v1765 = vld [vmem:[#allocation2 + $0x8] sm:$0xff]
    %v1766 = vld [vmem:[#allocation2 + $0x10] sm:$0xff]
    %v1767 = vld [vmem:[#allocation2 + $0x18] sm:$0xff]
    %v1768 = vld [vmem:[#allocation2 + $0x20] sm:$0xff]
    %v1769 = vld [vmem:[#allocation2 + $0x28] sm:$0xff]
    %v1770 = vld [vmem:[#allocation2 + $0x30] sm:$0xff]
    %v1771 = vld [vmem:[#allocation2 + $0x38] sm:$0xff]
    %v1772 = vld [vmem:[#allocation2 + $0x40] sm:$0xff]
    %v1773 = vld [vmem:[#allocation2 + $0x48] sm:$0xff]
    %v1774 = vld [vmem:[#allocation2 + $0x50] sm:$0xff]
    %v1775 = vld [vmem:[#allocation2 + $0x58] sm:$0xff]
    %v1776 = vld [vmem:[#allocation2 + $0x60] sm:$0xff]
    %v1777 = vld [vmem:[#allocation2 + $0x68] sm:$0xff]
    %v1778 = vld [vmem:[#allocation2 + $0x70] sm:$0xff]
    %v1779 = vld [vmem:[#allocation2 + $0x78] sm:$0xff]
    %v1780 = vld [vmem:[#allocation2 + $0x80] sm:$0xff]
    %v1781 = vld [vmem:[#allocation2 + $0x88] sm:$0xff]
    %v1782 = vld [vmem:[#allocation2 + $0x90] sm:$0xff]
    %v1783 = vld [vmem:[#allocation2 + $0x98] sm:$0xff]
    %v1784 = vld [vmem:[#allocation2 + $0xa0] sm:$0xff]
    %v1785 = vld [vmem:[#allocation2 + $0xa8] sm:$0xff]
    %v1786 = vld [vmem:[#allocation2 + $0xb0] sm:$0xff]
    %v1787 = vld [vmem:[#allocation2 + $0xb8] sm:$0xff]
    %v1788 = vld [vmem:[#allocation2 + $0xc0] sm:$0xff]
    %v1789 = vld [vmem:[#allocation2 + $0xc8] sm:$0xff]
    %v1790 = vld [vmem:[#allocation2 + $0xd0] sm:$0xff]
    %v1791 = vld [vmem:[#allocation2 + $0xd8] sm:$0xff]
    %v1792 = vld [vmem:[#allocation2 + $0xe0] sm:$0xff]
    %v1793 = vld [vmem:[#allocation2 + $0xe8] sm:$0xff]
    %v1794 = vld [vmem:[#allocation2 + $0xf0] sm:$0xff]
    %v1795 = vld [vmem:[#allocation2 + $0xf8] sm:$0xff]
    %v1796 = vld [vmem:[#allocation2 + $0x100] sm:$0xff]
    %v1797 = vld [vmem:[#allocation2 + $0x108] sm:$0xff]
    %v1798 = vld [vmem:[#allocation2 + $0x110] sm:$0xff]
    %v1799 = vld [vmem:[#allocation2 + $0x118] sm:$0xff]
    %v1800 = vld [vmem:[#allocation2 + $0x120] sm:$0xff]
    %v1801 = vld [vmem:[#allocation2 + $0x128] sm:$0xff]
    %v1802 = vld [vmem:[#allocation2 + $0x130] sm:$0xff]
    %v1803 = vld [vmem:[#allocation2 + $0x138] sm:$0xff]
    %v1804 = vld [vmem:[#allocation2 + $0x140] sm:$0xff]
    %v1805 = vld [vmem:[#allocation2 + $0x148] sm:$0xff]
    %v1806 = vld [vmem:[#allocation2 + $0x150] sm:$0xff]
    %v1807 = vld [vmem:[#allocation2 + $0x158] sm:$0xff]
    %v1808 = vld [vmem:[#allocation2 + $0x160] sm:$0xff]
    %v1809 = vld [vmem:[#allocation2 + $0x168] sm:$0xff]
    %v1810 = vld [vmem:[#allocation2 + $0x170] sm:$0xff]
    %v1811 = vld [vmem:[#allocation2 + $0x178] sm:$0xff]
    %v1812 = vld [vmem:[#allocation2 + $0x180] sm:$0xff]
    %v1813 = vld [vmem:[#allocation2 + $0x188] sm:$0xff]
    %v1814 = vld [vmem:[#allocation2 + $0x190] sm:$0xff]
    %v1815 = vld [vmem:[#allocation2 + $0x198] sm:$0xff]
    %v1816 = vld [vmem:[#allocation2 + $0x1a0] sm:$0xff]
    %v1817 = vld [vmem:[#allocation2 + $0x1a8] sm:$0xff]
    %v1818 = vld [vmem:[#allocation2 + $0x1b0] sm:$0xff]
    %v1819 = vld [vmem:[#allocation2 + $0x1b8] sm:$0xff]
    %v1820 = vld [vmem:[#allocation2 + $0x1c0] sm:$0xff]
    %v1821 = vld [vmem:[#allocation2 + $0x1c8] sm:$0xff]
    %v1822 = vld [vmem:[#allocation2 + $0x1d0] sm:$0xff]
    %v1823 = vld [vmem:[#allocation2 + $0x1d8] sm:$0xff]
    %v1824 = vld [vmem:[#allocation2 + $0x1e0] sm:$0xff]
    %v1825 = vld [vmem:[#allocation2 + $0x1e8] sm:$0xff]
    %v1826 = vld [vmem:[#allocation2 + $0x1f0] sm:$0xff]
    %v1827 = vld [vmem:[#allocation2 + $0x1f8] sm:$0xff]
    %v1828 = vld [vmem:[#allocation2 + $0x200] sm:$0xff]
    %v1829 = vld [vmem:[#allocation2 + $0x208] sm:$0xff]
    %v1830 = vld [vmem:[#allocation2 + $0x210] sm:$0xff]
    %v1831 = vld [vmem:[#allocation2 + $0x218] sm:$0xff]
    %v1832 = vld [vmem:[#allocation2 + $0x220] sm:$0xff]
    %v1833 = vld [vmem:[#allocation2 + $0x228] sm:$0xff]
    %v1834 = vld [vmem:[#allocation2 + $0x230] sm:$0xff]
    %v1835 = vld [vmem:[#allocation2 + $0x238] sm:$0xff]
    %v1836 = vld [vmem:[#allocation2 + $0x240] sm:$0xff]
    %v1837 = vld [vmem:[#allocation2 + $0x248] sm:$0xff]
    %v1838 = vld [vmem:[#allocation2 + $0x250] sm:$0xff]
    %v1839 = vld [vmem:[#allocation2 + $0x258] sm:$0xff]
    %v1840 = vld [vmem:[#allocation2 + $0x260] sm:$0xff]
    %v1841 = vld [vmem:[#allocation2 + $0x268] sm:$0xff]
    %v1842 = vld [vmem:[#allocation2 + $0x270] sm:$0xff]
    %v1843 = vld [vmem:[#allocation2 + $0x278] sm:$0xff]
    %v1844 = vld [vmem:[#allocation2 + $0x280] sm:$0xff]
    %v1845 = vld [vmem:[#allocation2 + $0x288] sm:$0xff]
    %v1846 = vld [vmem:[#allocation2 + $0x290] sm:$0xff]
    %v1847 = vld [vmem:[#allocation2 + $0x298] sm:$0xff]
    %v1848 = vld [vmem:[#allocation2 + $0x2a0] sm:$0xff]
    %v1849 = vld [vmem:[#allocation2 + $0x2a8] sm:$0xff]
    %v1850 = vld [vmem:[#allocation2 + $0x2b0] sm:$0xff]
    %v1851 = vld [vmem:[#allocation2 + $0x2b8] sm:$0xff]
    %v1852 = vld [vmem:[#allocation2 + $0x2c0] sm:$0xff]
    %v1853 = vld [vmem:[#allocation2 + $0x2c8] sm:$0xff]
    %v1854 = vld [vmem:[#allocation2 + $0x2d0] sm:$0xff]
    %v1855 = vld [vmem:[#allocation2 + $0x2d8] sm:$0xff]
    %v1856 = vld [vmem:[#allocation2 + $0x2e0] sm:$0xff]
    %v1857 = vld [vmem:[#allocation2 + $0x2e8] sm:$0xff]
    %v1858 = vld [vmem:[#allocation2 + $0x2f0] sm:$0xff]
    %v1859 = vld [vmem:[#allocation2 + $0x2f8] sm:$0xff]
    %v1860 = vld [vmem:[#allocation2 + $0x300] sm:$0xff]
    %v1861 = vld [vmem:[#allocation2 + $0x308] sm:$0xff]
    %v1862 = vld [vmem:[#allocation2 + $0x310] sm:$0xff]
    %v1863 = vld [vmem:[#allocation2 + $0x318] sm:$0xff]
    %v1864 = vld [vmem:[#allocation2 + $0x320] sm:$0xff]
    %v1865 = vld [vmem:[#allocation2 + $0x328] sm:$0xff]
    %v1866 = vld [vmem:[#allocation2 + $0x330] sm:$0xff]
    %v1867 = vld [vmem:[#allocation2 + $0x338] sm:$0xff]
    %v1868 = vld [vmem:[#allocation2 + $0x340] sm:$0xff]
    %v1869 = vld [vmem:[#allocation2 + $0x348] sm:$0xff]
    %v1870 = vld [vmem:[#allocation2 + $0x350] sm:$0xff]
    %v1871 = vld [vmem:[#allocation2 + $0x358] sm:$0xff]
    %v1872 = vld [vmem:[#allocation2 + $0x360] sm:$0xff]
    %v1873 = vld [vmem:[#allocation2 + $0x368] sm:$0xff]
    %v1874 = vld [vmem:[#allocation2 + $0x370] sm:$0xff]
    %v1875 = vld [vmem:[#allocation2 + $0x378] sm:$0xff]
    %v1876 = vld [vmem:[#allocation2 + $0x380] sm:$0xff]
    %v1877 = vld [vmem:[#allocation2 + $0x388] sm:$0xff]
    %v1878 = vld [vmem:[#allocation2 + $0x390] sm:$0xff]
    %v1879 = vld [vmem:[#allocation2 + $0x398] sm:$0xff]
    %v1880 = vld [vmem:[#allocation2 + $0x3a0] sm:$0xff]
    %v1881 = vld [vmem:[#allocation2 + $0x3a8] sm:$0xff]
    %v1882 = vld [vmem:[#allocation2 + $0x3b0] sm:$0xff]
    %v1883 = vld [vmem:[#allocation2 + $0x3b8] sm:$0xff]
    %v1884 = vld [vmem:[#allocation2 + $0x3c0] sm:$0xff]
    %v1885 = vld [vmem:[#allocation2 + $0x3c8] sm:$0xff]
    %v1886 = vld [vmem:[#allocation2 + $0x3d0] sm:$0xff]
    %v1887 = vld [vmem:[#allocation2 + $0x3d8] sm:$0xff]
    %v1888 = vld [vmem:[#allocation2 + $0x3e0] sm:$0xff]
    %v1889 = vld [vmem:[#allocation2 + $0x3e8] sm:$0xff]
    %v1890 = vld [vmem:[#allocation2 + $0x3f0] sm:$0xff]
    %v1891 = vld [vmem:[#allocation2 + $0x3f8] sm:$0xff]
    %v1893 = vcombine.high %v1760, %v1760
    %v1895 = vunpack.c.l.s4 1983009808
    %v1896 = vunpack.c.0.s8 %v1895
    %v1897 = vlaneseq
    %v1898 = vshrl.u32 %v1897, 7
    %v1899 = vsub.s32 %v1896, %v1898
    %v1900 = vrot.slane %v1760, %v1899
    %v1902 = vunpack.c.l.s4 1983009808
    %v1903 = vunpack.c.0.s8 %v1902
    %v1904 = vlaneseq
    %v1905 = vshrl.u32 %v1904, 7
    %v1906 = vsub.s32 %v1903, %v1905
    %v1907 = vrot.slane %v1893, %v1906
    %v1908 = vcombine.high %v1900, %v1900
    %v1909 = vcombine.high %v1907, %v1907
    %v2042 = vunpack.c.l.b16 %v1764
    %v2043 = vunpack.c.h.b16 %v1764
    %v2044 = vunpack.c.l.b16 %v1765
    %v2045 = vunpack.c.h.b16 %v1765
    %v2046 = vunpack.c.l.b16 %v1766
    %v2047 = vunpack.c.h.b16 %v1766
    %v2048 = vunpack.c.l.b16 %v1767
    %v2049 = vunpack.c.h.b16 %v1767
    %v2050 = vunpack.c.l.b16 %v1768
    %v2051 = vunpack.c.h.b16 %v1768
    %v2052 = vunpack.c.l.b16 %v1769
    %v2053 = vunpack.c.h.b16 %v1769
    %v2054 = vunpack.c.l.b16 %v1770
    %v2055 = vunpack.c.h.b16 %v1770
    %v2056 = vunpack.c.l.b16 %v1771
    %v2057 = vunpack.c.h.b16 %v1771
    %v2058 = vunpack.c.l.b16 %v1772
    %v2059 = vunpack.c.h.b16 %v1772
    %v2060 = vunpack.c.l.b16 %v1773
    %v2061 = vunpack.c.h.b16 %v1773
    %v2062 = vunpack.c.l.b16 %v1774
    %v2063 = vunpack.c.h.b16 %v1774
    %v2064 = vunpack.c.l.b16 %v1775
    %v2065 = vunpack.c.h.b16 %v1775
    %v2066 = vunpack.c.l.b16 %v1776
    %v2067 = vunpack.c.h.b16 %v1776
    %v2068 = vunpack.c.l.b16 %v1777
    %v2069 = vunpack.c.h.b16 %v1777
    %v2070 = vunpack.c.l.b16 %v1778
    %v2071 = vunpack.c.h.b16 %v1778
    %v2072 = vunpack.c.l.b16 %v1779
    %v2073 = vunpack.c.h.b16 %v1779
    %v2074 = vunpack.c.l.b16 %v1780
    %v2075 = vunpack.c.h.b16 %v1780
    %v2076 = vunpack.c.l.b16 %v1781
    %v2077 = vunpack.c.h.b16 %v1781
    %v2078 = vunpack.c.l.b16 %v1782
    %v2079 = vunpack.c.h.b16 %v1782
    %v2080 = vunpack.c.l.b16 %v1783
    %v2081 = vunpack.c.h.b16 %v1783
    %v2082 = vunpack.c.l.b16 %v1784
    %v2083 = vunpack.c.h.b16 %v1784
    %v2084 = vunpack.c.l.b16 %v1785
    %v2085 = vunpack.c.h.b16 %v1785
    %v2086 = vunpack.c.l.b16 %v1786
    %v2087 = vunpack.c.h.b16 %v1786
    %v2088 = vunpack.c.l.b16 %v1787
    %v2089 = vunpack.c.h.b16 %v1787
    %v2090 = vunpack.c.l.b16 %v1788
    %v2091 = vunpack.c.h.b16 %v1788
    %v2092 = vunpack.c.l.b16 %v1789
    %v2093 = vunpack.c.h.b16 %v1789
    %v2094 = vunpack.c.l.b16 %v1790
    %v2095 = vunpack.c.h.b16 %v1790
    %v2096 = vunpack.c.l.b16 %v1791
    %v2097 = vunpack.c.h.b16 %v1791
    %v2098 = vunpack.c.l.b16 %v1792
    %v2099 = vunpack.c.h.b16 %v1792
    %v2100 = vunpack.c.l.b16 %v1793
    %v2101 = vunpack.c.h.b16 %v1793
    %v2102 = vunpack.c.l.b16 %v1794
    %v2103 = vunpack.c.h.b16 %v1794
    %v2104 = vunpack.c.l.b16 %v1795
    %v2105 = vunpack.c.h.b16 %v1795
    %v2106 = vunpack.c.l.b16 %v1796
    %v2107 = vunpack.c.h.b16 %v1796
    %v2108 = vunpack.c.l.b16 %v1797
    %v2109 = vunpack.c.h.b16 %v1797
    %v2110 = vunpack.c.l.b16 %v1798
    %v2111 = vunpack.c.h.b16 %v1798
    %v2112 = vunpack.c.l.b16 %v1799
    %v2113 = vunpack.c.h.b16 %v1799
    %v2114 = vunpack.c.l.b16 %v1800
    %v2115 = vunpack.c.h.b16 %v1800
    %v2116 = vunpack.c.l.b16 %v1801
    %v2117 = vunpack.c.h.b16 %v1801
    %v2118 = vunpack.c.l.b16 %v1802
    %v2119 = vunpack.c.h.b16 %v1802
    %v2120 = vunpack.c.l.b16 %v1803
    %v2121 = vunpack.c.h.b16 %v1803
    %v2122 = vunpack.c.l.b16 %v1804
    %v2123 = vunpack.c.h.b16 %v1804
    %v2124 = vunpack.c.l.b16 %v1805
    %v2125 = vunpack.c.h.b16 %v1805
    %v2126 = vunpack.c.l.b16 %v1806
    %v2127 = vunpack.c.h.b16 %v1806
    %v2128 = vunpack.c.l.b16 %v1807
    %v2129 = vunpack.c.h.b16 %v1807
    %v2130 = vunpack.c.l.b16 %v1808
    %v2131 = vunpack.c.h.b16 %v1808
    %v2132 = vunpack.c.l.b16 %v1809
    %v2133 = vunpack.c.h.b16 %v1809
    %v2134 = vunpack.c.l.b16 %v1810
    %v2135 = vunpack.c.h.b16 %v1810
    %v2136 = vunpack.c.l.b16 %v1811
    %v2137 = vunpack.c.h.b16 %v1811
    %v2138 = vunpack.c.l.b16 %v1812
    %v2139 = vunpack.c.h.b16 %v1812
    %v2140 = vunpack.c.l.b16 %v1813
    %v2141 = vunpack.c.h.b16 %v1813
    %v2142 = vunpack.c.l.b16 %v1814
    %v2143 = vunpack.c.h.b16 %v1814
    %v2144 = vunpack.c.l.b16 %v1815
    %v2145 = vunpack.c.h.b16 %v1815
    %v2146 = vunpack.c.l.b16 %v1816
    %v2147 = vunpack.c.h.b16 %v1816
    %v2148 = vunpack.c.l.b16 %v1817
    %v2149 = vunpack.c.h.b16 %v1817
    %v2150 = vunpack.c.l.b16 %v1818
    %v2151 = vunpack.c.h.b16 %v1818
    %v2152 = vunpack.c.l.b16 %v1819
    %v2153 = vunpack.c.h.b16 %v1819
    %v2154 = vunpack.c.l.b16 %v1820
    %v2155 = vunpack.c.h.b16 %v1820
    %v2156 = vunpack.c.l.b16 %v1821
    %v2157 = vunpack.c.h.b16 %v1821
    %v2158 = vunpack.c.l.b16 %v1822
    %v2159 = vunpack.c.h.b16 %v1822
    %v2160 = vunpack.c.l.b16 %v1823
    %v2161 = vunpack.c.h.b16 %v1823
    %v2162 = vunpack.c.l.b16 %v1824
    %v2163 = vunpack.c.h.b16 %v1824
    %v2164 = vunpack.c.l.b16 %v1825
    %v2165 = vunpack.c.h.b16 %v1825
    %v2166 = vunpack.c.l.b16 %v1826
    %v2167 = vunpack.c.h.b16 %v1826
    %v2168 = vunpack.c.l.b16 %v1827
    %v2169 = vunpack.c.h.b16 %v1827
    %v2170 = vunpack.c.l.b16 %v1828
    %v2171 = vunpack.c.h.b16 %v1828
    %v2172 = vunpack.c.l.b16 %v1829
    %v2173 = vunpack.c.h.b16 %v1829
    %v2174 = vunpack.c.l.b16 %v1830
    %v2175 = vunpack.c.h.b16 %v1830
    %v2176 = vunpack.c.l.b16 %v1831
    %v2177 = vunpack.c.h.b16 %v1831
    %v2178 = vunpack.c.l.b16 %v1832
    %v2179 = vunpack.c.h.b16 %v1832
    %v2180 = vunpack.c.l.b16 %v1833
    %v2181 = vunpack.c.h.b16 %v1833
    %v2182 = vunpack.c.l.b16 %v1834
    %v2183 = vunpack.c.h.b16 %v1834
    %v2184 = vunpack.c.l.b16 %v1835
    %v2185 = vunpack.c.h.b16 %v1835
    %v2186 = vunpack.c.l.b16 %v1836
    %v2187 = vunpack.c.h.b16 %v1836
    %v2188 = vunpack.c.l.b16 %v1837
    %v2189 = vunpack.c.h.b16 %v1837
    %v2190 = vunpack.c.l.b16 %v1838
    %v2191 = vunpack.c.h.b16 %v1838
    %v2192 = vunpack.c.l.b16 %v1839
    %v2193 = vunpack.c.h.b16 %v1839
    %v2194 = vunpack.c.l.b16 %v1840
    %v2195 = vunpack.c.h.b16 %v1840
    %v2196 = vunpack.c.l.b16 %v1841
    %v2197 = vunpack.c.h.b16 %v1841
    %v2198 = vunpack.c.l.b16 %v1842
    %v2199 = vunpack.c.h.b16 %v1842
    %v2200 = vunpack.c.l.b16 %v1843
    %v2201 = vunpack.c.h.b16 %v1843
    %v2202 = vunpack.c.l.b16 %v1844
    %v2203 = vunpack.c.h.b16 %v1844
    %v2204 = vunpack.c.l.b16 %v1845
    %v2205 = vunpack.c.h.b16 %v1845
    %v2206 = vunpack.c.l.b16 %v1846
    %v2207 = vunpack.c.h.b16 %v1846
    %v2208 = vunpack.c.l.b16 %v1847
    %v2209 = vunpack.c.h.b16 %v1847
    %v2210 = vunpack.c.l.b16 %v1848
    %v2211 = vunpack.c.h.b16 %v1848
    %v2212 = vunpack.c.l.b16 %v1849
    %v2213 = vunpack.c.h.b16 %v1849
    %v2214 = vunpack.c.l.b16 %v1850
    %v2215 = vunpack.c.h.b16 %v1850
    %v2216 = vunpack.c.l.b16 %v1851
    %v2217 = vunpack.c.h.b16 %v1851
    %v2218 = vunpack.c.l.b16 %v1852
    %v2219 = vunpack.c.h.b16 %v1852
    %v2220 = vunpack.c.l.b16 %v1853
    %v2221 = vunpack.c.h.b16 %v1853
    %v2222 = vunpack.c.l.b16 %v1854
    %v2223 = vunpack.c.h.b16 %v1854
    %v2224 = vunpack.c.l.b16 %v1855
    %v2225 = vunpack.c.h.b16 %v1855
    %v2226 = vunpack.c.l.b16 %v1856
    %v2227 = vunpack.c.h.b16 %v1856
    %v2228 = vunpack.c.l.b16 %v1857
    %v2229 = vunpack.c.h.b16 %v1857
    %v2230 = vunpack.c.l.b16 %v1858
    %v2231 = vunpack.c.h.b16 %v1858
    %v2232 = vunpack.c.l.b16 %v1859
    %v2233 = vunpack.c.h.b16 %v1859
    %v2234 = vunpack.c.l.b16 %v1860
    %v2235 = vunpack.c.h.b16 %v1860
    %v2236 = vunpack.c.l.b16 %v1861
    %v2237 = vunpack.c.h.b16 %v1861
    %v2238 = vunpack.c.l.b16 %v1862
    %v2239 = vunpack.c.h.b16 %v1862
    %v2240 = vunpack.c.l.b16 %v1863
    %v2241 = vunpack.c.h.b16 %v1863
    %v2242 = vunpack.c.l.b16 %v1864
    %v2243 = vunpack.c.h.b16 %v1864
    %v2244 = vunpack.c.l.b16 %v1865
    %v2245 = vunpack.c.h.b16 %v1865
    %v2246 = vunpack.c.l.b16 %v1866
    %v2247 = vunpack.c.h.b16 %v1866
    %v2248 = vunpack.c.l.b16 %v1867
    %v2249 = vunpack.c.h.b16 %v1867
    %v2250 = vunpack.c.l.b16 %v1868
    %v2251 = vunpack.c.h.b16 %v1868
    %v2252 = vunpack.c.l.b16 %v1869
    %v2253 = vunpack.c.h.b16 %v1869
    %v2254 = vunpack.c.l.b16 %v1870
    %v2255 = vunpack.c.h.b16 %v1870
    %v2256 = vunpack.c.l.b16 %v1871
    %v2257 = vunpack.c.h.b16 %v1871
    %v2258 = vunpack.c.l.b16 %v1872
    %v2259 = vunpack.c.h.b16 %v1872
    %v2260 = vunpack.c.l.b16 %v1873
    %v2261 = vunpack.c.h.b16 %v1873
    %v2262 = vunpack.c.l.b16 %v1874
    %v2263 = vunpack.c.h.b16 %v1874
    %v2264 = vunpack.c.l.b16 %v1875
    %v2265 = vunpack.c.h.b16 %v1875
    %v2266 = vunpack.c.l.b16 %v1876
    %v2267 = vunpack.c.h.b16 %v1876
    %v2268 = vunpack.c.l.b16 %v1877
    %v2269 = vunpack.c.h.b16 %v1877
    %v2270 = vunpack.c.l.b16 %v1878
    %v2271 = vunpack.c.h.b16 %v1878
    %v2272 = vunpack.c.l.b16 %v1879
    %v2273 = vunpack.c.h.b16 %v1879
    %v2274 = vunpack.c.l.b16 %v1880
    %v2275 = vunpack.c.h.b16 %v1880
    %v2276 = vunpack.c.l.b16 %v1881
    %v2277 = vunpack.c.h.b16 %v1881
    %v2278 = vunpack.c.l.b16 %v1882
    %v2279 = vunpack.c.h.b16 %v1882
    %v2280 = vunpack.c.l.b16 %v1883
    %v2281 = vunpack.c.h.b16 %v1883
    %v2282 = vunpack.c.l.b16 %v1884
    %v2283 = vunpack.c.h.b16 %v1884
    %v2284 = vunpack.c.l.b16 %v1885
    %v2285 = vunpack.c.h.b16 %v1885
    %v2286 = vunpack.c.l.b16 %v1886
    %v2287 = vunpack.c.h.b16 %v1886
    %v2288 = vunpack.c.l.b16 %v1887
    %v2289 = vunpack.c.h.b16 %v1887
    %v2290 = vunpack.c.l.b16 %v1888
    %v2291 = vunpack.c.h.b16 %v1888
    %v2292 = vunpack.c.l.b16 %v1889
    %v2293 = vunpack.c.h.b16 %v1889
    %v2294 = vunpack.c.l.b16 %v1890
    %v2295 = vunpack.c.h.b16 %v1890
    %v2296 = vunpack.c.l.b16 %v1891
    %v2297 = vunpack.c.h.b16 %v1891
    %v2298 = vpack.c.b16 %v2046, %v2042
    %v2299 = vpack.c.b16 %v2047, %v2043
    %v2300 = vpack.c.b16 %v2048, %v2044
    %v2301 = vpack.c.b16 %v2049, %v2045
    %v2302 = vpack.c.b16 %v2054, %v2050
    %v2303 = vpack.c.b16 %v2055, %v2051
    %v2304 = vpack.c.b16 %v2056, %v2052
    %v2305 = vpack.c.b16 %v2057, %v2053
    %v2306 = vpack.c.b16 %v2062, %v2058
    %v2307 = vpack.c.b16 %v2063, %v2059
    %v2308 = vpack.c.b16 %v2064, %v2060
    %v2309 = vpack.c.b16 %v2065, %v2061
    %v2310 = vpack.c.b16 %v2070, %v2066
    %v2311 = vpack.c.b16 %v2071, %v2067
    %v2312 = vpack.c.b16 %v2072, %v2068
    %v2313 = vpack.c.b16 %v2073, %v2069
    %v2314 = vpack.c.b16 %v2078, %v2074
    %v2315 = vpack.c.b16 %v2079, %v2075
    %v2316 = vpack.c.b16 %v2080, %v2076
    %v2317 = vpack.c.b16 %v2081, %v2077
    %v2318 = vpack.c.b16 %v2086, %v2082
    %v2319 = vpack.c.b16 %v2087, %v2083
    %v2320 = vpack.c.b16 %v2088, %v2084
    %v2321 = vpack.c.b16 %v2089, %v2085
    %v2322 = vpack.c.b16 %v2094, %v2090
    %v2323 = vpack.c.b16 %v2095, %v2091
    %v2324 = vpack.c.b16 %v2096, %v2092
    %v2325 = vpack.c.b16 %v2097, %v2093
    %v2326 = vpack.c.b16 %v2102, %v2098
    %v2327 = vpack.c.b16 %v2103, %v2099
    %v2328 = vpack.c.b16 %v2104, %v2100
    %v2329 = vpack.c.b16 %v2105, %v2101
    %v2330 = vpack.c.b16 %v2110, %v2106
    %v2331 = vpack.c.b16 %v2111, %v2107
    %v2332 = vpack.c.b16 %v2112, %v2108
    %v2333 = vpack.c.b16 %v2113, %v2109
    %v2334 = vpack.c.b16 %v2118, %v2114
    %v2335 = vpack.c.b16 %v2119, %v2115
    %v2336 = vpack.c.b16 %v2120, %v2116
    %v2337 = vpack.c.b16 %v2121, %v2117
    %v2338 = vpack.c.b16 %v2126, %v2122
    %v2339 = vpack.c.b16 %v2127, %v2123
    %v2340 = vpack.c.b16 %v2128, %v2124
    %v2341 = vpack.c.b16 %v2129, %v2125
    %v2342 = vpack.c.b16 %v2134, %v2130
    %v2343 = vpack.c.b16 %v2135, %v2131
    %v2344 = vpack.c.b16 %v2136, %v2132
    %v2345 = vpack.c.b16 %v2137, %v2133
    %v2346 = vpack.c.b16 %v2142, %v2138
    %v2347 = vpack.c.b16 %v2143, %v2139
    %v2348 = vpack.c.b16 %v2144, %v2140
    %v2349 = vpack.c.b16 %v2145, %v2141
    %v2350 = vpack.c.b16 %v2150, %v2146
    %v2351 = vpack.c.b16 %v2151, %v2147
    %v2352 = vpack.c.b16 %v2152, %v2148
    %v2353 = vpack.c.b16 %v2153, %v2149
    %v2354 = vpack.c.b16 %v2158, %v2154
    %v2355 = vpack.c.b16 %v2159, %v2155
    %v2356 = vpack.c.b16 %v2160, %v2156
    %v2357 = vpack.c.b16 %v2161, %v2157
    %v2358 = vpack.c.b16 %v2166, %v2162
    %v2359 = vpack.c.b16 %v2167, %v2163
    %v2360 = vpack.c.b16 %v2168, %v2164
    %v2361 = vpack.c.b16 %v2169, %v2165
    %v2362 = vpack.c.b16 %v2174, %v2170
    %v2363 = vpack.c.b16 %v2175, %v2171
    %v2364 = vpack.c.b16 %v2176, %v2172
    %v2365 = vpack.c.b16 %v2177, %v2173
    %v2366 = vpack.c.b16 %v2182, %v2178
    %v2367 = vpack.c.b16 %v2183, %v2179
    %v2368 = vpack.c.b16 %v2184, %v2180
    %v2369 = vpack.c.b16 %v2185, %v2181
    %v2370 = vpack.c.b16 %v2190, %v2186
    %v2371 = vpack.c.b16 %v2191, %v2187
    %v2372 = vpack.c.b16 %v2192, %v2188
    %v2373 = vpack.c.b16 %v2193, %v2189
    %v2374 = vpack.c.b16 %v2198, %v2194
    %v2375 = vpack.c.b16 %v2199, %v2195
    %v2376 = vpack.c.b16 %v2200, %v2196
    %v2377 = vpack.c.b16 %v2201, %v2197
    %v2378 = vpack.c.b16 %v2206, %v2202
    %v2379 = vpack.c.b16 %v2207, %v2203
    %v2380 = vpack.c.b16 %v2208, %v2204
    %v2381 = vpack.c.b16 %v2209, %v2205
    %v2382 = vpack.c.b16 %v2214, %v2210
    %v2383 = vpack.c.b16 %v2215, %v2211
    %v2384 = vpack.c.b16 %v2216, %v2212
    %v2385 = vpack.c.b16 %v2217, %v2213
    %v2386 = vpack.c.b16 %v2222, %v2218
    %v2387 = vpack.c.b16 %v2223, %v2219
    %v2388 = vpack.c.b16 %v2224, %v2220
    %v2389 = vpack.c.b16 %v2225, %v2221
    %v2390 = vpack.c.b16 %v2230, %v2226
    %v2391 = vpack.c.b16 %v2231, %v2227
    %v2392 = vpack.c.b16 %v2232, %v2228
    %v2393 = vpack.c.b16 %v2233, %v2229
    %v2394 = vpack.c.b16 %v2238, %v2234
    %v2395 = vpack.c.b16 %v2239, %v2235
    %v2396 = vpack.c.b16 %v2240, %v2236
    %v2397 = vpack.c.b16 %v2241, %v2237
    %v2398 = vpack.c.b16 %v2246, %v2242
    %v2399 = vpack.c.b16 %v2247, %v2243
    %v2400 = vpack.c.b16 %v2248, %v2244
    %v2401 = vpack.c.b16 %v2249, %v2245
    %v2402 = vpack.c.b16 %v2254, %v2250
    %v2403 = vpack.c.b16 %v2255, %v2251
    %v2404 = vpack.c.b16 %v2256, %v2252
    %v2405 = vpack.c.b16 %v2257, %v2253
    %v2406 = vpack.c.b16 %v2262, %v2258
    %v2407 = vpack.c.b16 %v2263, %v2259
    %v2408 = vpack.c.b16 %v2264, %v2260
    %v2409 = vpack.c.b16 %v2265, %v2261
    %v2410 = vpack.c.b16 %v2270, %v2266
    %v2411 = vpack.c.b16 %v2271, %v2267
    %v2412 = vpack.c.b16 %v2272, %v2268
    %v2413 = vpack.c.b16 %v2273, %v2269
    %v2414 = vpack.c.b16 %v2278, %v2274
    %v2415 = vpack.c.b16 %v2279, %v2275
    %v2416 = vpack.c.b16 %v2280, %v2276
    %v2417 = vpack.c.b16 %v2281, %v2277
    %v2418 = vpack.c.b16 %v2286, %v2282
    %v2419 = vpack.c.b16 %v2287, %v2283
    %v2420 = vpack.c.b16 %v2288, %v2284
    %v2421 = vpack.c.b16 %v2289, %v2285
    %v2422 = vpack.c.b16 %v2294, %v2290
    %v2423 = vpack.c.b16 %v2295, %v2291
    %v2424 = vpack.c.b16 %v2296, %v2292
    %v2425 = vpack.c.b16 %v2297, %v2293
    %2554 = vmatprep.subr.bf16.mxu0 %v2327
    %2555 = vmatpush1.bf16.msra.mxu0 %v2326
    %2556 = vmatprep.subr.bf16.mxu0 %v2323
    %2557 = vmatpush1.bf16.msra.mxu0 %v2322
    %2558 = vmatprep.subr.bf16.mxu0 %v2319
    %2559 = vmatpush1.bf16.msra.mxu0 %v2318
    %2560 = vmatprep.subr.bf16.mxu0 %v2315
    %2561 = vmatpush1.bf16.msra.mxu0 %v2314
    %2562 = vmatprep.subr.bf16.mxu0 %v2311
    %2563 = vmatpush1.bf16.msra.mxu0 %v2310
    %2564 = vmatprep.subr.bf16.mxu0 %v2307
    %2565 = vmatpush1.bf16.msra.mxu0 %v2306
    %2566 = vmatprep.subr.bf16.mxu0 %v2303
    %2567 = vmatpush1.bf16.msra.mxu0 %v2302
    %2568 = vmatprep.subr.bf16.mxu0 %v2299
    %2569 = vmatpush1.bf16.msra.mxu0 %v2298
    %2570 = vmatprep.subr.bf16.mxu0 %v2359
    %2571 = vmatpush2.bf16.msra.mxu0 %v2358
    %2572 = vmatprep.subr.bf16.mxu0 %v2355
    %2573 = vmatpush2.bf16.msra.mxu0 %v2354
    %2574 = vmatprep.subr.bf16.mxu0 %v2351
    %2575 = vmatpush2.bf16.msra.mxu0 %v2350
    %2576 = vmatprep.subr.bf16.mxu0 %v2347
    %2577 = vmatpush2.bf16.msra.mxu0 %v2346
    %2578 = vmatprep.subr.bf16.mxu0 %v2343
    %2579 = vmatpush2.bf16.msra.mxu0 %v2342
    %2580 = vmatprep.subr.bf16.mxu0 %v2339
    %2581 = vmatpush2.bf16.msra.mxu0 %v2338
    %2582 = vmatprep.subr.bf16.mxu0 %v2335
    %2583 = vmatpush2.bf16.msra.mxu0 %v2334
    %2584 = vmatprep.subr.bf16.mxu0 %v2331
    %2585 = vmatpush2.bf16.msra.mxu0 %v2330
    %2586 = vmatprep.mubr.bf16.mxu0 %v1908
    %2587 = vmatmul.mubr.bf16.gmra.mxu0 %v1900
    %v2588 = vpop.f32.mrf.mxu0
    %v2589 = vadd.f32 0.0, %v2588
    %v2590 = vpop.f32.mrf.mxu0
    %v2591 = vadd.f32 0.0, %v2590
    %v2592 = vpop.f32.mrf.mxu0
    %v2593 = vpop.f32.mrf.mxu0
    %2594 = vdwg.mxu0
    %2595 = vmatprep.subr.bf16.mxu0 %v2391
    %2596 = vmatpush1.bf16.msra.mxu0 %v2390
    %2597 = vmatprep.subr.bf16.mxu0 %v2387
    %2598 = vmatpush1.bf16.msra.mxu0 %v2386
    %2599 = vmatprep.subr.bf16.mxu0 %v2383
    %2600 = vmatpush1.bf16.msra.mxu0 %v2382
    %2601 = vmatprep.subr.bf16.mxu0 %v2379
    %2602 = vmatpush1.bf16.msra.mxu0 %v2378
    %2603 = vmatprep.subr.bf16.mxu0 %v2375
    %2604 = vmatpush1.bf16.msra.mxu0 %v2374
    %2605 = vmatprep.subr.bf16.mxu0 %v2371
    %2606 = vmatpush1.bf16.msra.mxu0 %v2370
    %2607 = vmatprep.subr.bf16.mxu0 %v2367
    %2608 = vmatpush1.bf16.msra.mxu0 %v2366
    %2609 = vmatprep.subr.bf16.mxu0 %v2363
    %2610 = vmatpush1.bf16.msra.mxu0 %v2362
    %2611 = vmatprep.subr.bf16.mxu0 %v2423
    %2612 = vmatpush2.bf16.msra.mxu0 %v2422
    %2613 = vmatprep.subr.bf16.mxu0 %v2419
    %2614 = vmatpush2.bf16.msra.mxu0 %v2418
    %2615 = vmatprep.subr.bf16.mxu0 %v2415
    %2616 = vmatpush2.bf16.msra.mxu0 %v2414
    %2617 = vmatprep.subr.bf16.mxu0 %v2411
    %2618 = vmatpush2.bf16.msra.mxu0 %v2410
    %2619 = vmatprep.subr.bf16.mxu0 %v2407
    %2620 = vmatpush2.bf16.msra.mxu0 %v2406
    %2621 = vmatprep.subr.bf16.mxu0 %v2403
    %2622 = vmatpush2.bf16.msra.mxu0 %v2402
    %2623 = vmatprep.subr.bf16.mxu0 %v2399
    %2624 = vmatpush2.bf16.msra.mxu0 %v2398
    %2625 = vmatprep.subr.bf16.mxu0 %v2395
    %2626 = vmatpush2.bf16.msra.mxu0 %v2394
    %2627 = vmatprep.mubr.bf16.mxu0 %v1909
    %2628 = vmatmul.mubr.bf16.gmra.mxu0 %v1907
    %v2629 = vpop.f32.mrf.mxu0
    %v2630 = vadd.f32 %v2589, %v2629
    %v2631 = vpop.f32.mrf.mxu0
    %v2632 = vadd.f32 %v2591, %v2631
    %v2633 = vpop.f32.mrf.mxu0
    %v2634 = vpop.f32.mrf.mxu0
    %2635 = vdwg.mxu0
    %2636 = vmatprep.subr.bf16.mxu0 %v2329
    %2637 = vmatpush1.bf16.msra.mxu0 %v2328
    %2638 = vmatprep.subr.bf16.mxu0 %v2325
    %2639 = vmatpush1.bf16.msra.mxu0 %v2324
    %2640 = vmatprep.subr.bf16.mxu0 %v2321
    %2641 = vmatpush1.bf16.msra.mxu0 %v2320
    %2642 = vmatprep.subr.bf16.mxu0 %v2317
    %2643 = vmatpush1.bf16.msra.mxu0 %v2316
    %2644 = vmatprep.subr.bf16.mxu0 %v2313
    %2645 = vmatpush1.bf16.msra.mxu0 %v2312
    %2646 = vmatprep.subr.bf16.mxu0 %v2309
    %2647 = vmatpush1.bf16.msra.mxu0 %v2308
    %2648 = vmatprep.subr.bf16.mxu0 %v2305
    %2649 = vmatpush1.bf16.msra.mxu0 %v2304
    %2650 = vmatprep.subr.bf16.mxu0 %v2301
    %2651 = vmatpush1.bf16.msra.mxu0 %v2300
    %2652 = vmatprep.subr.bf16.mxu0 %v2361
    %2653 = vmatpush2.bf16.msra.mxu0 %v2360
    %2654 = vmatprep.subr.bf16.mxu0 %v2357
    %2655 = vmatpush2.bf16.msra.mxu0 %v2356
    %2656 = vmatprep.subr.bf16.mxu0 %v2353
    %2657 = vmatpush2.bf16.msra.mxu0 %v2352
    %2658 = vmatprep.subr.bf16.mxu0 %v2349
    %2659 = vmatpush2.bf16.msra.mxu0 %v2348
    %2660 = vmatprep.subr.bf16.mxu0 %v2345
    %2661 = vmatpush2.bf16.msra.mxu0 %v2344
    %2662 = vmatprep.subr.bf16.mxu0 %v2341
    %2663 = vmatpush2.bf16.msra.mxu0 %v2340
    %2664 = vmatprep.subr.bf16.mxu0 %v2337
    %2665 = vmatpush2.bf16.msra.mxu0 %v2336
    %2666 = vmatprep.subr.bf16.mxu0 %v2333
    %2667 = vmatpush2.bf16.msra.mxu0 %v2332
    %2668 = vmatprep.mubr.bf16.mxu0 %v1908
    %2669 = vmatmul.mubr.bf16.gmra.mxu0 %v1900
    %v2670 = vpop.f32.mrf.mxu0
    %v2671 = vadd.f32 0.0, %v2670
    %v2672 = vpop.f32.mrf.mxu0
    %v2673 = vadd.f32 0.0, %v2672
    %v2674 = vpop.f32.mrf.mxu0
    %v2675 = vpop.f32.mrf.mxu0
    %2676 = vdwg.mxu0
    %2677 = vmatprep.subr.bf16.mxu0 %v2393
    %2678 = vmatpush1.bf16.msra.mxu0 %v2392
    %2679 = vmatprep.subr.bf16.mxu0 %v2389
    %2680 = vmatpush1.bf16.msra.mxu0 %v2388
    %2681 = vmatprep.subr.bf16.mxu0 %v2385
    %2682 = vmatpush1.bf16.msra.mxu0 %v2384
    %2683 = vmatprep.subr.bf16.mxu0 %v2381
    %2684 = vmatpush1.bf16.msra.mxu0 %v2380
    %2685 = vmatprep.subr.bf16.mxu0 %v2377
    %2686 = vmatpush1.bf16.msra.mxu0 %v2376
    %2687 = vmatprep.subr.bf16.mxu0 %v2373
    %2688 = vmatpush1.bf16.msra.mxu0 %v2372
    %2689 = vmatprep.subr.bf16.mxu0 %v2369
    %2690 = vmatpush1.bf16.msra.mxu0 %v2368
    %2691 = vmatprep.subr.bf16.mxu0 %v2365
    %2692 = vmatpush1.bf16.msra.mxu0 %v2364
    %2693 = vmatprep.subr.bf16.mxu0 %v2425
    %2694 = vmatpush2.bf16.msra.mxu0 %v2424
    %2695 = vmatprep.subr.bf16.mxu0 %v2421
    %2696 = vmatpush2.bf16.msra.mxu0 %v2420
    %2697 = vmatprep.subr.bf16.mxu0 %v2417
    %2698 = vmatpush2.bf16.msra.mxu0 %v2416
    %2699 = vmatprep.subr.bf16.mxu0 %v2413
    %2700 = vmatpush2.bf16.msra.mxu0 %v2412
    %2701 = vmatprep.subr.bf16.mxu0 %v2409
    %2702 = vmatpush2.bf16.msra.mxu0 %v2408
    %2703 = vmatprep.subr.bf16.mxu0 %v2405
    %2704 = vmatpush2.bf16.msra.mxu0 %v2404
    %2705 = vmatprep.subr.bf16.mxu0 %v2401
    %2706 = vmatpush2.bf16.msra.mxu0 %v2400
    %2707 = vmatprep.subr.bf16.mxu0 %v2397
    %2708 = vmatpush2.bf16.msra.mxu0 %v2396
    %2709 = vmatprep.mubr.bf16.mxu0 %v1909
    %2710 = vmatmul.mubr.bf16.gmra.mxu0 %v1907
    %v2711 = vpop.f32.mrf.mxu0
    %v2712 = vadd.f32 %v2671, %v2711
    %v2713 = vpop.f32.mrf.mxu0
    %v2714 = vadd.f32 %v2673, %v2713
    %v2715 = vpop.f32.mrf.mxu0
    %v2716 = vpop.f32.mrf.mxu0
    %2717 = vdwg.mxu0
    %v2718 = vld [vmem:[#allocation3] sm:$0xf]
    %2720 = vset.pattern.permute.xlu0 0
    %2721 = vperm.xlu0 %2720, %v2718
    %v2722 = vpop.permute.xlu0 %2721
    %v2724 = vadd.f32 %v2722, %v2630
    %v2725 = vadd.f32 %v2722, %v2632
    %v2726 = vadd.f32 %v2722, %v2712
    %v2727 = vadd.f32 %v2722, %v2714
    %v2728 = vlaneseq
    %v2729 = vand.u32 %v2728, 127
    %v2730 = vadd.s32 %v2729, 128
    %v2731 = vadd.s32 %v2729, 256
    %v2732 = vadd.s32 %v2729, 384
    %v2733 = vadd.s32 %v2729, 1
    %v2734 = vadd.s32 %v2730, 1
    %v2735 = vadd.s32 %v2731, 1
    %v2736 = vadd.s32 %v2732, 1
    %s2737 = smul.u32 0, 512
    %v2738 = vstv %s2737
    %v2739 = vadd.s32 %v2733, %v2738
    %v2740 = vadd.s32 %v2734, %v2738
    %v2741 = vadd.s32 %v2735, %v2738
    %v2742 = vadd.s32 %v2736, %v2738
    %v2743 = vcvt.s32.f32 %v2739
    %v2744 = vcvt.s32.f32 %v2740
    %v2745 = vcvt.s32.f32 %v2741
    %v2746 = vcvt.s32.f32 %v2742
    %2748 = vset.pattern.permute.xlu0 0
    %2749 = vperm.xlu0 %2748, %v1763
    %v2750 = vpop.permute.xlu0 %2749
    %v2752 = vsub.f32 %v2750, %v2724
    %v2753 = vsub.f32 %v2750, %v2725
    %v2754 = vsub.f32 %v2750, %v2726
    %v2755 = vsub.f32 %v2750, %v2727
    %v2756 = vsub.f32 %v2743, %v2724
    %v2757 = vsub.f32 %v2744, %v2725
    %v2758 = vsub.f32 %v2745, %v2726
    %v2759 = vsub.f32 %v2746, %v2727
    %v2760 = vadd.f32 %v2750, %v2756
    %v2761 = vadd.f32 %v2750, %v2757
    %v2762 = vadd.f32 %v2750, %v2758
    %v2763 = vadd.f32 %v2750, %v2759
    %v2764 = vrcp.pop %v2760
    %v2765 = vmul.f32 %v2752, %v2764
    %v2766 = vrcp.pop %v2761
    %v2767 = vmul.f32 %v2753, %v2766
    %v2768 = vrcp.pop %v2762
    %v2769 = vmul.f32 %v2754, %v2768
    %v2770 = vrcp.pop %v2763
    %v2771 = vmul.f32 %v2755, %v2770
    %v2772 = vsub.f32 1.0, %v2765
    %v2773 = vsub.f32 1.0, %v2767
    %v2774 = vsub.f32 1.0, %v2769
    %v2775 = vsub.f32 1.0, %v2771
    %v2778 = vcombine.high %v1761, %v1761
    %v2779 = vcombine.high %v1762, %v1762
    %v2782 = vsub.f32 %v2724, %v1761
    %v2783 = vsub.f32 %v2725, %v2778
    %v2784 = vsub.f32 %v2726, %v1762
    %v2785 = vsub.f32 %v2727, %v2779
    %v2786 = vsub.f32 %v2743, 1.0
    %v2787 = vsub.f32 %v2744, 1.0
    %v2788 = vsub.f32 %v2745, 1.0
    %v2789 = vsub.f32 %v2746, 1.0
    %v2790 = vsub.f32 %v2786, %v2782
    %v2791 = vsub.f32 %v2787, %v2783
    %v2792 = vsub.f32 %v2788, %v2784
    %v2793 = vsub.f32 %v2789, %v2785
    %v2794 = vadd.f32 %v2750, %v2790
    %v2795 = vadd.f32 %v2750, %v2791
    %v2796 = vadd.f32 %v2750, %v2792
    %v2797 = vadd.f32 %v2750, %v2793
    %v2798 = vsub.f32 %v2750, %v2782
    %v2799 = vsub.f32 %v2750, %v2783
    %v2800 = vsub.f32 %v2750, %v2784
    %v2801 = vsub.f32 %v2750, %v2785
    %v2802 = vmax.f32 %v2794, 1e-12
    %v2803 = vmax.f32 %v2795, 1e-12
    %v2804 = vmax.f32 %v2796, 1e-12
    %v2805 = vmax.f32 %v2797, 1e-12
    %v2806 = vrcp.pop %v2802
    %v2807 = vmul.f32 %v2798, %v2806
    %v2808 = vrcp.pop %v2803
    %v2809 = vmul.f32 %v2799, %v2808
    %v2810 = vrcp.pop %v2804
    %v2811 = vmul.f32 %v2800, %v2810
    %v2812 = vrcp.pop %v2805
    %v2813 = vmul.f32 %v2801, %v2812
    %v2814 = vsub.f32 1.0, %v2807
    %v2815 = vsub.f32 1.0, %v2809
    %v2816 = vsub.f32 1.0, %v2811
    %v2817 = vsub.f32 1.0, %v2813
    %v2818 = vsub.f32 %v2772, %v2814
    %v2819 = vsub.f32 %v2773, %v2815
    %v2820 = vsub.f32 %v2774, %v2816
    %v2821 = vsub.f32 %v2775, %v2817
    %v2822 = vld [vmem:[#allocation4] sm:$0xf]
    %v2827 = vcombine.low %v2818, %v2819
    %v2828 = vcombine.low %v2820, %v2821
    %v2831 = vmul.f32 %v1758, %v2827
    %v2832 = vmul.f32 %v1759, %v2828
    %v2835 = vcombine.high %v2831, %v2831
    %v2836 = vcombine.high %v2832, %v2832
    %vm2839 = vcmask 1043456
    %v2840 = vsel %vm2839, %v2831, 0.0
    %v2841 = vsel %vm2839, %v2835, 0.0
    %v2842 = vadd.f32 %v2840, %v2841
    %v2843 = vsel %vm2839, %v2832, 0.0
    %v2844 = vadd.f32 %v2842, %v2843
    %v2845 = vsel %vm2839, %v2836, 0.0
    %v2846 = vadd.f32 %v2844, %v2845
    %2847 = vadd.xlane.f32.xlu0 %v2846
    %v2848 = vpop.xlane.xlu0 %2847
    %v2849 = vadd.f32 %v2822, %v2848
    %vm2850 = vcmask 3072
    %2851 = vst.msk [vmem:[#allocation4] sm:$0xf] %vm2850, %v2849
    %v2852 = vld [vmem:[#allocation3] sm:$0xf]
    %v2853 = vsel %vm2839, %v1761, 0.0
    %v2854 = vsel %vm2839, %v2778, 0.0
    %v2855 = vadd.f32 %v2853, %v2854
    %v2856 = vsel %vm2839, %v1762, 0.0
    %v2857 = vadd.f32 %v2855, %v2856
    %v2858 = vsel %vm2839, %v2779, 0.0
    %v2859 = vadd.f32 %v2857, %v2858
    %2860 = vadd.xlane.f32.xlu0 %v2859
    %v2861 = vpop.xlane.xlu0 %2860
    %v2862 = vadd.f32 %v2852, %v2861
    %2863 = vst.msk [vmem:[#allocation3] sm:$0xf] %vm2850, %v2862
    // Predicated region
    $region18: #{mix_lovasz_cross_entropy.3} parent=1 // pred_check
      %p2864 = pneg %p15
    $region19: #{mix_lovasz_cross_entropy.3} parent=1 // pred_check_branch
      %2866 = sbr.rel (%p2864) target = $region21
    $region20: #{mix_lovasz_cross_entropy.3} parent=1 // pred_region
      %vm2867 = vcmp.gt.f32.partialorder %v1763, 0.0
      %v2868 = vsel %vm2867, 1, 0
      %v2869 = vcvt.s32.f32 %v2868
      %v2870 = vld [vmem:[#allocation4] sm:$0xf]
      %v2871 = vmul.f32 %v2870, %v2869
      %v2872 = vsel %vm2850, %v2871, 0.0
      %2873 = vadd.xlane.f32.xlu0 %v2872
      %v2874 = vpop.xlane.xlu0 %2873
      %v2875 = vrot.slane %v2874, 4
      %v2876 = vadd.f32 %v2874, %v2875
      %v2877 = vrot.slane %v2876, 2
      %v2878 = vadd.f32 %v2876, %v2877
      %v2879 = vrot.slane %v2878, 1
      %v2880 = vadd.f32 %v2878, %v2879
      %s2881 = vtos %v2880
      %v2882 = vsel %vm2850, %v2869, 0.0
      %2883 = vadd.xlane.f32.xlu0 %v2882
      %v2884 = vpop.xlane.xlu0 %2883
      %v2885 = vrot.slane %v2884, 4
      %v2886 = vadd.f32 %v2884, %v2885
      %v2887 = vrot.slane %v2886, 2
      %v2888 = vadd.f32 %v2886, %v2887
      %v2889 = vrot.slane %v2888, 1
      %v2890 = vadd.f32 %v2888, %v2889
      %s2891 = vtos %v2890
      %p2892 = scmp.gt.f32.partialorder %s2891, 0.0
      %s2893 = smax.f32 %s2891, 1.0
      %v2894 = vstv %s2893
      %v2895 = vrcp.pop %v2894
      %s2896 = vtos %v2895
      %s2897 = smul.f32 %s2881, %s2896
      %s2898 = scalar_select %p2892, %s2897, 0.0
      %v2899 = vstv %s2898
      %vm2900 = vcmask 0
      %2901 = vst.msk [vmem:[#allocation5] sm:$0x1] %vm2900, %v2899
    $region21: #{mix_lovasz_cross_entropy.3} parent=1 // pred_fallthru
      _
    // Predicated region
    $region22: #{mix_lovasz_cross_entropy.3} parent=1 // pred_check
      _
    $region23: #{mix_lovasz_cross_entropy.3} parent=1 // pred_check_branch
      %2903 = sbr.rel (0) target = $region25
    $region24: #{mix_lovasz_cross_entropy.3} parent=1 // pred_region
      %s2905 = ssub.s32 16, 16
      %2906 = vsyncadd [#allocation6], %s2905
      %s2908 = sshll.u32 [#allocation5], 4
      %s2909 = int_to_ptr.vmem [resolvable:$true] %s2908
      %2911 = dma.vmem_to_hbm [thread:$0]  %s2909, 16, %s3, [#allocation6]
    $region25: #{mix_lovasz_cross_entropy.3} parent=1 // pred_fallthru
      _
    // Predicated region
    $region26: #{mix_lovasz_cross_entropy.3} parent=1 // pred_check
      _
    $region27: #{mix_lovasz_cross_entropy.3} parent=1 // pred_check_branch
      %2913 = sbr.rel (0) target = $region29
    $region28: #{mix_lovasz_cross_entropy.3} parent=1 // pred_region
      %2914 = dma.done [#allocation6], 16
    $region29: #{mix_lovasz_cross_entropy.3} parent=1 // pred_fallthru
      _
    %2915 = vsyncpa [#allocation6], 1

</llo_original>
